<compile_context>
chip_gen: v6e
topology: v6e:2x2x1
jax: 0.10.0
libtpu: 0.0.40
codegen_flags: <defaults>
</compile_context>

<pallas_src>
import functools

import jax
import jax.numpy as jnp
from jax.experimental import pallas as pl
from jax.experimental.pallas import tpu as pltpu


def _hia_kernel(x_ref,               # (Bt, S, E)  compute_dtype
                wqkv_ref, bqkv_ref,  # (E, 3E) compute_dtype (softmax scale folded), (1, 3E) f32
                wo_ref, bo_ref,      # (E, E) (strength folded into columns), (1, E) f32
                w1_ref, b1_ref,      # (E, E//4), (1, E//4)
                w2_ref, b2_ref,      # (E//4, E), (1, E)
                *out_refs,           # out (Bt,S,E)[, aw (Bt,H,S,S)]
                num_heads, head_dim, head_block, batch_block,
                attn_scale, attn_bias, nm_scalar, compute_dtype, exact_softmax):
    out_ref = out_refs[0]
    aw_ref = out_refs[1] if len(out_refs) > 1 else None

    Bt, H, Dh, Hg = batch_block, num_heads, head_dim, head_block
    S = x_ref.shape[1]
    E = H * Dh

    x = x_ref[...].reshape(Bt * S, E)

    # Fused Q/K/V projection: one MXU push with N=3E, f32 accumulation.
    # softmax scale is pre-folded into wqkv[:, :E] / bqkv[:, :E] at wrapper time.
    qkv = jnp.dot(x, wqkv_ref[...], preferred_element_type=jnp.float32) + bqkv_ref[...]

    # NeuromodulationSystem: Linear -> ReLU -> Linear on the raw query; the four
    # neurotransmitter effects collapse to the trace-time constant nm_scalar.
    h1 = jnp.maximum(
        jnp.dot(x, w1_ref[...], preferred_element_type=jnp.float32) + b1_ref[...], 0.0)
    mod = jnp.dot(h1.astype(compute_dtype), w2_ref[...],
                  preferred_element_type=jnp.float32) + b2_ref[...]
    gain = 1.0 + nm_scalar * mod                                  # (Bt*S, E) f32

    # Attention, head_block heads at a time: bounds the (Bt*Hg, S, S) score/prob
    # intermediate and the (bounded) per-group relayouts. K-underfill of the MXU for
    # small Dh is accepted (structural; see review).
    ctx_cols = []
    for g in range(H // Hg):
        lo, w = g * Hg * Dh, Hg * Dh

        def to_grp(cols):                                         # (Bt*S, Hg*Dh)->(Bt*Hg,S,Dh)
            t = cols.astype(compute_dtype).reshape(Bt, S, Hg, Dh)
            return jnp.swapaxes(t, 1, 2).reshape(Bt * Hg, S, Dh)

        qg = to_grp(qkv[:, lo:lo + w])
        kg = to_grp(qkv[:, E + lo:E + lo + w])
        vg = to_grp(qkv[:, 2 * E + lo:2 * E + lo + w])

        s = jnp.einsum("nqd,nkd->nqk", qg, kg, preferred_element_type=jnp.float32)
        s = s - jnp.max(s, axis=-1, keepdims=True)
        p = jnp.exp(s)
        denom = jnp.sum(p, axis=-1, keepdims=True)
        if exact_softmax:            # weights path: rows sum exactly to 1
            p = p / denom
        else:                        # output-only path: EUP reciprocal (free slot)
            p = p * pl.reciprocal(denom, approx=True)

        if aw_ref is not None:
            aw_ref[:, g * Hg:(g + 1) * Hg] = p.reshape(Bt, Hg, S, S).astype(aw_ref.dtype)

        ctx = jnp.einsum("nqk,nkd->nqd", p.astype(compute_dtype), vg,
                         preferred_element_type=jnp.float32)      # (Bt*Hg, S, Dh) f32
        ctx_cols.append(jnp.swapaxes(ctx.reshape(Bt, Hg, S, Dh), 1, 2).reshape(Bt * S, w))

    attn = ctx_cols[0] if len(ctx_cols) == 1 else jnp.concatenate(ctx_cols, axis=-1)

    if attn_scale != 1.0 or attn_bias != 0.0:                     # trace-time constants
        attn = attn * attn_scale + attn_bias
    attn = attn * gain

    # out_proj with horizontal_strength pre-folded into the columns of Wo^T / bo.
    out = jnp.dot(attn.astype(compute_dtype), wo_ref[...],
                  preferred_element_type=jnp.float32) + bo_ref[...]
    out_ref[...] = out.reshape(Bt, S, E).astype(out_ref.dtype)


def _const_spec(shape, single_buffer):
    """BlockSpec for a grid-constant operand (weights / biases: same block every step)."""
    idx = lambda b: (0,) * len(shape)
    if single_buffer:
        # Single-buffer: the block never changes across the grid, so default double
        # buffering would waste a full extra weight copy in VMEM (fatal on v7x's 64 MiB
        # for large E).
        return pl.BlockSpec(shape, idx, pipeline_mode=pl.Buffered(1))
    return pl.BlockSpec(shape, idx)


def _auto_batch_block(B, S, E, H, need_weights):
    """Fill the matmul M dim (Bt*S) toward the MXU tile while keeping >=2 grid steps
    (v7x has 2 TensorCores) and a bounded activation footprint."""
    target_m, act_budget = 512, 16 << 20
    best = 1
    for bt in range(1, B + 1):
        if B % bt:
            continue
        if B >= 2 and B // bt < 2:
            continue
        act = bt * S * 12 * E * 4 + (bt * H * S * S * 8 if need_weights else 0)
        if bt * S <= max(target_m, S) and act <= act_budget:
            best = bt
    return best


def _auto_head_block(H, Bt, S):
    """Largest head group whose f32 score+prob tensors stay within a small VMEM budget."""
    budget = 2 << 20
    best = 1
    for hg in range(1, H + 1):
        if H % hg:
            continue
        if 2 * Bt * hg * S * S * 4 <= max(budget, 2 * Bt * S * S * 4):
            best = hg
    return best


def horizontal_integration_attention(query, params, num_heads, need_weights=False,
                                     batch_block=None, head_block=None,
                                     compute_dtype=jnp.bfloat16,
                                     out_dtype=None, weights_dtype=jnp.float32):
    B, S, E = query.shape
    assert E % num_heads == 0
    Dh = E // num_heads
    Eh = E // 4
    out_dtype = query.dtype if out_dtype is None else out_dtype

    Bt = _auto_batch_block(B, S, E, num_heads, need_weights) if batch_block is None else batch_block
    assert B % Bt == 0
    nb = B // Bt
    Hg = _auto_head_block(num_heads, Bt, S) if head_block is None else head_block
    assert num_heads % Hg == 0

    # Trace-time scalar constants (no SMEM operand; 1.0/0.0 passes are pruned entirely).
    nm_scalar = (float(params["dopamine"]) + float(params["serotonin"])
                 + float(params["norepinephrine"]) + float(params["acetylcholine"])) / 4.0
    attn_scale = float(params["attention_scale"])
    attn_bias = float(params["attention_bias"])

    f32 = lambda a: jnp.asarray(a, jnp.float32)
    # Fold the softmax scale into Wq / bq and fuse Q/K/V into a single (E, 3E) weight.
    scale = Dh ** (-0.5)
    wqkv = jnp.concatenate([f32(params["wq"]).T * scale, f32(params["wk"]).T,
                            f32(params["wv"]).T], axis=1)
    bqkv = jnp.concatenate([f32(params["bq"]) * scale, f32(params["bk"]), f32(params["bv"])])
    # Fold horizontal_strength (per head, broadcast over head_dim) into out_proj columns.
    strength = jnp.repeat(f32(params["horizontal_strength"]), Dh)          # (E,)
    wo = f32(params["wo"]).T * strength[None, :]
    bo = f32(params["bo"]) * strength

    c = lambda w: w.astype(compute_dtype)          # MXU operands in compute dtype
    row = lambda v: v.reshape(1, -1)               # f32 bias rows (post-accumulation add)

    kernel = functools.partial(
        _hia_kernel, num_heads=num_heads, head_dim=Dh, head_block=Hg, batch_block=Bt,
        attn_scale=attn_scale, attn_bias=attn_bias, nm_scalar=nm_scalar,
        compute_dtype=compute_dtype, exact_softmax=need_weights)

    out_block = pl.BlockSpec((Bt, S, E), lambda b: (b, 0, 0))
    if need_weights:
        out_specs = [out_block,
                     pl.BlockSpec((Bt, num_heads, S, S), lambda b: (b, 0, 0, 0))]
        out_shape = (jax.ShapeDtypeStruct((B, S, E), out_dtype),
                     jax.ShapeDtypeStruct((B, num_heads, S, S), weights_dtype))
    else:
        out_specs = out_block
        out_shape = jax.ShapeDtypeStruct((B, S, E), out_dtype)

    # VMEM budget: single-buffered weights + double-buffered activation blocks + live
    # f32 intermediates, with headroom, capped below physical VMEM (64 MiB/TC on v7x).
    ci = jnp.dtype(compute_dtype).itemsize
    oi = jnp.dtype(out_dtype).itemsize
    ai = jnp.dtype(weights_dtype).itemsize
    w_bytes = (3 * E * E + E * E + 2 * E * Eh) * ci + (5 * E + Eh) * 4
    blk_bytes = 2 * Bt * S * E * (ci + oi) \
        + (2 * Bt * num_heads * S * S * ai if need_weights else 0)
    interm = Bt * S * (3 * E + 2 * E + Eh + E) * 4 \
        + 3 * Bt * Hg * S * Dh * ci + 2 * Bt * Hg * S * S * 4
    try:
        phys_vmem = pltpu.get_tpu_info().vmem_capacity_bytes
    except Exception:
        phys_vmem = 64 * 2 ** 20
    vmem_limit = int(min(max(int(1.5 * (w_bytes + blk_bytes + interm)), 32 * 2 ** 20),
                         int(phys_vmem * 0.85)))

    def build(single_buffer_weights):
        in_specs = [
            pl.BlockSpec((Bt, S, E), lambda b: (b, 0, 0)),                     # query (pipelined)
            _const_spec((E, 3 * E), single_buffer_weights),                    # Wqkv^T
            _const_spec((1, 3 * E), single_buffer_weights),                    # bqkv
            _const_spec((E, E), single_buffer_weights),                        # Wo^T (strength folded)
            _const_spec((1, E), single_buffer_weights),                        # bo
            _const_spec((E, Eh), single_buffer_weights),                       # W1^T
            _const_spec((1, Eh), single_buffer_weights),                       # b1
            _const_spec((Eh, E), single_buffer_weights),                       # W2^T
            _const_spec((1, E), single_buffer_weights),                        # b2
        ]
        grid_spec = pltpu.PrefetchScalarGridSpec(
            num_scalar_prefetch=0, grid=(nb,), in_specs=in_specs, out_specs=out_specs)
        return pl.pallas_call(
            kernel,
            out_shape=out_shape,
            grid_spec=grid_spec,
            compiler_params=pltpu.CompilerParams(
                dimension_semantics=("parallel",),
                vmem_limit_bytes=vmem_limit))

    args = (query.astype(compute_dtype),
            c(wqkv), row(bqkv), c(wo), row(bo),
            c(f32(params["w1"]).T), row(f32(params["b1"])),
            c(f32(params["w2"]).T), row(f32(params["b2"])))
    try:
        result = build(True)(*args)
    except Exception:
        # TODO(synk): jax build without BlockSpec pipeline_mode / Buffered(1) support;
        # fall back to default double-buffered weight blocks (extra VMEM, same semantics).
        result = build(False)(*args)

    if need_weights:
        out, aw = result
        return out, aw
    return result, None


def _reference(query, params, num_heads):
    """Pure-JAX reference of the same forward pass (for validation)."""
    B, S, E = query.shape
    Dh = E // num_heads
    lin = lambda x, w, b: x @ w.T + b
    q = lin(query, params["wq"], params["bq"]).reshape(B, S, num_heads, Dh).transpose(0, 2, 1, 3)
    k = lin(query, params["wk"], params["bk"]).reshape(B, S, num_heads, Dh).transpose(0, 2, 1, 3)
    v = lin(query, params["wv"], params["bv"]).reshape(B, S, num_heads, Dh).transpose(0, 2, 1, 3)
    aw = jax.nn.softmax(jnp.einsum("bhqd,bhkd->bhqk", q, k) * Dh ** (-0.5), axis=-1)
    attn = jnp.einsum("bhqk,bhkd->bhqd", aw, v)
    mod = lin(jnp.maximum(lin(query, params["w1"], params["b1"]), 0.0), params["w2"], params["b2"])
    nm = ((params["dopamine"] + params["serotonin"] + params["norepinephrine"]
           + params["acetylcholine"]) / 4.0) * mod
    nm = nm.reshape(B, S, num_heads, Dh).transpose(0, 2, 1, 3)
    attn = attn * params["attention_scale"] + params["attention_bias"]
    attn = attn * (1.0 + nm)
    attn = attn.transpose(0, 2, 1, 3).reshape(B, S, E)
    out = lin(attn, params["wo"], params["bo"])
    out = out * jnp.repeat(params["horizontal_strength"], Dh)[None, None, :]
    return out, aw


def make_params(key, embed_dim, num_heads):
    Eh = embed_dim // 4
    ks = jax.random.split(key, 12)
    u = lambda k, shape, fan_in: jax.random.uniform(
        k, shape, jnp.float32, -1.0, 1.0) / jnp.sqrt(float(fan_in))
    return {
        "wq": u(ks[0], (embed_dim, embed_dim), embed_dim), "bq": u(ks[1], (embed_dim,), embed_dim),
        "wk": u(ks[2], (embed_dim, embed_dim), embed_dim), "bk": u(ks[3], (embed_dim,), embed_dim),
        "wv": u(ks[4], (embed_dim, embed_dim), embed_dim), "bv": u(ks[5], (embed_dim,), embed_dim),
        "wo": u(ks[6], (embed_dim, embed_dim), embed_dim), "bo": u(ks[7], (embed_dim,), embed_dim),
        "w1": u(ks[8], (Eh, embed_dim), embed_dim), "b1": u(ks[9], (Eh,), embed_dim),
        "w2": u(ks[10], (embed_dim, Eh), Eh), "b2": u(ks[11], (embed_dim,), Eh),
        # __init__ deterministic values:
        "dopamine": 1.0, "serotonin": 1.0, "norepinephrine": 1.0, "acetylcholine": 1.0,
        "attention_scale": 1.0, "attention_bias": 0.0,
        "horizontal_strength": jnp.ones((num_heads,), jnp.float32) * 0.5,
    }


if __name__ == "__main__":
    B, S, E, H = 2, 8, 32, 4
    key = jax.random.PRNGKey(0)
    k_x, k_p = jax.random.split(key)
    query = jax.random.normal(k_x, (B, S, E), dtype=jnp.float32)
    params = make_params(k_p, E, H)

    ref_out, ref_aw = _reference(query, params, H)

    # Accuracy path: f32 operands, exact softmax, attention weights emitted.
    out32, aw32 = horizontal_integration_attention(
        query, params, num_heads=H, need_weights=True, compute_dtype=jnp.float32)
    out32 = jax.block_until_ready(out32)
    aw32 = jax.block_until_ready(aw32)
    assert out32.shape == (B, S, E) and aw32.shape == (B, H, S, S)
    assert jnp.allclose(out32, ref_out, atol=2e-2, rtol=2e-2)
    assert jnp.allclose(aw32, ref_aw, atol=2e-2, rtol=2e-2)

    # Fast path: bf16 MXU operands (f32 accumulation), bf16 output, no weights output.
    out_bf, aw_none = horizontal_integration_attention(
        query, params, num_heads=H, need_weights=False,
        compute_dtype=jnp.bfloat16, out_dtype=jnp.bfloat16)
    out_bf = jax.block_until_ready(out_bf)
    assert aw_none is None
    assert out_bf.shape == (B, S, E)
    assert jnp.allclose(out_bf.astype(jnp.float32), ref_out, atol=8e-2, rtol=8e-2)

    print("KERNEL_OK")
</pallas_src>

<mosaic_0001>
module attributes {stable_mosaic.version = 11 : i64} {
  func.func @_hia_kernel(%arg0: i32, %arg1: memref<1x8x32xf32, #tpu.memory_space<vmem>>, %arg2: memref<32x96xf32, #tpu.memory_space<vmem>>, %arg3: memref<1x96xf32, #tpu.memory_space<vmem>>, %arg4: memref<32x32xf32, #tpu.memory_space<vmem>>, %arg5: memref<1x32xf32, #tpu.memory_space<vmem>>, %arg6: memref<32x8xf32, #tpu.memory_space<vmem>>, %arg7: memref<1x8xf32, #tpu.memory_space<vmem>>, %arg8: memref<8x32xf32, #tpu.memory_space<vmem>>, %arg9: memref<1x32xf32, #tpu.memory_space<vmem>>, %arg10: memref<1x8x32xf32, #tpu.memory_space<vmem>>, %arg11: memref<1x4x8x8xf32, #tpu.memory_space<vmem>>) attributes {dimension_semantics = [#tpu.dimension_semantics<parallel>], iteration_bounds = array<i64: 2>, scalar_prefetch = 0 : i64, scratch_operands = 0 : i64, tpu.core_type = #tpu.core_type<tc>, window_params = [{transform_indices = @transform_0, window_bounds = array<i64: 1, 8, 32>}, {pipeline_mode = #tpu.pipeline_mode<synchronous>, transform_indices = @transform_1, window_bounds = array<i64: 32, 96>}, {pipeline_mode = #tpu.pipeline_mode<synchronous>, transform_indices = @transform_2, window_bounds = array<i64: 1, 96>}, {pipeline_mode = #tpu.pipeline_mode<synchronous>, transform_indices = @transform_3, window_bounds = array<i64: 32, 32>}, {pipeline_mode = #tpu.pipeline_mode<synchronous>, transform_indices = @transform_4, window_bounds = array<i64: 1, 32>}, {pipeline_mode = #tpu.pipeline_mode<synchronous>, transform_indices = @transform_5, window_bounds = array<i64: 32, 8>}, {pipeline_mode = #tpu.pipeline_mode<synchronous>, transform_indices = @transform_6, window_bounds = array<i64: 1, 8>}, {pipeline_mode = #tpu.pipeline_mode<synchronous>, transform_indices = @transform_7, window_bounds = array<i64: 8, 32>}, {pipeline_mode = #tpu.pipeline_mode<synchronous>, transform_indices = @transform_8, window_bounds = array<i64: 1, 32>}, {transform_indices = @transform_9, window_bounds = array<i64: 1, 8, 32>}, {transform_indices = @transform_10, window_bounds = array<i64: 1, 4, 8, 8>}]} {
    %c0 = arith.constant 0 : index
    %c0_0 = arith.constant 0 : index
    %c0_1 = arith.constant 0 : index
    %0 = vector.load %arg1[%c0, %c0_0, %c0_1] : memref<1x8x32xf32, #tpu.memory_space<vmem>>, vector<1x8x32xf32>
    %1 = vector.shape_cast %0 : vector<1x8x32xf32> to vector<8x32xf32>
    %c0_2 = arith.constant 0 : index
    %c0_3 = arith.constant 0 : index
    %2 = vector.load %arg2[%c0_2, %c0_3] : memref<32x96xf32, #tpu.memory_space<vmem>>, vector<32x96xf32>
    %cst = arith.constant dense<0.000000e+00> : vector<8x96xf32>
    %3 = tpu.matmul %1, %2, %cst {dimension_numbers = #tpu.dot_dimension_numbers<[1], [0], [0], [1], [0, 0, 1, 1], [], []>} : vector<8x32xf32>, vector<32x96xf32>, vector<8x96xf32> -> vector<8x96xf32>
    %c0_4 = arith.constant 0 : index
    %c0_5 = arith.constant 0 : index
    %4 = vector.load %arg3[%c0_4, %c0_5] : memref<1x96xf32, #tpu.memory_space<vmem>>, vector<1x96xf32>
    %5 = vector.broadcast %4 : vector<1x96xf32> to vector<8x96xf32>
    %6 = arith.addf %3, %5 : vector<8x96xf32>
    %c0_6 = arith.constant 0 : index
    %c0_7 = arith.constant 0 : index
    %7 = vector.load %arg6[%c0_6, %c0_7] : memref<32x8xf32, #tpu.memory_space<vmem>>, vector<32x8xf32>
    %cst_8 = arith.constant dense<0.000000e+00> : vector<8x8xf32>
    %8 = tpu.matmul %1, %7, %cst_8 {dimension_numbers = #tpu.dot_dimension_numbers<[1], [0], [0], [1], [0, 0, 1, 1], [], []>} : vector<8x32xf32>, vector<32x8xf32>, vector<8x8xf32> -> vector<8x8xf32>
    %c0_9 = arith.constant 0 : index
    %c0_10 = arith.constant 0 : index
    %9 = vector.load %arg7[%c0_9, %c0_10] : memref<1x8xf32, #tpu.memory_space<vmem>>, vector<1x8xf32>
    %10 = vector.broadcast %9 : vector<1x8xf32> to vector<8x8xf32>
    %11 = arith.addf %8, %10 : vector<8x8xf32>
    %cst_11 = arith.constant 0.000000e+00 : f32
    %12 = vector.broadcast %cst_11 : f32 to vector<8x8xf32>
    %13 = arith.maximumf %11, %12 : vector<8x8xf32>
    %c0_12 = arith.constant 0 : index
    %c0_13 = arith.constant 0 : index
    %14 = vector.load %arg8[%c0_12, %c0_13] : memref<8x32xf32, #tpu.memory_space<vmem>>, vector<8x32xf32>
    %cst_14 = arith.constant dense<0.000000e+00> : vector<8x32xf32>
    %15 = tpu.matmul %13, %14, %cst_14 {dimension_numbers = #tpu.dot_dimension_numbers<[1], [0], [0], [1], [0, 0, 1, 1], [], []>} : vector<8x8xf32>, vector<8x32xf32>, vector<8x32xf32> -> vector<8x32xf32>
    %c0_15 = arith.constant 0 : index
    %c0_16 = arith.constant 0 : index
    %16 = vector.load %arg9[%c0_15, %c0_16] : memref<1x32xf32, #tpu.memory_space<vmem>>, vector<1x32xf32>
    %17 = vector.broadcast %16 : vector<1x32xf32> to vector<8x32xf32>
    %18 = arith.addf %15, %17 : vector<8x32xf32>
    %cst_17 = arith.constant 1.000000e+00 : f32
    %19 = vector.broadcast %cst_17 : f32 to vector<8x32xf32>
    %20 = arith.mulf %19, %18 : vector<8x32xf32>
    %cst_18 = arith.constant 1.000000e+00 : f32
    %21 = vector.broadcast %cst_18 : f32 to vector<8x32xf32>
    %22 = arith.addf %21, %20 : vector<8x32xf32>
    %23 = vector.extract_strided_slice %6 {offsets = [0, 0], sizes = [8, 32], strides = [1, 1]} : vector<8x96xf32> to vector<8x32xf32>
    %24 = vector.shape_cast %23 : vector<8x32xf32> to vector<1x8x4x8xf32>
    %25 = tpu.transpose %24, [0, 2, 1, 3] : vector<1x8x4x8xf32> -> vector<1x4x8x8xf32>
    %26 = vector.shape_cast %25 : vector<1x4x8x8xf32> to vector<4x8x8xf32>
    %27 = vector.extract_strided_slice %6 {offsets = [0, 32], sizes = [8, 32], strides = [1, 1]} : vector<8x96xf32> to vector<8x32xf32>
    %28 = vector.shape_cast %27 : vector<8x32xf32> to vector<1x8x4x8xf32>
    %29 = tpu.transpose %28, [0, 2, 1, 3] : vector<1x8x4x8xf32> -> vector<1x4x8x8xf32>
    %30 = vector.shape_cast %29 : vector<1x4x8x8xf32> to vector<4x8x8xf32>
    %31 = vector.extract_strided_slice %6 {offsets = [0, 64], sizes = [8, 32], strides = [1, 1]} : vector<8x96xf32> to vector<8x32xf32>
    %32 = vector.shape_cast %31 : vector<8x32xf32> to vector<1x8x4x8xf32>
    %33 = tpu.transpose %32, [0, 2, 1, 3] : vector<1x8x4x8xf32> -> vector<1x4x8x8xf32>
    %34 = vector.shape_cast %33 : vector<1x4x8x8xf32> to vector<4x8x8xf32>
    "tpu.trace_start"() <{level = 10 : i32, message = "nqd,nkd->nqk"}> : () -> ()
    %cst_19 = arith.constant dense<0.000000e+00> : vector<4x8x8xf32>
    %35 = tpu.matmul %26, %30, %cst_19 {dimension_numbers = #tpu.dot_dimension_numbers<[2], [2], [1], [1], [0, 0, 0, 1, 1, 1], [0], [0]>} : vector<4x8x8xf32>, vector<4x8x8xf32>, vector<4x8x8xf32> -> vector<4x8x8xf32>
    "tpu.trace_stop"() : () -> ()
    %cst_20 = arith.constant dense<0xFF800000> : vector<4x8xf32>
    %36 = vector.multi_reduction <maximumf>, %35, %cst_20 [2] : vector<4x8x8xf32> to vector<4x8xf32>
    %37 = vector.shape_cast %36 : vector<4x8xf32> to vector<4x8x1xf32>
    %38 = vector.broadcast %37 : vector<4x8x1xf32> to vector<4x8x8xf32>
    %39 = arith.subf %35, %38 : vector<4x8x8xf32>
    %40 = math.exp %39 : vector<4x8x8xf32>
    %cst_21 = arith.constant dense<0.000000e+00> : vector<4x8xf32>
    %41 = vector.multi_reduction <add>, %40, %cst_21 [2] : vector<4x8x8xf32> to vector<4x8xf32>
    %42 = vector.shape_cast %41 : vector<4x8xf32> to vector<4x8x1xf32>
    %43 = vector.broadcast %42 : vector<4x8x1xf32> to vector<4x8x8xf32>
    %44 = arith.divf %40, %43 : vector<4x8x8xf32>
    %45 = vector.shape_cast %44 : vector<4x8x8xf32> to vector<1x4x8x8xf32>
    %c0_22 = arith.constant 0 : index
    %c0_23 = arith.constant 0 : index
    %c0_24 = arith.constant 0 : index
    %c0_25 = arith.constant 0 : index
    %46 = vector.load %arg11[%c0_22, %c0_23, %c0_24, %c0_25] : memref<1x4x8x8xf32, #tpu.memory_space<vmem>>, vector<1x4x8x8xf32>
    tpu.vector_store %arg11[%c0_22, %c0_23, %c0_24, %c0_25], %45 {strides = array<i32>} : memref<1x4x8x8xf32, #tpu.memory_space<vmem>>, vector<1x4x8x8xf32>,
    "tpu.trace_start"() <{level = 10 : i32, message = "nqk,nkd->nqd"}> : () -> ()
    %cst_26 = arith.constant dense<0.000000e+00> : vector<4x8x8xf32>
    %47 = tpu.matmul %44, %34, %cst_26 {dimension_numbers = #tpu.dot_dimension_numbers<[2], [1], [1], [2], [0, 0, 0, 1, 1, 2], [0], [0]>} : vector<4x8x8xf32>, vector<4x8x8xf32>, vector<4x8x8xf32> -> vector<4x8x8xf32>
    "tpu.trace_stop"() : () -> ()
    %48 = vector.shape_cast %47 : vector<4x8x8xf32> to vector<1x4x8x8xf32>
    %49 = tpu.transpose %48, [0, 2, 1, 3] : vector<1x4x8x8xf32> -> vector<1x8x4x8xf32>
    %50 = vector.shape_cast %49 : vector<1x8x4x8xf32> to vector<8x32xf32>
    %51 = arith.mulf %50, %22 : vector<8x32xf32>
    %c0_27 = arith.constant 0 : index
    %c0_28 = arith.constant 0 : index
    %52 = vector.load %arg4[%c0_27, %c0_28] : memref<32x32xf32, #tpu.memory_space<vmem>>, vector<32x32xf32>
    %cst_29 = arith.constant dense<0.000000e+00> : vector<8x32xf32>
    %53 = tpu.matmul %51, %52, %cst_29 {dimension_numbers = #tpu.dot_dimension_numbers<[1], [0], [0], [1], [0, 0, 1, 1], [], []>} : vector<8x32xf32>, vector<32x32xf32>, vector<8x32xf32> -> vector<8x32xf32>
    %c0_30 = arith.constant 0 : index
    %c0_31 = arith.constant 0 : index
    %54 = vector.load %arg5[%c0_30, %c0_31] : memref<1x32xf32, #tpu.memory_space<vmem>>, vector<1x32xf32>
    %55 = vector.broadcast %54 : vector<1x32xf32> to vector<8x32xf32>
    %56 = arith.addf %53, %55 : vector<8x32xf32>
    %57 = vector.shape_cast %56 : vector<8x32xf32> to vector<1x8x32xf32>
    %c0_32 = arith.constant 0 : index
    %c0_33 = arith.constant 0 : index
    %c0_34 = arith.constant 0 : index
    %58 = vector.load %arg10[%c0_32, %c0_33, %c0_34] : memref<1x8x32xf32, #tpu.memory_space<vmem>>, vector<1x8x32xf32>
    tpu.vector_store %arg10[%c0_32, %c0_33, %c0_34], %57 {strides = array<i32>} : memref<1x8x32xf32, #tpu.memory_space<vmem>>, vector<1x8x32xf32>,
    return
  }
  func.func @transform_0(%arg0: i32) -> (i32, i32, i32) {
    %c0_i32 = arith.constant 0 : i32
    %c0_i32_0 = arith.constant 0 : i32
    %c0_i32_1 = arith.constant 0 : i32
    return %arg0, %c0_i32, %c0_i32_0 : i32, i32, i32
  }
  func.func @transform_1(%arg0: i32) -> (i32, i32) {
    %c0_i32 = arith.constant 0 : i32
    %c0_i32_0 = arith.constant 0 : i32
    %c0_i32_1 = arith.constant 0 : i32
    return %c0_i32, %c0_i32_0 : i32, i32
  }
  func.func @transform_2(%arg0: i32) -> (i32, i32) {
    %c0_i32 = arith.constant 0 : i32
    %c0_i32_0 = arith.constant 0 : i32
    %c0_i32_1 = arith.constant 0 : i32
    return %c0_i32, %c0_i32_0 : i32, i32
  }
  func.func @transform_3(%arg0: i32) -> (i32, i32) {
    %c0_i32 = arith.constant 0 : i32
    %c0_i32_0 = arith.constant 0 : i32
    %c0_i32_1 = arith.constant 0 : i32
    return %c0_i32, %c0_i32_0 : i32, i32
  }
  func.func @transform_4(%arg0: i32) -> (i32, i32) {
    %c0_i32 = arith.constant 0 : i32
    %c0_i32_0 = arith.constant 0 : i32
    %c0_i32_1 = arith.constant 0 : i32
    return %c0_i32, %c0_i32_0 : i32, i32
  }
  func.func @transform_5(%arg0: i32) -> (i32, i32) {
    %c0_i32 = arith.constant 0 : i32
    %c0_i32_0 = arith.constant 0 : i32
    %c0_i32_1 = arith.constant 0 : i32
    return %c0_i32, %c0_i32_0 : i32, i32
  }
  func.func @transform_6(%arg0: i32) -> (i32, i32) {
    %c0_i32 = arith.constant 0 : i32
    %c0_i32_0 = arith.constant 0 : i32
    %c0_i32_1 = arith.constant 0 : i32
    return %c0_i32, %c0_i32_0 : i32, i32
  }
  func.func @transform_7(%arg0: i32) -> (i32, i32) {
    %c0_i32 = arith.constant 0 : i32
    %c0_i32_0 = arith.constant 0 : i32
    %c0_i32_1 = arith.constant 0 : i32
    return %c0_i32, %c0_i32_0 : i32, i32
  }
  func.func @transform_8(%arg0: i32) -> (i32, i32) {
    %c0_i32 = arith.constant 0 : i32
    %c0_i32_0 = arith.constant 0 : i32
    %c0_i32_1 = arith.constant 0 : i32
    return %c0_i32, %c0_i32_0 : i32, i32
  }
  func.func @transform_9(%arg0: i32) -> (i32, i32, i32) {
    %c0_i32 = arith.constant 0 : i32
    %c0_i32_0 = arith.constant 0 : i32
    %c0_i32_1 = arith.constant 0 : i32
    return %arg0, %c0_i32, %c0_i32_0 : i32, i32, i32
  }
  func.func @transform_10(%arg0: i32) -> (i32, i32, i32, i32) {
    %c0_i32 = arith.constant 0 : i32
    %c0_i32_0 = arith.constant 0 : i32
    %c0_i32_1 = arith.constant 0 : i32
    %c0_i32_2 = arith.constant 0 : i32
    return %arg0, %c0_i32, %c0_i32_0, %c0_i32_1 : i32, i32, i32, i32
  }
}

module attributes {stable_mosaic.version = 11 : i64} {
  func.func @_hia_kernel(%arg0: i32, %arg1: memref<1x8x32xf32, #tpu.memory_space<vmem>>, %arg2: memref<32x96xf32, #tpu.memory_space<vmem>>, %arg3: memref<1x96xf32, #tpu.memory_space<vmem>>, %arg4: memref<32x32xf32, #tpu.memory_space<vmem>>, %arg5: memref<1x32xf32, #tpu.memory_space<vmem>>, %arg6: memref<32x8xf32, #tpu.memory_space<vmem>>, %arg7: memref<1x8xf32, #tpu.memory_space<vmem>>, %arg8: memref<8x32xf32, #tpu.memory_space<vmem>>, %arg9: memref<1x32xf32, #tpu.memory_space<vmem>>, %arg10: memref<1x8x32xf32, #tpu.memory_space<vmem>>, %arg11: memref<1x4x8x8xf32, #tpu.memory_space<vmem>>) attributes {dimension_semantics = [#tpu.dimension_semantics<parallel>], iteration_bounds = array<i64: 2>, scalar_prefetch = 0 : i64, scratch_operands = 0 : i64, tpu.core_type = #tpu.core_type<tc>, window_params = [{transform_indices = @transform_0, window_bounds = array<i64: 1, 8, 32>}, {pipeline_mode = #tpu.pipeline_mode<synchronous>, transform_indices = @transform_1, window_bounds = array<i64: 32, 96>}, {pipeline_mode = #tpu.pipeline_mode<synchronous>, transform_indices = @transform_2, window_bounds = array<i64: 1, 96>}, {pipeline_mode = #tpu.pipeline_mode<synchronous>, transform_indices = @transform_3, window_bounds = array<i64: 32, 32>}, {pipeline_mode = #tpu.pipeline_mode<synchronous>, transform_indices = @transform_4, window_bounds = array<i64: 1, 32>}, {pipeline_mode = #tpu.pipeline_mode<synchronous>, transform_indices = @transform_5, window_bounds = array<i64: 32, 8>}, {pipeline_mode = #tpu.pipeline_mode<synchronous>, transform_indices = @transform_6, window_bounds = array<i64: 1, 8>}, {pipeline_mode = #tpu.pipeline_mode<synchronous>, transform_indices = @transform_7, window_bounds = array<i64: 8, 32>}, {pipeline_mode = #tpu.pipeline_mode<synchronous>, transform_indices = @transform_8, window_bounds = array<i64: 1, 32>}, {transform_indices = @transform_9, window_bounds = array<i64: 1, 8, 32>}, {transform_indices = @transform_10, window_bounds = array<i64: 1, 4, 8, 8>}]} {
    %c0 = arith.constant 0 : index
    %c0_0 = arith.constant 0 : index
    %c0_1 = arith.constant 0 : index
    %0 = vector.load %arg1[%c0, %c0_0, %c0_1] : memref<1x8x32xf32, #tpu.memory_space<vmem>>, vector<1x8x32xf32>
    %1 = vector.shape_cast %0 : vector<1x8x32xf32> to vector<8x32xf32>
    %c0_2 = arith.constant 0 : index
    %c0_3 = arith.constant 0 : index
    %2 = vector.load %arg2[%c0_2, %c0_3] : memref<32x96xf32, #tpu.memory_space<vmem>>, vector<32x96xf32>
    %cst = arith.constant dense<0.000000e+00> : vector<8x96xf32>
    %3 = tpu.matmul %1, %2, %cst {dimension_numbers = #tpu.dot_dimension_numbers<[1], [0], [0], [1], [0, 0, 1, 1], [], []>} : vector<8x32xf32>, vector<32x96xf32>, vector<8x96xf32> -> vector<8x96xf32>
    %c0_4 = arith.constant 0 : index
    %c0_5 = arith.constant 0 : index
    %4 = vector.load %arg3[%c0_4, %c0_5] : memref<1x96xf32, #tpu.memory_space<vmem>>, vector<1x96xf32>
    %5 = vector.broadcast %4 : vector<1x96xf32> to vector<8x96xf32>
    %6 = arith.addf %3, %5 : vector<8x96xf32>
    %c0_6 = arith.constant 0 : index
    %c0_7 = arith.constant 0 : index
    %7 = vector.load %arg6[%c0_6, %c0_7] : memref<32x8xf32, #tpu.memory_space<vmem>>, vector<32x8xf32>
    %cst_8 = arith.constant dense<0.000000e+00> : vector<8x8xf32>
    %8 = tpu.matmul %1, %7, %cst_8 {dimension_numbers = #tpu.dot_dimension_numbers<[1], [0], [0], [1], [0, 0, 1, 1], [], []>} : vector<8x32xf32>, vector<32x8xf32>, vector<8x8xf32> -> vector<8x8xf32>
    %c0_9 = arith.constant 0 : index
    %c0_10 = arith.constant 0 : index
    %9 = vector.load %arg7[%c0_9, %c0_10] : memref<1x8xf32, #tpu.memory_space<vmem>>, vector<1x8xf32>
    %10 = vector.broadcast %9 : vector<1x8xf32> to vector<8x8xf32>
    %11 = arith.addf %8, %10 : vector<8x8xf32>
    %cst_11 = arith.constant 0.000000e+00 : f32
    %12 = vector.broadcast %cst_11 : f32 to vector<8x8xf32>
    %13 = arith.maximumf %11, %12 : vector<8x8xf32>
    %c0_12 = arith.constant 0 : index
    %c0_13 = arith.constant 0 : index
    %14 = vector.load %arg8[%c0_12, %c0_13] : memref<8x32xf32, #tpu.memory_space<vmem>>, vector<8x32xf32>
    %cst_14 = arith.constant dense<0.000000e+00> : vector<8x32xf32>
    %15 = tpu.matmul %13, %14, %cst_14 {dimension_numbers = #tpu.dot_dimension_numbers<[1], [0], [0], [1], [0, 0, 1, 1], [], []>} : vector<8x8xf32>, vector<8x32xf32>, vector<8x32xf32> -> vector<8x32xf32>
    %c0_15 = arith.constant 0 : index
    %c0_16 = arith.constant 0 : index
    %16 = vector.load %arg9[%c0_15, %c0_16] : memref<1x32xf32, #tpu.memory_space<vmem>>, vector<1x32xf32>
    %17 = vector.broadcast %16 : vector<1x32xf32> to vector<8x32xf32>
    %18 = arith.addf %15, %17 : vector<8x32xf32>
    %cst_17 = arith.constant 1.000000e+00 : f32
    %19 = vector.broadcast %cst_17 : f32 to vector<8x32xf32>
    %20 = arith.mulf %19, %18 : vector<8x32xf32>
    %cst_18 = arith.constant 1.000000e+00 : f32
    %21 = vector.broadcast %cst_18 : f32 to vector<8x32xf32>
    %22 = arith.addf %21, %20 : vector<8x32xf32>
    %23 = vector.extract_strided_slice %6 {offsets = [0, 0], sizes = [8, 32], strides = [1, 1]} : vector<8x96xf32> to vector<8x32xf32>
    %24 = vector.shape_cast %23 : vector<8x32xf32> to vector<1x8x4x8xf32>
    %25 = tpu.transpose %24, [0, 2, 1, 3] : vector<1x8x4x8xf32> -> vector<1x4x8x8xf32>
    %26 = vector.shape_cast %25 : vector<1x4x8x8xf32> to vector<4x8x8xf32>
    %27 = vector.extract_strided_slice %6 {offsets = [0, 32], sizes = [8, 32], strides = [1, 1]} : vector<8x96xf32> to vector<8x32xf32>
    %28 = vector.shape_cast %27 : vector<8x32xf32> to vector<1x8x4x8xf32>
    %29 = tpu.transpose %28, [0, 2, 1, 3] : vector<1x8x4x8xf32> -> vector<1x4x8x8xf32>
    %30 = vector.shape_cast %29 : vector<1x4x8x8xf32> to vector<4x8x8xf32>
    %31 = vector.extract_strided_slice %6 {offsets = [0, 64], sizes = [8, 32], strides = [1, 1]} : vector<8x96xf32> to vector<8x32xf32>
    %32 = vector.shape_cast %31 : vector<8x32xf32> to vector<1x8x4x8xf32>
    %33 = tpu.transpose %32, [0, 2, 1, 3] : vector<1x8x4x8xf32> -> vector<1x4x8x8xf32>
    %34 = vector.shape_cast %33 : vector<1x4x8x8xf32> to vector<4x8x8xf32>
    "tpu.trace_start"() <{level = 10 : i32, message = "nqd,nkd->nqk"}> : () -> ()
    %cst_19 = arith.constant dense<0.000000e+00> : vector<4x8x8xf32>
    %35 = tpu.matmul %26, %30, %cst_19 {dimension_numbers = #tpu.dot_dimension_numbers<[2], [2], [1], [1], [0, 0, 0, 1, 1, 1], [0], [0]>} : vector<4x8x8xf32>, vector<4x8x8xf32>, vector<4x8x8xf32> -> vector<4x8x8xf32>
    "tpu.trace_stop"() : () -> ()
    %cst_20 = arith.constant dense<0xFF800000> : vector<4x8xf32>
    %36 = vector.multi_reduction <maximumf>, %35, %cst_20 [2] : vector<4x8x8xf32> to vector<4x8xf32>
    %37 = vector.shape_cast %36 : vector<4x8xf32> to vector<4x8x1xf32>
    %38 = vector.broadcast %37 : vector<4x8x1xf32> to vector<4x8x8xf32>
    %39 = arith.subf %35, %38 : vector<4x8x8xf32>
    %40 = math.exp %39 : vector<4x8x8xf32>
    %cst_21 = arith.constant dense<0.000000e+00> : vector<4x8xf32>
    %41 = vector.multi_reduction <add>, %40, %cst_21 [2] : vector<4x8x8xf32> to vector<4x8xf32>
    %42 = vector.shape_cast %41 : vector<4x8xf32> to vector<4x8x1xf32>
    %43 = vector.broadcast %42 : vector<4x8x1xf32> to vector<4x8x8xf32>
    %44 = arith.divf %40, %43 : vector<4x8x8xf32>
    %45 = vector.shape_cast %44 : vector<4x8x8xf32> to vector<1x4x8x8xf32>
    %c0_22 = arith.constant 0 : index
    %c0_23 = arith.constant 0 : index
    %c0_24 = arith.constant 0 : index
    %c0_25 = arith.constant 0 : index
    %46 = vector.load %arg11[%c0_22, %c0_23, %c0_24, %c0_25] : memref<1x4x8x8xf32, #tpu.memory_space<vmem>>, vector<1x4x8x8xf32>
    tpu.vector_store %arg11[%c0_22, %c0_23, %c0_24, %c0_25], %45 {strides = array<i32>} : memref<1x4x8x8xf32, #tpu.memory_space<vmem>>, vector<1x4x8x8xf32>,
    "tpu.trace_start"() <{level = 10 : i32, message = "nqk,nkd->nqd"}> : () -> ()
    %cst_26 = arith.constant dense<0.000000e+00> : vector<4x8x8xf32>
    %47 = tpu.matmul %44, %34, %cst_26 {dimension_numbers = #tpu.dot_dimension_numbers<[2], [1], [1], [2], [0, 0, 0, 1, 1, 2], [0], [0]>} : vector<4x8x8xf32>, vector<4x8x8xf32>, vector<4x8x8xf32> -> vector<4x8x8xf32>
    "tpu.trace_stop"() : () -> ()
    %48 = vector.shape_cast %47 : vector<4x8x8xf32> to vector<1x4x8x8xf32>
    %49 = tpu.transpose %48, [0, 2, 1, 3] : vector<1x4x8x8xf32> -> vector<1x8x4x8xf32>
    %50 = vector.shape_cast %49 : vector<1x8x4x8xf32> to vector<8x32xf32>
    %51 = arith.mulf %50, %22 : vector<8x32xf32>
    %c0_27 = arith.constant 0 : index
    %c0_28 = arith.constant 0 : index
    %52 = vector.load %arg4[%c0_27, %c0_28] : memref<32x32xf32, #tpu.memory_space<vmem>>, vector<32x32xf32>
    %cst_29 = arith.constant dense<0.000000e+00> : vector<8x32xf32>
    %53 = tpu.matmul %51, %52, %cst_29 {dimension_numbers = #tpu.dot_dimension_numbers<[1], [0], [0], [1], [0, 0, 1, 1], [], []>} : vector<8x32xf32>, vector<32x32xf32>, vector<8x32xf32> -> vector<8x32xf32>
    %c0_30 = arith.constant 0 : index
    %c0_31 = arith.constant 0 : index
    %54 = vector.load %arg5[%c0_30, %c0_31] : memref<1x32xf32, #tpu.memory_space<vmem>>, vector<1x32xf32>
    %55 = vector.broadcast %54 : vector<1x32xf32> to vector<8x32xf32>
    %56 = arith.addf %53, %55 : vector<8x32xf32>
    %57 = vector.shape_cast %56 : vector<8x32xf32> to vector<1x8x32xf32>
    %c0_32 = arith.constant 0 : index
    %c0_33 = arith.constant 0 : index
    %c0_34 = arith.constant 0 : index
    %58 = vector.load %arg10[%c0_32, %c0_33, %c0_34] : memref<1x8x32xf32, #tpu.memory_space<vmem>>, vector<1x8x32xf32>
    tpu.vector_store %arg10[%c0_32, %c0_33, %c0_34], %57 {strides = array<i32>} : memref<1x8x32xf32, #tpu.memory_space<vmem>>, vector<1x8x32xf32>,
    return
  }
  func.func @transform_0(%arg0: i32) -> (i32, i32, i32) {
    %c0_i32 = arith.constant 0 : i32
    %c0_i32_0 = arith.constant 0 : i32
    %c0_i32_1 = arith.constant 0 : i32
    return %arg0, %c0_i32, %c0_i32_0 : i32, i32, i32
  }
  func.func @transform_1(%arg0: i32) -> (i32, i32) {
    %c0_i32 = arith.constant 0 : i32
    %c0_i32_0 = arith.constant 0 : i32
    %c0_i32_1 = arith.constant 0 : i32
    return %c0_i32, %c0_i32_0 : i32, i32
  }
  func.func @transform_2(%arg0: i32) -> (i32, i32) {
    %c0_i32 = arith.constant 0 : i32
    %c0_i32_0 = arith.constant 0 : i32
    %c0_i32_1 = arith.constant 0 : i32
    return %c0_i32, %c0_i32_0 : i32, i32
  }
  func.func @transform_3(%arg0: i32) -> (i32, i32) {
    %c0_i32 = arith.constant 0 : i32
    %c0_i32_0 = arith.constant 0 : i32
    %c0_i32_1 = arith.constant 0 : i32
    return %c0_i32, %c0_i32_0 : i32, i32
  }
  func.func @transform_4(%arg0: i32) -> (i32, i32) {
    %c0_i32 = arith.constant 0 : i32
    %c0_i32_0 = arith.constant 0 : i32
    %c0_i32_1 = arith.constant 0 : i32
    return %c0_i32, %c0_i32_0 : i32, i32
  }
  func.func @transform_5(%arg0: i32) -> (i32, i32) {
    %c0_i32 = arith.constant 0 : i32
    %c0_i32_0 = arith.constant 0 : i32
    %c0_i32_1 = arith.constant 0 : i32
    return %c0_i32, %c0_i32_0 : i32, i32
  }
  func.func @transform_6(%arg0: i32) -> (i32, i32) {
    %c0_i32 = arith.constant 0 : i32
    %c0_i32_0 = arith.constant 0 : i32
    %c0_i32_1 = arith.constant 0 : i32
    return %c0_i32, %c0_i32_0 : i32, i32
  }
  func.func @transform_7(%arg0: i32) -> (i32, i32) {
    %c0_i32 = arith.constant 0 : i32
    %c0_i32_0 = arith.constant 0 : i32
    %c0_i32_1 = arith.constant 0 : i32
    return %c0_i32, %c0_i32_0 : i32, i32
  }
  func.func @transform_8(%arg0: i32) -> (i32, i32) {
    %c0_i32 = arith.constant 0 : i32
    %c0_i32_0 = arith.constant 0 : i32
    %c0_i32_1 = arith.constant 0 : i32
    return %c0_i32, %c0_i32_0 : i32, i32
  }
  func.func @transform_9(%arg0: i32) -> (i32, i32, i32) {
    %c0_i32 = arith.constant 0 : i32
    %c0_i32_0 = arith.constant 0 : i32
    %c0_i32_1 = arith.constant 0 : i32
    return %arg0, %c0_i32, %c0_i32_0 : i32, i32, i32
  }
  func.func @transform_10(%arg0: i32) -> (i32, i32, i32, i32) {
    %c0_i32 = arith.constant 0 : i32
    %c0_i32_0 = arith.constant 0 : i32
    %c0_i32_1 = arith.constant 0 : i32
    %c0_i32_2 = arith.constant 0 : i32
    return %arg0, %c0_i32, %c0_i32_0, %c0_i32_1 : i32, i32, i32, i32
  }
}

</mosaic_0001>

<llo_original>
// kernel: tpu_custom_call.1
$region0: #{tpu_custom_call.1}
  #allocation0 [shape = 'u32[]', space=smem, size = 0x4, offset = 0x4, fixed_abs, tag = 'smem constant byte address 0x4 - core index']
  #allocation1 [shape = 'u32[144,128]{1,0:T(1,128)}', space=vmem, size = 0x12000, scoped, tag = 'internal scratch']
  %s0 = inlined_call_operand.hbm [shape: f32[2,8,32], index: 0, kind: input, shape index: {}]
  %s1 = inlined_call_operand.vmem [shape: f32[32,96], index: 1, kind: input, shape index: {}]
  %s2 = inlined_call_operand.vmem [shape: f32[1,96], index: 2, kind: input, shape index: {}]
  %s3 = inlined_call_operand.hbm [shape: f32[32,32], index: 3, kind: input, shape index: {}]
  %s4 = inlined_call_operand.hbm [shape: f32[1,32], index: 4, kind: input, shape index: {}]
  %s5 = inlined_call_operand.vmem [shape: f32[32,8], index: 5, kind: input, shape index: {}]
  %s6 = inlined_call_operand.vmem [shape: f32[1,8], index: 6, kind: input, shape index: {}]
  %s7 = inlined_call_operand.vmem [shape: f32[8,32], index: 7, kind: input, shape index: {}]
  %s8 = inlined_call_operand.vmem [shape: f32[1,32], index: 8, kind: input, shape index: {}]
  %s9 = inlined_call_operand.hbm [shape: f32[2,8,32], index: 9, kind: output, shape index: {0}]
  %s10 = inlined_call_operand.hbm [shape: f32[2,4,8,8], index: 10, kind: output, shape index: {1}]
  %11 = xla_tuple %s9, %s10
  %s12 = sld [smem:[#allocation0]]
  $region89: #{tpu_custom_call.1} parent=0
    _
  %s14 = ssub.s32 1, %s12
  %s15 = scalar_select 0, %s14, %s12
  $region1: #{tpu_custom_call.1} parent=0
    #allocation2 [shape = 'u8[8192]{0}', space=vmem, size = 0x2000, scoped, tag = 'input window, operand 0']
    #allocation3 [shape = 's32[2]{0}', space=sflag, size = 0x8, scoped, tag = 'scoped memory for tpu_custom_call.1']
    #allocation4 [shape = 's32[2]{0}', space=sflag, size = 0x8, scoped, tag = 'scoped memory for tpu_custom_call.1']
    #allocation5 [shape = 'u8[16384]{0}', space=vmem, size = 0x4000, scoped, tag = 'input window, operand 3, single buffered']
    #allocation6 [shape = 's32[1]{0}', space=sflag, size = 0x4, scoped, tag = 'scoped memory for tpu_custom_call.1']
    #allocation7 [shape = 'u8[512]{0}', space=vmem, size = 0x400, scoped, tag = 'input window, operand 4, single buffered']
    #allocation8 [shape = 'u8[8192]{0}', space=vmem, size = 0x2000, scoped, tag = 'output window, operand 0']
    #allocation9 [shape = 'u8[32768]{0}', space=vmem, size = 0x8000, scoped, tag = 'output window, operand 1']
    #allocation10 [shape = 's32[2]{0}', space=sflag, size = 0x8, scoped, tag = 'scoped memory for tpu_custom_call.1']
    %16 = vsyncpa [#allocation3], 0
    %s17 = scalar_lea.sflag [#allocation3], 1
    %18 = vsyncpa %s17, 0
    %19 = vsyncpa [#allocation6], 0
    %20 = vsyncpa [#allocation4], 0
    %s21 = scalar_lea.sflag [#allocation4], 1
    %22 = vsyncpa %s21, 0
    %23 = vsyncpa [#allocation10], 0
    %s24 = scalar_lea.sflag [#allocation10], 1
    %25 = vsyncpa %s24, 0
    loop: start=0, step=1, limit=4
    $region2: #{tpu_custom_call.1} parent=1 // loop_pre_header
      _
    $region3: #{tpu_custom_call.1} parent=1 // loop_header
      %s27 = sphi 0, %s31
      %p28 = scmp.ge.s32.totalorder %s27, 4
      %s37 = sphi 0, %s39
      %s40 = sphi 0, %s37
      %s41 = sphi 0, %s40
      %s57 = sphi 0, %s41
      %s61 = sphi 0, %s61
      %s63 = sphi 0, %s61
      %s64 = sphi 0, %s63
      %s78 = sphi 0, %s64
      %s82 = sphi 0, %s82
      %s84 = sphi 0, %s82
      %s85 = sphi 0, %s84
      %s99 = sphi 0, %s85
      %s103 = sphi 0, %s103
      %s105 = sphi 0, %s103
      %s106 = sphi 0, %s105
      %s120 = sphi 0, %s106
      %s124 = sphi 0, %s124
      %s126 = sphi 0, %s124
      %s127 = sphi 0, %s126
      %s141 = sphi 0, %s127
      %s145 = sphi 0, %s145
      %s147 = sphi 0, %s145
      %s148 = sphi 0, %s147
      %s162 = sphi 0, %s148
      %s166 = sphi 0, %s166
      %s168 = sphi 0, %s166
      %s169 = sphi 0, %s168
      %s183 = sphi 0, %s169
      %s187 = sphi 0, %s187
      %s189 = sphi 0, %s187
      %s190 = sphi 0, %s189
      %s204 = sphi 0, %s190
      %s208 = sphi 0, %s208
      %s210 = sphi 0, %s208
      %s211 = sphi 0, %s210
      %s225 = sphi 0, %s211
      %s231 = sphi 0, %s233
      %s234 = sphi 0, %s231
      %s235 = sphi 0, %s234
      %s251 = sphi 0, %s235
      %s257 = sphi 0, %s259
      %s260 = sphi 0, %s257
      %s261 = sphi 0, %s260
      %s277 = sphi 0, %s261
    $region4: #{tpu_custom_call.1} parent=1 // loop_header_branch
      %30 = sbr.rel (%p28) target = $region8
    $region5: #{tpu_custom_call.1} parent=1 // loop_body
      %s32 = ssub.s32 %s27, 1
      %s33 = ssub.s32 %s27, 2
      %s34 = sadd.s32 %s27, 1
      %s35 = ssub.s32 %s27, %s34
      %p36 = scmp.eq.s32.totalorder %s35, 0
      %s38 = sadd.s32 %s37, 1
      %s39 = scalar_select %p36, %s37, %s38
      %p42 = pneg %p36
      %p43 = scmp.eq.s32.totalorder %s27, 1
      %p44 = por %p42, %p43
      %p45 = scmp.ne.s32.totalorder %s37, %s40
      %p46 = scmp.eq.s32.totalorder %s27, 0
      %p47 = por %p45, %p46
      %p48 = scmp.ne.s32.totalorder %s37, %s40
      %p49 = scmp.eq.s32.totalorder %s32, 1
      %p50 = por %p48, %p49
      %p51 = scmp.ne.s32.totalorder %s40, %s41
      %p52 = scmp.eq.s32.totalorder %s32, 0
      %p53 = por %p51, %p52
      %p54 = scmp.ne.s32.totalorder %s40, %s41
      %p55 = scmp.eq.s32.totalorder %s33, 1
      %p56 = por %p54, %p55
      %p58 = scmp.ne.s32.totalorder %s41, %s57
      %p59 = scmp.eq.s32.totalorder %s33, 0
      %p60 = por %p58, %p59
      %s62 = sadd.s32 %s61, 1
      %p65 = scmp.eq.s32.totalorder %s27, 1
      %p66 = scmp.ne.s32.totalorder %s61, %s63
      %p67 = scmp.eq.s32.totalorder %s27, 0
      %p68 = por %p66, %p67
      %p69 = scmp.ne.s32.totalorder %s61, %s63
      %p70 = scmp.eq.s32.totalorder %s32, 1
      %p71 = por %p69, %p70
      %p72 = scmp.ne.s32.totalorder %s63, %s64
      %p73 = scmp.eq.s32.totalorder %s32, 0
      %p74 = por %p72, %p73
      %p75 = scmp.ne.s32.totalorder %s63, %s64
      %p76 = scmp.eq.s32.totalorder %s33, 1
      %p77 = por %p75, %p76
      %p79 = scmp.ne.s32.totalorder %s64, %s78
      %p80 = scmp.eq.s32.totalorder %s33, 0
      %p81 = por %p79, %p80
      %s83 = sadd.s32 %s82, 1
      %p86 = scmp.eq.s32.totalorder %s27, 1
      %p87 = scmp.ne.s32.totalorder %s82, %s84
      %p88 = scmp.eq.s32.totalorder %s27, 0
      %p89 = por %p87, %p88
      %p90 = scmp.ne.s32.totalorder %s82, %s84
      %p91 = scmp.eq.s32.totalorder %s32, 1
      %p92 = por %p90, %p91
      %p93 = scmp.ne.s32.totalorder %s84, %s85
      %p94 = scmp.eq.s32.totalorder %s32, 0
      %p95 = por %p93, %p94
      %p96 = scmp.ne.s32.totalorder %s84, %s85
      %p97 = scmp.eq.s32.totalorder %s33, 1
      %p98 = por %p96, %p97
      %p100 = scmp.ne.s32.totalorder %s85, %s99
      %p101 = scmp.eq.s32.totalorder %s33, 0
      %p102 = por %p100, %p101
      %s104 = sadd.s32 %s103, 1
      %p107 = scmp.eq.s32.totalorder %s27, 1
      %p108 = scmp.ne.s32.totalorder %s103, %s105
      %p109 = scmp.eq.s32.totalorder %s27, 0
      %p110 = por %p108, %p109
      %p111 = scmp.ne.s32.totalorder %s103, %s105
      %p112 = scmp.eq.s32.totalorder %s32, 1
      %p113 = por %p111, %p112
      %p114 = scmp.ne.s32.totalorder %s105, %s106
      %p115 = scmp.eq.s32.totalorder %s32, 0
      %p116 = por %p114, %p115
      %p117 = scmp.ne.s32.totalorder %s105, %s106
      %p118 = scmp.eq.s32.totalorder %s33, 1
      %p119 = por %p117, %p118
      %p121 = scmp.ne.s32.totalorder %s106, %s120
      %p122 = scmp.eq.s32.totalorder %s33, 0
      %p123 = por %p121, %p122
      %s125 = sadd.s32 %s124, 1
      %p128 = scmp.eq.s32.totalorder %s27, 1
      %p129 = scmp.ne.s32.totalorder %s124, %s126
      %p130 = scmp.eq.s32.totalorder %s27, 0
      %p131 = por %p129, %p130
      %p132 = scmp.ne.s32.totalorder %s124, %s126
      %p133 = scmp.eq.s32.totalorder %s32, 1
      %p134 = por %p132, %p133
      %p135 = scmp.ne.s32.totalorder %s126, %s127
      %p136 = scmp.eq.s32.totalorder %s32, 0
      %p137 = por %p135, %p136
      %p138 = scmp.ne.s32.totalorder %s126, %s127
      %p139 = scmp.eq.s32.totalorder %s33, 1
      %p140 = por %p138, %p139
      %p142 = scmp.ne.s32.totalorder %s127, %s141
      %p143 = scmp.eq.s32.totalorder %s33, 0
      %p144 = por %p142, %p143
      %s146 = sadd.s32 %s145, 1
      %p149 = scmp.eq.s32.totalorder %s27, 1
      %p150 = scmp.ne.s32.totalorder %s145, %s147
      %p151 = scmp.eq.s32.totalorder %s27, 0
      %p152 = por %p150, %p151
      %p153 = scmp.ne.s32.totalorder %s145, %s147
      %p154 = scmp.eq.s32.totalorder %s32, 1
      %p155 = por %p153, %p154
      %p156 = scmp.ne.s32.totalorder %s147, %s148
      %p157 = scmp.eq.s32.totalorder %s32, 0
      %p158 = por %p156, %p157
      %p159 = scmp.ne.s32.totalorder %s147, %s148
      %p160 = scmp.eq.s32.totalorder %s33, 1
      %p161 = por %p159, %p160
      %p163 = scmp.ne.s32.totalorder %s148, %s162
      %p164 = scmp.eq.s32.totalorder %s33, 0
      %p165 = por %p163, %p164
      %s167 = sadd.s32 %s166, 1
      %p170 = scmp.eq.s32.totalorder %s27, 1
      %p171 = scmp.ne.s32.totalorder %s166, %s168
      %p172 = scmp.eq.s32.totalorder %s27, 0
      %p173 = por %p171, %p172
      %p174 = scmp.ne.s32.totalorder %s166, %s168
      %p175 = scmp.eq.s32.totalorder %s32, 1
      %p176 = por %p174, %p175
      %p177 = scmp.ne.s32.totalorder %s168, %s169
      %p178 = scmp.eq.s32.totalorder %s32, 0
      %p179 = por %p177, %p178
      %p180 = scmp.ne.s32.totalorder %s168, %s169
      %p181 = scmp.eq.s32.totalorder %s33, 1
      %p182 = por %p180, %p181
      %p184 = scmp.ne.s32.totalorder %s169, %s183
      %p185 = scmp.eq.s32.totalorder %s33, 0
      %p186 = por %p184, %p185
      %s188 = sadd.s32 %s187, 1
      %p191 = scmp.eq.s32.totalorder %s27, 1
      %p192 = scmp.ne.s32.totalorder %s187, %s189
      %p193 = scmp.eq.s32.totalorder %s27, 0
      %p194 = por %p192, %p193
      %p195 = scmp.ne.s32.totalorder %s187, %s189
      %p196 = scmp.eq.s32.totalorder %s32, 1
      %p197 = por %p195, %p196
      %p198 = scmp.ne.s32.totalorder %s189, %s190
      %p199 = scmp.eq.s32.totalorder %s32, 0
      %p200 = por %p198, %p199
      %p201 = scmp.ne.s32.totalorder %s189, %s190
      %p202 = scmp.eq.s32.totalorder %s33, 1
      %p203 = por %p201, %p202
      %p205 = scmp.ne.s32.totalorder %s190, %s204
      %p206 = scmp.eq.s32.totalorder %s33, 0
      %p207 = por %p205, %p206
      %s209 = sadd.s32 %s208, 1
      %p212 = scmp.eq.s32.totalorder %s27, 1
      %p213 = scmp.ne.s32.totalorder %s208, %s210
      %p214 = scmp.eq.s32.totalorder %s27, 0
      %p215 = por %p213, %p214
      %p216 = scmp.ne.s32.totalorder %s208, %s210
      %p217 = scmp.eq.s32.totalorder %s32, 1
      %p218 = por %p216, %p217
      %p219 = scmp.ne.s32.totalorder %s210, %s211
      %p220 = scmp.eq.s32.totalorder %s32, 0
      %p221 = por %p219, %p220
      %p222 = scmp.ne.s32.totalorder %s210, %s211
      %p223 = scmp.eq.s32.totalorder %s33, 1
      %p224 = por %p222, %p223
      %p226 = scmp.ne.s32.totalorder %s211, %s225
      %p227 = scmp.eq.s32.totalorder %s33, 0
      %p228 = por %p226, %p227
      %s229 = ssub.s32 %s27, %s34
      %p230 = scmp.eq.s32.totalorder %s229, 0
      %s232 = sadd.s32 %s231, 1
      %s233 = scalar_select %p230, %s231, %s232
      %p236 = pneg %p230
      %p237 = scmp.eq.s32.totalorder %s27, 1
      %p238 = por %p236, %p237
      %p239 = scmp.ne.s32.totalorder %s231, %s234
      %p240 = scmp.eq.s32.totalorder %s27, 0
      %p241 = por %p239, %p240
      %p242 = scmp.ne.s32.totalorder %s231, %s234
      %p243 = scmp.eq.s32.totalorder %s32, 1
      %p244 = por %p242, %p243
      %p245 = scmp.ne.s32.totalorder %s234, %s235
      %p246 = scmp.eq.s32.totalorder %s32, 0
      %p247 = por %p245, %p246
      %p248 = scmp.ne.s32.totalorder %s234, %s235
      %p249 = scmp.eq.s32.totalorder %s33, 1
      %p250 = por %p248, %p249
      %p252 = scmp.ne.s32.totalorder %s235, %s251
      %p253 = scmp.eq.s32.totalorder %s33, 0
      %p254 = por %p252, %p253
      %s255 = ssub.s32 %s27, %s34
      %p256 = scmp.eq.s32.totalorder %s255, 0
      %s258 = sadd.s32 %s257, 1
      %s259 = scalar_select %p256, %s257, %s258
      %p262 = pneg %p256
      %p263 = scmp.eq.s32.totalorder %s27, 1
      %p264 = por %p262, %p263
      %p265 = scmp.ne.s32.totalorder %s257, %s260
      %p266 = scmp.eq.s32.totalorder %s27, 0
      %p267 = por %p265, %p266
      %p268 = scmp.ne.s32.totalorder %s257, %s260
      %p269 = scmp.eq.s32.totalorder %s32, 1
      %p270 = por %p268, %p269
      %p271 = scmp.ne.s32.totalorder %s260, %s261
      %p272 = scmp.eq.s32.totalorder %s32, 0
      %p273 = por %p271, %p272
      %p274 = scmp.ne.s32.totalorder %s260, %s261
      %p275 = scmp.eq.s32.totalorder %s33, 1
      %p276 = por %p274, %p275
      %p278 = scmp.ne.s32.totalorder %s261, %s277
      %p279 = scmp.eq.s32.totalorder %s33, 0
      %p280 = por %p278, %p279
      %p281 = scmp.le.s32.totalorder 1, %s27
      %p282 = scmp.lt.s32.totalorder %s27, 3
      %p283 = pnand %p281, %p282
      %p284 = pneg %p283
      // Predicated region
      $region9: #{tpu_custom_call.1} parent=5 // pred_check
        _
      $region10: #{tpu_custom_call.1} parent=5 // pred_check_branch
        %286 = sbr.rel (%p283) target = $region12
      $region11: #{tpu_custom_call.1} parent=5 // pred_region
        %s287 = ssub.s32 %s27, 1
        // Predicated region
        $region13: #{tpu_custom_call.1} parent=11 // pred_check
          %p288 = pneg %p74
        $region14: #{tpu_custom_call.1} parent=11 // pred_check_branch
          %290 = sbr.rel (%p288) target = $region16
        $region15: #{tpu_custom_call.1} parent=11 // pred_region
          _
        $region16: #{tpu_custom_call.1} parent=11 // pred_fallthru
          _
        // Predicated region
        $region17: #{tpu_custom_call.1} parent=11 // pred_check
          %p291 = pneg %p95
        $region18: #{tpu_custom_call.1} parent=11 // pred_check_branch
          %293 = sbr.rel (%p291) target = $region20
        $region19: #{tpu_custom_call.1} parent=11 // pred_region
          _
        $region20: #{tpu_custom_call.1} parent=11 // pred_fallthru
          _
        // Predicated region
        $region21: #{tpu_custom_call.1} parent=11 // pred_check
          %p294 = pneg %p116
        $region22: #{tpu_custom_call.1} parent=11 // pred_check_branch
          %296 = sbr.rel (%p294) target = $region24
        $region23: #{tpu_custom_call.1} parent=11 // pred_region
          %s298 = ssub.s32 512, 512
          %299 = vsyncadd [#allocation6], %s298
          %s300 = sshll.u32 [#allocation5], 4
          %s301 = int_to_ptr.vmem [resolvable:$true] %s300
          %306 = dma.hbm_to_vmem [thread:$0]  %s3, 512, %s301, [#allocation6], 128, 128, 8
        $region24: #{tpu_custom_call.1} parent=11 // pred_fallthru
          _
        // Predicated region
        $region25: #{tpu_custom_call.1} parent=11 // pred_check
          %p307 = pneg %p137
        $region26: #{tpu_custom_call.1} parent=11 // pred_check_branch
          %309 = sbr.rel (%p307) target = $region28
        $region27: #{tpu_custom_call.1} parent=11 // pred_region
          %s311 = ssub.s32 16, 16
          %312 = vsyncadd [#allocation6], %s311
          %s314 = sshll.u32 [#allocation7], 4
          %s315 = int_to_ptr.vmem [resolvable:$true] %s314
          %317 = dma.hbm_to_vmem [thread:$0]  %s4, 16, %s315, [#allocation6]
        $region28: #{tpu_custom_call.1} parent=11 // pred_fallthru
          _
        // Predicated region
        $region29: #{tpu_custom_call.1} parent=11 // pred_check
          %p318 = pneg %p158
        $region30: #{tpu_custom_call.1} parent=11 // pred_check_branch
          %320 = sbr.rel (%p318) target = $region32
        $region31: #{tpu_custom_call.1} parent=11 // pred_region
          _
        $region32: #{tpu_custom_call.1} parent=11 // pred_fallthru
          _
        // Predicated region
        $region33: #{tpu_custom_call.1} parent=11 // pred_check
          %p321 = pneg %p179
        $region34: #{tpu_custom_call.1} parent=11 // pred_check_branch
          %323 = sbr.rel (%p321) target = $region36
        $region35: #{tpu_custom_call.1} parent=11 // pred_region
          _
        $region36: #{tpu_custom_call.1} parent=11 // pred_fallthru
          _
        // Predicated region
        $region37: #{tpu_custom_call.1} parent=11 // pred_check
          %p324 = pneg %p200
        $region38: #{tpu_custom_call.1} parent=11 // pred_check_branch
          %326 = sbr.rel (%p324) target = $region40
        $region39: #{tpu_custom_call.1} parent=11 // pred_region
          _
        $region40: #{tpu_custom_call.1} parent=11 // pred_fallthru
          _
        // Predicated region
        $region41: #{tpu_custom_call.1} parent=11 // pred_check
          %p327 = pneg %p221
        $region42: #{tpu_custom_call.1} parent=11 // pred_check_branch
          %329 = sbr.rel (%p327) target = $region44
        $region43: #{tpu_custom_call.1} parent=11 // pred_region
          _
        $region44: #{tpu_custom_call.1} parent=11 // pred_fallthru
          _
      $region12: #{tpu_custom_call.1} parent=5 // pred_fallthru
        _
      %p330 = scmp.lt.s32.totalorder %s27, 2
      // Predicated region
      $region45: #{tpu_custom_call.1} parent=5 // pred_check
        %p331 = pneg %p330
      $region46: #{tpu_custom_call.1} parent=5 // pred_check_branch
        %333 = sbr.rel (%p331) target = $region48
      $region47: #{tpu_custom_call.1} parent=5 // pred_region
        // Predicated region
        $region49: #{tpu_custom_call.1} parent=47 // pred_check
          %p334 = pneg %p47
        $region50: #{tpu_custom_call.1} parent=47 // pred_check_branch
          %336 = sbr.rel (%p334) target = $region52
        $region51: #{tpu_custom_call.1} parent=47 // pred_region
          %s337 = sand.u32 %s37, 1
          %s338 = scalar_lea.sflag [#allocation3], %s337
          %s339 = sand.u32 %s37, 1
          %s340 = smul.addr %s339, 8
          %s341 = scalar_lea.vmem [#allocation2], %s340
          %s343 = ssub.s32 128, 128
          %344 = vsyncadd %s338, %s343
          %s345 = smul.addr %s27, 128
          %s346 = scalar_lea.hbm %s0, %s345
          %s348 = sshll.u32 %s341, 4
          %s349 = int_to_ptr.vmem [resolvable:$true] %s348
          %351 = dma.hbm_to_vmem [thread:$0]  %s346, 128, %s349, %s338
        $region52: #{tpu_custom_call.1} parent=47 // pred_fallthru
          _
      $region48: #{tpu_custom_call.1} parent=5 // pred_fallthru
        _
      %p352 = scmp.le.s32.totalorder 1, %s27
      %p353 = scmp.lt.s32.totalorder %s27, 3
      %p354 = pnand %p352, %p353
      %p355 = pneg %p354
      // Predicated region
      $region53: #{tpu_custom_call.1} parent=5 // pred_check
        _
      $region54: #{tpu_custom_call.1} parent=5 // pred_check_branch
        %357 = sbr.rel (%p354) target = $region56
      $region55: #{tpu_custom_call.1} parent=5 // pred_region
        %s358 = ssub.s32 %s27, 1
        %s359 = sand.u32 %s40, 1
        %s360 = scalar_lea.sflag [#allocation3], %s359
        %s361 = sand.u32 %s40, 1
        %s362 = smul.addr %s361, 8
        %s363 = scalar_lea.vmem [#allocation2], %s362
        // Predicated region
        $region57: #{tpu_custom_call.1} parent=55 // pred_check
          %p364 = pneg %p53
        $region58: #{tpu_custom_call.1} parent=55 // pred_check_branch
          %366 = sbr.rel (%p364) target = $region60
        $region59: #{tpu_custom_call.1} parent=55 // pred_region
          %367 = dma.done %s360, 128
        $region60: #{tpu_custom_call.1} parent=55 // pred_fallthru
          _
        // Predicated region
        $region61: #{tpu_custom_call.1} parent=55 // pred_check
          %p368 = pneg %p116
        $region62: #{tpu_custom_call.1} parent=55 // pred_check_branch
          %370 = sbr.rel (%p368) target = $region64
        $region63: #{tpu_custom_call.1} parent=55 // pred_region
          %371 = dma.done [#allocation6], 512
        $region64: #{tpu_custom_call.1} parent=55 // pred_fallthru
          _
        // Predicated region
        $region65: #{tpu_custom_call.1} parent=55 // pred_check
          %p372 = pneg %p137
        $region66: #{tpu_custom_call.1} parent=55 // pred_check_branch
          %374 = sbr.rel (%p372) target = $region68
        $region67: #{tpu_custom_call.1} parent=55 // pred_region
          %375 = dma.done [#allocation6], 16
        $region68: #{tpu_custom_call.1} parent=55 // pred_fallthru
          _
        %s376 = sand.u32 %s40, 1
        %s377 = scalar_lea.sflag [#allocation3], %s376
        %s378 = sand.u32 %s40, 1
        %s379 = smul.addr %s378, 8
        %s380 = scalar_lea.vmem [#allocation2], %s379
        %p381 = pneg %p53
        %p382 = pneg %p50
        %p383 = pneg %p74
        %p384 = pneg %p71
        %p385 = pneg %p95
        %p386 = pneg %p92
        %p387 = pneg %p116
        %p388 = pneg %p113
        %p389 = pneg %p137
        %p390 = pneg %p134
        %p391 = pneg %p158
        %p392 = pneg %p155
        %p393 = pneg %p179
        %p394 = pneg %p176
        %p395 = pneg %p200
        %p396 = pneg %p197
        %p397 = pneg %p221
        %p398 = pneg %p218
        %p399 = pneg %p247
        %p400 = pneg %p244
        %s401 = sand.u32 %s234, 1
        %s402 = scalar_lea.sflag [#allocation4], %s401
        %s403 = sand.u32 %s234, 1
        %s404 = smul.addr %s403, 8
        %s405 = scalar_lea.vmem [#allocation8], %s404
        %p406 = pneg %p273
        %p407 = pneg %p270
        %s408 = sand.u32 %s260, 1
        %s409 = scalar_lea.sflag [#allocation10], %s408
        %s410 = sand.u32 %s260, 1
        %s411 = smul.addr %s410, 32
        %s412 = scalar_lea.vmem [#allocation9], %s411
        %v413 = vld [vmem:[%s363] sm:$0xff]
        %v414 = vld [vmem:[%s1] sm:$0xff]
        %v415 = vld [vmem:[%s1 + $0x8] sm:$0xff]
        %v416 = vld [vmem:[%s1 + $0x10] sm:$0xff]
        %v417 = vld [vmem:[%s1 + $0x18] sm:$0xff]
        %v418 = vld [vmem:[%s2] sm:$0x1]
        %v420 = vlaneseq
        %v421 = vshrl.u32 %v420, 7
        %v422 = vsub.s32 0, %v421
        %v423 = vrot.slane %v418, %v422
        %vm425 = vcmask 261120
        %v427 = vsel %vm425, %v413, 0
        %429 = vmatprep.subr.mxu0 0.0
        %430 = vmatpush1.msra.mxu0 0.0
        %431 = vmatprep.subr.mxu0 0.0
        %432 = vmatpush1.msra.mxu0 0.0
        %433 = vmatprep.subr.mxu0 0.0
        %434 = vmatpush1.msra.mxu0 0.0
        %435 = vmatprep.subr.mxu0 0.0
        %436 = vmatpush1.msra.mxu0 0.0
        %437 = vmatprep.subr.mxu0 0.0
        %438 = vmatpush1.msra.mxu0 0.0
        %439 = vmatprep.subr.mxu0 0.0
        %440 = vmatpush1.msra.mxu0 0.0
        %441 = vmatprep.subr.mxu0 0.0
        %442 = vmatpush1.msra.mxu0 0.0
        %443 = vmatprep.subr.mxu0 0.0
        %444 = vmatpush1.msra.mxu0 0.0
        %445 = vmatprep.subr.mxu0 0.0
        %446 = vmatpush1.msra.mxu0 0.0
        %447 = vmatprep.subr.mxu0 0.0
        %448 = vmatpush1.msra.mxu0 0.0
        %449 = vmatprep.subr.mxu0 0.0
        %450 = vmatpush1.msra.mxu0 0.0
        %451 = vmatprep.subr.mxu0 0.0
        %452 = vmatpush1.msra.mxu0 0.0
        %453 = vmatprep.subr.mxu0 0.0
        %454 = vmatpush1.msra.mxu0 %v417
        %455 = vmatprep.subr.mxu0 0.0
        %456 = vmatpush1.msra.mxu0 %v416
        %457 = vmatprep.subr.mxu0 0.0
        %458 = vmatpush1.msra.mxu0 %v415
        %459 = vmatprep.subr.mxu0 0.0
        %460 = vmatpush1.msra.mxu0 %v414
        %461 = vmatprep.subr.mxu0 0.0
        %462 = vmatpush2.msra.mxu0 0.0
        %463 = vmatprep.subr.mxu0 0.0
        %464 = vmatpush2.msra.mxu0 0.0
        %465 = vmatprep.subr.mxu0 0.0
        %466 = vmatpush2.msra.mxu0 0.0
        %467 = vmatprep.subr.mxu0 0.0
        %468 = vmatpush2.msra.mxu0 0.0
        %469 = vmatprep.subr.mxu0 0.0
        %470 = vmatpush2.msra.mxu0 0.0
        %471 = vmatprep.subr.mxu0 0.0
        %472 = vmatpush2.msra.mxu0 0.0
        %473 = vmatprep.subr.mxu0 0.0
        %474 = vmatpush2.msra.mxu0 0.0
        %475 = vmatprep.subr.mxu0 0.0
        %476 = vmatpush2.msra.mxu0 0.0
        %477 = vmatprep.subr.mxu0 0.0
        %478 = vmatpush2.msra.mxu0 0.0
        %479 = vmatprep.subr.mxu0 0.0
        %480 = vmatpush2.msra.mxu0 0.0
        %481 = vmatprep.subr.mxu0 0.0
        %482 = vmatpush2.msra.mxu0 0.0
        %483 = vmatprep.subr.mxu0 0.0
        %484 = vmatpush2.msra.mxu0 0.0
        %485 = vmatprep.subr.mxu0 0.0
        %486 = vmatpush2.msra.mxu0 0.0
        %487 = vmatprep.subr.mxu0 0.0
        %488 = vmatpush2.msra.mxu0 0.0
        %489 = vmatprep.subr.mxu0 0.0
        %490 = vmatpush2.msra.mxu0 0.0
        %491 = vmatprep.subr.mxu0 0.0
        %492 = vmatpush2.msra.mxu0 0.0
        %493 = vmatprep.mubr.f32.mxu0 0.0
        %494 = vmatmul.mubr.f32.gmra.mxu0 %v427
        %v495 = vpop.f32.mrf.mxu0
        %v496 = vadd.f32 %v423, %v495
        %v497 = vpop.f32.mrf.mxu0
        %498 = vdwg.mxu0
        %v499 = vld [vmem:[%s5] sm:$0xff]
        %v500 = vld [vmem:[%s5 + $0x8] sm:$0xff]
        %v501 = vld [vmem:[%s5 + $0x10] sm:$0xff]
        %v502 = vld [vmem:[%s5 + $0x18] sm:$0xff]
        %v503 = vld [vmem:[%s6] sm:$0x1]
        %v505 = vlaneseq
        %v506 = vshrl.u32 %v505, 7
        %v507 = vsub.s32 0, %v506
        %v508 = vrot.slane %v503, %v507
        %510 = vmatprep.subr.mxu0 0.0
        %511 = vmatpush1.msra.mxu0 0.0
        %512 = vmatprep.subr.mxu0 0.0
        %513 = vmatpush1.msra.mxu0 0.0
        %514 = vmatprep.subr.mxu0 0.0
        %515 = vmatpush1.msra.mxu0 0.0
        %516 = vmatprep.subr.mxu0 0.0
        %517 = vmatpush1.msra.mxu0 0.0
        %518 = vmatprep.subr.mxu0 0.0
        %519 = vmatpush1.msra.mxu0 0.0
        %520 = vmatprep.subr.mxu0 0.0
        %521 = vmatpush1.msra.mxu0 0.0
        %522 = vmatprep.subr.mxu0 0.0
        %523 = vmatpush1.msra.mxu0 0.0
        %524 = vmatprep.subr.mxu0 0.0
        %525 = vmatpush1.msra.mxu0 0.0
        %526 = vmatprep.subr.mxu0 0.0
        %527 = vmatpush1.msra.mxu0 0.0
        %528 = vmatprep.subr.mxu0 0.0
        %529 = vmatpush1.msra.mxu0 0.0
        %530 = vmatprep.subr.mxu0 0.0
        %531 = vmatpush1.msra.mxu0 0.0
        %532 = vmatprep.subr.mxu0 0.0
        %533 = vmatpush1.msra.mxu0 0.0
        %534 = vmatprep.subr.mxu0 0.0
        %535 = vmatpush1.msra.mxu0 %v502
        %536 = vmatprep.subr.mxu0 0.0
        %537 = vmatpush1.msra.mxu0 %v501
        %538 = vmatprep.subr.mxu0 0.0
        %539 = vmatpush1.msra.mxu0 %v500
        %540 = vmatprep.subr.mxu0 0.0
        %541 = vmatpush1.msra.mxu0 %v499
        %542 = vmatprep.subr.mxu0 0.0
        %543 = vmatpush2.msra.mxu0 0.0
        %544 = vmatprep.subr.mxu0 0.0
        %545 = vmatpush2.msra.mxu0 0.0
        %546 = vmatprep.subr.mxu0 0.0
        %547 = vmatpush2.msra.mxu0 0.0
        %548 = vmatprep.subr.mxu0 0.0
        %549 = vmatpush2.msra.mxu0 0.0
        %550 = vmatprep.subr.mxu0 0.0
        %551 = vmatpush2.msra.mxu0 0.0
        %552 = vmatprep.subr.mxu0 0.0
        %553 = vmatpush2.msra.mxu0 0.0
        %554 = vmatprep.subr.mxu0 0.0
        %555 = vmatpush2.msra.mxu0 0.0
        %556 = vmatprep.subr.mxu0 0.0
        %557 = vmatpush2.msra.mxu0 0.0
        %558 = vmatprep.subr.mxu0 0.0
        %559 = vmatpush2.msra.mxu0 0.0
        %560 = vmatprep.subr.mxu0 0.0
        %561 = vmatpush2.msra.mxu0 0.0
        %562 = vmatprep.subr.mxu0 0.0
        %563 = vmatpush2.msra.mxu0 0.0
        %564 = vmatprep.subr.mxu0 0.0
        %565 = vmatpush2.msra.mxu0 0.0
        %566 = vmatprep.subr.mxu0 0.0
        %567 = vmatpush2.msra.mxu0 0.0
        %568 = vmatprep.subr.mxu0 0.0
        %569 = vmatpush2.msra.mxu0 0.0
        %570 = vmatprep.subr.mxu0 0.0
        %571 = vmatpush2.msra.mxu0 0.0
        %572 = vmatprep.subr.mxu0 0.0
        %573 = vmatpush2.msra.mxu0 0.0
        %574 = vmatprep.mubr.f32.mxu0 0.0
        %575 = vmatmul.mubr.f32.gmra.mxu0 %v427
        %v576 = vpop.f32.mrf.mxu0
        %v577 = vadd.f32 %v508, %v576
        %v578 = vpop.f32.mrf.mxu0
        %579 = vdwg.mxu0
        %v580 = vmax.f32 %v577, 0.0
        %v581 = vld [vmem:[%s7] sm:$0xff]
        %v582 = vld [vmem:[%s8] sm:$0x1]
        %v584 = vlaneseq
        %v585 = vshrl.u32 %v584, 7
        %v586 = vsub.s32 0, %v585
        %v587 = vrot.slane %v582, %v586
        %vm589 = vcmask 64512
        %v591 = vsel %vm589, %v580, 0
        %593 = vmatprep.subr.mxu0 0.0
        %594 = vmatpush1.msra.mxu0 0.0
        %595 = vmatprep.subr.mxu0 0.0
        %596 = vmatpush1.msra.mxu0 0.0
        %597 = vmatprep.subr.mxu0 0.0
        %598 = vmatpush1.msra.mxu0 0.0
        %599 = vmatprep.subr.mxu0 0.0
        %600 = vmatpush1.msra.mxu0 0.0
        %601 = vmatprep.subr.mxu0 0.0
        %602 = vmatpush1.msra.mxu0 0.0
        %603 = vmatprep.subr.mxu0 0.0
        %604 = vmatpush1.msra.mxu0 0.0
        %605 = vmatprep.subr.mxu0 0.0
        %606 = vmatpush1.msra.mxu0 0.0
        %607 = vmatprep.subr.mxu0 0.0
        %608 = vmatpush1.msra.mxu0 0.0
        %609 = vmatprep.subr.mxu0 0.0
        %610 = vmatpush1.msra.mxu0 0.0
        %611 = vmatprep.subr.mxu0 0.0
        %612 = vmatpush1.msra.mxu0 0.0
        %613 = vmatprep.subr.mxu0 0.0
        %614 = vmatpush1.msra.mxu0 0.0
        %615 = vmatprep.subr.mxu0 0.0
        %616 = vmatpush1.msra.mxu0 0.0
        %617 = vmatprep.subr.mxu0 0.0
        %618 = vmatpush1.msra.mxu0 0.0
        %619 = vmatprep.subr.mxu0 0.0
        %620 = vmatpush1.msra.mxu0 0.0
        %621 = vmatprep.subr.mxu0 0.0
        %622 = vmatpush1.msra.mxu0 0.0
        %623 = vmatprep.subr.mxu0 0.0
        %624 = vmatpush1.msra.mxu0 %v581
        %625 = vmatprep.subr.mxu0 0.0
        %626 = vmatpush2.msra.mxu0 0.0
        %627 = vmatprep.subr.mxu0 0.0
        %628 = vmatpush2.msra.mxu0 0.0
        %629 = vmatprep.subr.mxu0 0.0
        %630 = vmatpush2.msra.mxu0 0.0
        %631 = vmatprep.subr.mxu0 0.0
        %632 = vmatpush2.msra.mxu0 0.0
        %633 = vmatprep.subr.mxu0 0.0
        %634 = vmatpush2.msra.mxu0 0.0
        %635 = vmatprep.subr.mxu0 0.0
        %636 = vmatpush2.msra.mxu0 0.0
        %637 = vmatprep.subr.mxu0 0.0
        %638 = vmatpush2.msra.mxu0 0.0
        %639 = vmatprep.subr.mxu0 0.0
        %640 = vmatpush2.msra.mxu0 0.0
        %641 = vmatprep.subr.mxu0 0.0
        %642 = vmatpush2.msra.mxu0 0.0
        %643 = vmatprep.subr.mxu0 0.0
        %644 = vmatpush2.msra.mxu0 0.0
        %645 = vmatprep.subr.mxu0 0.0
        %646 = vmatpush2.msra.mxu0 0.0
        %647 = vmatprep.subr.mxu0 0.0
        %648 = vmatpush2.msra.mxu0 0.0
        %649 = vmatprep.subr.mxu0 0.0
        %650 = vmatpush2.msra.mxu0 0.0
        %651 = vmatprep.subr.mxu0 0.0
        %652 = vmatpush2.msra.mxu0 0.0
        %653 = vmatprep.subr.mxu0 0.0
        %654 = vmatpush2.msra.mxu0 0.0
        %655 = vmatprep.subr.mxu0 0.0
        %656 = vmatpush2.msra.mxu0 0.0
        %657 = vmatprep.mubr.f32.mxu0 0.0
        %658 = vmatmul.mubr.f32.gmra.mxu0 %v591
        %v659 = vpop.f32.mrf.mxu0
        %v660 = vadd.f32 %v587, %v659
        %v661 = vpop.f32.mrf.mxu0
        %662 = vdwg.mxu0
        %v663 = vadd.f32 %v660, 1.0
        %665 = vrot.lane.b32.xlu0 %v496, 120
        %v666 = vpop.permute.xlu0 %665
        %668 = vrot.lane.b32.xlu0 %v496, 112
        %v669 = vpop.permute.xlu0 %668
        %671 = vrot.lane.b32.xlu0 %v496, 104
        %v672 = vpop.permute.xlu0 %671
        %v674 = vcombine.low %v496, %v669
        %v675 = vcombine.high %v496, %v669
        %v677 = vunpack.c.l.s4 1983009808
        %v678 = vunpack.c.0.s8 %v677
        %v679 = vlaneseq
        %v680 = vshrl.u32 %v679, 7
        %v681 = vsub.s32 %v678, %v680
        %v682 = vrot.slane %v674, %v681
        %v684 = vunpack.c.l.s4 1983009808
        %v685 = vunpack.c.0.s8 %v684
        %v686 = vlaneseq
        %v687 = vshrl.u32 %v686, 7
        %v688 = vsub.s32 %v685, %v687
        %v689 = vrot.slane %v675, %v688
        %v690 = vcombine.low %v666, %v672
        %v691 = vcombine.high %v666, %v672
        %v693 = vunpack.c.l.s4 1983009808
        %v694 = vunpack.c.0.s8 %v693
        %v695 = vlaneseq
        %v696 = vshrl.u32 %v695, 7
        %v697 = vsub.s32 %v694, %v696
        %v698 = vrot.slane %v690, %v697
        %v700 = vunpack.c.l.s4 1983009808
        %v701 = vunpack.c.0.s8 %v700
        %v702 = vlaneseq
        %v703 = vshrl.u32 %v702, 7
        %v704 = vsub.s32 %v701, %v703
        %v705 = vrot.slane %v691, %v704
        %v706 = vcombine.low %v682, %v698
        %v707 = vcombine.high %v682, %v698
        %v709 = vunpack.c.l.s4 1934713408
        %v710 = vunpack.c.0.s8 %v709
        %v711 = vlaneseq
        %v712 = vshrl.u32 %v711, 7
        %v713 = vsub.s32 %v710, %v712
        %v714 = vrot.slane %v706, %v713
        %v716 = vunpack.c.l.s4 1934713408
        %v717 = vunpack.c.0.s8 %v716
        %v718 = vlaneseq
        %v719 = vshrl.u32 %v718, 7
        %v720 = vsub.s32 %v717, %v719
        %v721 = vrot.slane %v707, %v720
        %v722 = vcombine.low %v689, %v705
        %v723 = vcombine.high %v689, %v705
        %v725 = vunpack.c.l.s4 1934713408
        %v726 = vunpack.c.0.s8 %v725
        %v727 = vlaneseq
        %v728 = vshrl.u32 %v727, 7
        %v729 = vsub.s32 %v726, %v728
        %v730 = vrot.slane %v722, %v729
        %v732 = vunpack.c.l.s4 1934713408
        %v733 = vunpack.c.0.s8 %v732
        %v734 = vlaneseq
        %v735 = vshrl.u32 %v734, 7
        %v736 = vsub.s32 %v733, %v735
        %v737 = vrot.slane %v723, %v736
        %v738 = vcombine.high %v714, 0.0
        %v739 = vcombine.high %v721, 0.0
        %v740 = vcombine.high %v730, 0.0
        %v741 = vcombine.high %v737, 0.0
        %v742 = vcombine.low %v714, %v721
        %v744 = vunpack.c.l.s4 1983009808
        %v745 = vunpack.c.0.s8 %v744
        %v746 = vlaneseq
        %v747 = vshrl.u32 %v746, 7
        %v748 = vsub.s32 %v745, %v747
        %v749 = vrot.slane %v742, %v748
        %v750 = vcombine.low %v738, %v739
        %v752 = vunpack.c.l.s4 1983009808
        %v753 = vunpack.c.0.s8 %v752
        %v754 = vlaneseq
        %v755 = vshrl.u32 %v754, 7
        %v756 = vsub.s32 %v753, %v755
        %v757 = vrot.slane %v750, %v756
        %v758 = vcombine.low %v730, %v737
        %v760 = vunpack.c.l.s4 1983009808
        %v761 = vunpack.c.0.s8 %v760
        %v762 = vlaneseq
        %v763 = vshrl.u32 %v762, 7
        %v764 = vsub.s32 %v761, %v763
        %v765 = vrot.slane %v758, %v764
        %v766 = vcombine.low %v740, %v741
        %v768 = vunpack.c.l.s4 1983009808
        %v769 = vunpack.c.0.s8 %v768
        %v770 = vlaneseq
        %v771 = vshrl.u32 %v770, 7
        %v772 = vsub.s32 %v769, %v771
        %v773 = vrot.slane %v766, %v772
        %v774 = vcombine.low %v749, %v757
        %v775 = vcombine.high %v749, %v757
        %v777 = vunpack.c.l.s4 1934713408
        %v778 = vunpack.c.0.s8 %v777
        %v779 = vlaneseq
        %v780 = vshrl.u32 %v779, 7
        %v781 = vsub.s32 %v778, %v780
        %v782 = vrot.slane %v774, %v781
        %v784 = vunpack.c.l.s4 1934713408
        %v785 = vunpack.c.0.s8 %v784
        %v786 = vlaneseq
        %v787 = vshrl.u32 %v786, 7
        %v788 = vsub.s32 %v785, %v787
        %v789 = vrot.slane %v775, %v788
        %v790 = vcombine.low %v765, %v773
        %v791 = vcombine.high %v765, %v773
        %v793 = vunpack.c.l.s4 1934713408
        %v794 = vunpack.c.0.s8 %v793
        %v795 = vlaneseq
        %v796 = vshrl.u32 %v795, 7
        %v797 = vsub.s32 %v794, %v796
        %v798 = vrot.slane %v790, %v797
        %v800 = vunpack.c.l.s4 1934713408
        %v801 = vunpack.c.0.s8 %v800
        %v802 = vlaneseq
        %v803 = vshrl.u32 %v802, 7
        %v804 = vsub.s32 %v801, %v803
        %v805 = vrot.slane %v791, %v804
        %v806 = vcombine.low %v782, %v798
        %v807 = vcombine.high %v782, %v798
        %v808 = vcombine.low %v789, %v805
        %v809 = vcombine.high %v789, %v805
        %810 = vrot.lane.b32.xlu0 %v496, 96
        %v811 = vpop.permute.xlu0 %810
        %812 = vrot.lane.b32.xlu0 %v666, 96
        %v813 = vpop.permute.xlu0 %812
        %814 = vrot.lane.b32.xlu0 %v669, 96
        %v815 = vpop.permute.xlu0 %814
        %816 = vrot.lane.b32.xlu0 %v672, 96
        %v817 = vpop.permute.xlu0 %816
        %v822 = vcombine.low %v811, %v815
        %v823 = vcombine.high %v811, %v815
        %v825 = vunpack.c.l.s4 1983009808
        %v826 = vunpack.c.0.s8 %v825
        %v827 = vlaneseq
        %v828 = vshrl.u32 %v827, 7
        %v829 = vsub.s32 %v826, %v828
        %v830 = vrot.slane %v822, %v829
        %v832 = vunpack.c.l.s4 1983009808
        %v833 = vunpack.c.0.s8 %v832
        %v834 = vlaneseq
        %v835 = vshrl.u32 %v834, 7
        %v836 = vsub.s32 %v833, %v835
        %v837 = vrot.slane %v823, %v836
        %v838 = vcombine.low %v813, %v817
        %v839 = vcombine.high %v813, %v817
        %v841 = vunpack.c.l.s4 1983009808
        %v842 = vunpack.c.0.s8 %v841
        %v843 = vlaneseq
        %v844 = vshrl.u32 %v843, 7
        %v845 = vsub.s32 %v842, %v844
        %v846 = vrot.slane %v838, %v845
        %v848 = vunpack.c.l.s4 1983009808
        %v849 = vunpack.c.0.s8 %v848
        %v850 = vlaneseq
        %v851 = vshrl.u32 %v850, 7
        %v852 = vsub.s32 %v849, %v851
        %v853 = vrot.slane %v839, %v852
        %v854 = vcombine.low %v830, %v846
        %v855 = vcombine.high %v830, %v846
        %v857 = vunpack.c.l.s4 1934713408
        %v858 = vunpack.c.0.s8 %v857
        %v859 = vlaneseq
        %v860 = vshrl.u32 %v859, 7
        %v861 = vsub.s32 %v858, %v860
        %v862 = vrot.slane %v854, %v861
        %v864 = vunpack.c.l.s4 1934713408
        %v865 = vunpack.c.0.s8 %v864
        %v866 = vlaneseq
        %v867 = vshrl.u32 %v866, 7
        %v868 = vsub.s32 %v865, %v867
        %v869 = vrot.slane %v855, %v868
        %v870 = vcombine.low %v837, %v853
        %v871 = vcombine.high %v837, %v853
        %v873 = vunpack.c.l.s4 1934713408
        %v874 = vunpack.c.0.s8 %v873
        %v875 = vlaneseq
        %v876 = vshrl.u32 %v875, 7
        %v877 = vsub.s32 %v874, %v876
        %v878 = vrot.slane %v870, %v877
        %v880 = vunpack.c.l.s4 1934713408
        %v881 = vunpack.c.0.s8 %v880
        %v882 = vlaneseq
        %v883 = vshrl.u32 %v882, 7
        %v884 = vsub.s32 %v881, %v883
        %v885 = vrot.slane %v871, %v884
        %v886 = vcombine.high %v862, 0.0
        %v887 = vcombine.high %v869, 0.0
        %v888 = vcombine.high %v878, 0.0
        %v889 = vcombine.high %v885, 0.0
        %v890 = vcombine.low %v862, %v869
        %v892 = vunpack.c.l.s4 1983009808
        %v893 = vunpack.c.0.s8 %v892
        %v894 = vlaneseq
        %v895 = vshrl.u32 %v894, 7
        %v896 = vsub.s32 %v893, %v895
        %v897 = vrot.slane %v890, %v896
        %v898 = vcombine.low %v886, %v887
        %v900 = vunpack.c.l.s4 1983009808
        %v901 = vunpack.c.0.s8 %v900
        %v902 = vlaneseq
        %v903 = vshrl.u32 %v902, 7
        %v904 = vsub.s32 %v901, %v903
        %v905 = vrot.slane %v898, %v904
        %v906 = vcombine.low %v878, %v885
        %v908 = vunpack.c.l.s4 1983009808
        %v909 = vunpack.c.0.s8 %v908
        %v910 = vlaneseq
        %v911 = vshrl.u32 %v910, 7
        %v912 = vsub.s32 %v909, %v911
        %v913 = vrot.slane %v906, %v912
        %v914 = vcombine.low %v888, %v889
        %v916 = vunpack.c.l.s4 1983009808
        %v917 = vunpack.c.0.s8 %v916
        %v918 = vlaneseq
        %v919 = vshrl.u32 %v918, 7
        %v920 = vsub.s32 %v917, %v919
        %v921 = vrot.slane %v914, %v920
        %v922 = vcombine.low %v897, %v905
        %v923 = vcombine.high %v897, %v905
        %v925 = vunpack.c.l.s4 1934713408
        %v926 = vunpack.c.0.s8 %v925
        %v927 = vlaneseq
        %v928 = vshrl.u32 %v927, 7
        %v929 = vsub.s32 %v926, %v928
        %v930 = vrot.slane %v922, %v929
        %v932 = vunpack.c.l.s4 1934713408
        %v933 = vunpack.c.0.s8 %v932
        %v934 = vlaneseq
        %v935 = vshrl.u32 %v934, 7
        %v936 = vsub.s32 %v933, %v935
        %v937 = vrot.slane %v923, %v936
        %v938 = vcombine.low %v913, %v921
        %v939 = vcombine.high %v913, %v921
        %v941 = vunpack.c.l.s4 1934713408
        %v942 = vunpack.c.0.s8 %v941
        %v943 = vlaneseq
        %v944 = vshrl.u32 %v943, 7
        %v945 = vsub.s32 %v942, %v944
        %v946 = vrot.slane %v938, %v945
        %v948 = vunpack.c.l.s4 1934713408
        %v949 = vunpack.c.0.s8 %v948
        %v950 = vlaneseq
        %v951 = vshrl.u32 %v950, 7
        %v952 = vsub.s32 %v949, %v951
        %v953 = vrot.slane %v939, %v952
        %v954 = vcombine.low %v930, %v946
        %v955 = vcombine.high %v930, %v946
        %v956 = vcombine.low %v937, %v953
        %v957 = vcombine.high %v937, %v953
        %958 = vrot.lane.b32.xlu0 %v496, 64
        %v959 = vpop.permute.xlu0 %958
        %960 = vrot.lane.b32.xlu0 %v666, 64
        %v961 = vpop.permute.xlu0 %960
        %962 = vrot.lane.b32.xlu0 %v669, 64
        %v963 = vpop.permute.xlu0 %962
        %964 = vrot.lane.b32.xlu0 %v672, 64
        %v965 = vpop.permute.xlu0 %964
        %v970 = vcombine.low %v959, %v963
        %v971 = vcombine.high %v959, %v963
        %v973 = vunpack.c.l.s4 1983009808
        %v974 = vunpack.c.0.s8 %v973
        %v975 = vlaneseq
        %v976 = vshrl.u32 %v975, 7
        %v977 = vsub.s32 %v974, %v976
        %v978 = vrot.slane %v970, %v977
        %v980 = vunpack.c.l.s4 1983009808
        %v981 = vunpack.c.0.s8 %v980
        %v982 = vlaneseq
        %v983 = vshrl.u32 %v982, 7
        %v984 = vsub.s32 %v981, %v983
        %v985 = vrot.slane %v971, %v984
        %v986 = vcombine.low %v961, %v965
        %v987 = vcombine.high %v961, %v965
        %v989 = vunpack.c.l.s4 1983009808
        %v990 = vunpack.c.0.s8 %v989
        %v991 = vlaneseq
        %v992 = vshrl.u32 %v991, 7
        %v993 = vsub.s32 %v990, %v992
        %v994 = vrot.slane %v986, %v993
        %v996 = vunpack.c.l.s4 1983009808
        %v997 = vunpack.c.0.s8 %v996
        %v998 = vlaneseq
        %v999 = vshrl.u32 %v998, 7
        %v1000 = vsub.s32 %v997, %v999
        %v1001 = vrot.slane %v987, %v1000
        %v1002 = vcombine.low %v978, %v994
        %v1003 = vcombine.high %v978, %v994
        %v1005 = vunpack.c.l.s4 1934713408
        %v1006 = vunpack.c.0.s8 %v1005
        %v1007 = vlaneseq
        %v1008 = vshrl.u32 %v1007, 7
        %v1009 = vsub.s32 %v1006, %v1008
        %v1010 = vrot.slane %v1002, %v1009
        %v1012 = vunpack.c.l.s4 1934713408
        %v1013 = vunpack.c.0.s8 %v1012
        %v1014 = vlaneseq
        %v1015 = vshrl.u32 %v1014, 7
        %v1016 = vsub.s32 %v1013, %v1015
        %v1017 = vrot.slane %v1003, %v1016
        %v1018 = vcombine.low %v985, %v1001
        %v1019 = vcombine.high %v985, %v1001
        %v1021 = vunpack.c.l.s4 1934713408
        %v1022 = vunpack.c.0.s8 %v1021
        %v1023 = vlaneseq
        %v1024 = vshrl.u32 %v1023, 7
        %v1025 = vsub.s32 %v1022, %v1024
        %v1026 = vrot.slane %v1018, %v1025
        %v1028 = vunpack.c.l.s4 1934713408
        %v1029 = vunpack.c.0.s8 %v1028
        %v1030 = vlaneseq
        %v1031 = vshrl.u32 %v1030, 7
        %v1032 = vsub.s32 %v1029, %v1031
        %v1033 = vrot.slane %v1019, %v1032
        %v1034 = vcombine.high %v1010, 0.0
        %v1035 = vcombine.high %v1017, 0.0
        %v1036 = vcombine.high %v1026, 0.0
        %v1037 = vcombine.high %v1033, 0.0
        %v1038 = vcombine.low %v1010, %v1017
        %v1040 = vunpack.c.l.s4 1983009808
        %v1041 = vunpack.c.0.s8 %v1040
        %v1042 = vlaneseq
        %v1043 = vshrl.u32 %v1042, 7
        %v1044 = vsub.s32 %v1041, %v1043
        %v1045 = vrot.slane %v1038, %v1044
        %v1046 = vcombine.low %v1034, %v1035
        %v1048 = vunpack.c.l.s4 1983009808
        %v1049 = vunpack.c.0.s8 %v1048
        %v1050 = vlaneseq
        %v1051 = vshrl.u32 %v1050, 7
        %v1052 = vsub.s32 %v1049, %v1051
        %v1053 = vrot.slane %v1046, %v1052
        %v1054 = vcombine.low %v1026, %v1033
        %v1056 = vunpack.c.l.s4 1983009808
        %v1057 = vunpack.c.0.s8 %v1056
        %v1058 = vlaneseq
        %v1059 = vshrl.u32 %v1058, 7
        %v1060 = vsub.s32 %v1057, %v1059
        %v1061 = vrot.slane %v1054, %v1060
        %v1062 = vcombine.low %v1036, %v1037
        %v1064 = vunpack.c.l.s4 1983009808
        %v1065 = vunpack.c.0.s8 %v1064
        %v1066 = vlaneseq
        %v1067 = vshrl.u32 %v1066, 7
        %v1068 = vsub.s32 %v1065, %v1067
        %v1069 = vrot.slane %v1062, %v1068
        %v1070 = vcombine.low %v1045, %v1053
        %v1071 = vcombine.high %v1045, %v1053
        %v1073 = vunpack.c.l.s4 1934713408
        %v1074 = vunpack.c.0.s8 %v1073
        %v1075 = vlaneseq
        %v1076 = vshrl.u32 %v1075, 7
        %v1077 = vsub.s32 %v1074, %v1076
        %v1078 = vrot.slane %v1070, %v1077
        %v1080 = vunpack.c.l.s4 1934713408
        %v1081 = vunpack.c.0.s8 %v1080
        %v1082 = vlaneseq
        %v1083 = vshrl.u32 %v1082, 7
        %v1084 = vsub.s32 %v1081, %v1083
        %v1085 = vrot.slane %v1071, %v1084
        %v1086 = vcombine.low %v1061, %v1069
        %v1087 = vcombine.high %v1061, %v1069
        %v1089 = vunpack.c.l.s4 1934713408
        %v1090 = vunpack.c.0.s8 %v1089
        %v1091 = vlaneseq
        %v1092 = vshrl.u32 %v1091, 7
        %v1093 = vsub.s32 %v1090, %v1092
        %v1094 = vrot.slane %v1086, %v1093
        %v1096 = vunpack.c.l.s4 1934713408
        %v1097 = vunpack.c.0.s8 %v1096
        %v1098 = vlaneseq
        %v1099 = vshrl.u32 %v1098, 7
        %v1100 = vsub.s32 %v1097, %v1099
        %v1101 = vrot.slane %v1087, %v1100
        %v1102 = vcombine.low %v1078, %v1094
        %v1103 = vcombine.high %v1078, %v1094
        %v1104 = vcombine.low %v1085, %v1101
        %v1105 = vcombine.high %v1085, %v1101
        %v1107 = vsel %vm589, %v806, 0
        %v1110 = vsel %vm589, %v954, 0
        %1112 = vmatprep.subr.mxu0 0.0
        %1113 = vmatpush1.xpose.msra.mxu0 0.0
        %1114 = vmatprep.subr.mxu0 0.0
        %1115 = vmatpush1.xpose.msra.mxu0 0.0
        %1116 = vmatprep.subr.mxu0 0.0
        %1117 = vmatpush1.xpose.msra.mxu0 0.0
        %1118 = vmatprep.subr.mxu0 0.0
        %1119 = vmatpush1.xpose.msra.mxu0 0.0
        %1120 = vmatprep.subr.mxu0 0.0
        %1121 = vmatpush1.xpose.msra.mxu0 0.0
        %1122 = vmatprep.subr.mxu0 0.0
        %1123 = vmatpush1.xpose.msra.mxu0 0.0
        %1124 = vmatprep.subr.mxu0 0.0
        %1125 = vmatpush1.xpose.msra.mxu0 0.0
        %1126 = vmatprep.subr.mxu0 0.0
        %1127 = vmatpush1.xpose.msra.mxu0 0.0
        %1128 = vmatprep.subr.mxu0 0.0
        %1129 = vmatpush1.xpose.msra.mxu0 0.0
        %1130 = vmatprep.subr.mxu0 0.0
        %1131 = vmatpush1.xpose.msra.mxu0 0.0
        %1132 = vmatprep.subr.mxu0 0.0
        %1133 = vmatpush1.xpose.msra.mxu0 0.0
        %1134 = vmatprep.subr.mxu0 0.0
        %1135 = vmatpush1.xpose.msra.mxu0 0.0
        %1136 = vmatprep.subr.mxu0 0.0
        %1137 = vmatpush1.xpose.msra.mxu0 0.0
        %1138 = vmatprep.subr.mxu0 0.0
        %1139 = vmatpush1.xpose.msra.mxu0 0.0
        %1140 = vmatprep.subr.mxu0 0.0
        %1141 = vmatpush1.xpose.msra.mxu0 0.0
        %1142 = vmatprep.subr.mxu0 0.0
        %1143 = vmatpush1.xpose.msra.mxu0 %v1110
        %1144 = vmatprep.subr.mxu0 0.0
        %1145 = vmatpush2.xpose.msra.mxu0 0.0
        %1146 = vmatprep.subr.mxu0 0.0
        %1147 = vmatpush2.xpose.msra.mxu0 0.0
        %1148 = vmatprep.subr.mxu0 0.0
        %1149 = vmatpush2.xpose.msra.mxu0 0.0
        %1150 = vmatprep.subr.mxu0 0.0
        %1151 = vmatpush2.xpose.msra.mxu0 0.0
        %1152 = vmatprep.subr.mxu0 0.0
        %1153 = vmatpush2.xpose.msra.mxu0 0.0
        %1154 = vmatprep.subr.mxu0 0.0
        %1155 = vmatpush2.xpose.msra.mxu0 0.0
        %1156 = vmatprep.subr.mxu0 0.0
        %1157 = vmatpush2.xpose.msra.mxu0 0.0
        %1158 = vmatprep.subr.mxu0 0.0
        %1159 = vmatpush2.xpose.msra.mxu0 0.0
        %1160 = vmatprep.subr.mxu0 0.0
        %1161 = vmatpush2.xpose.msra.mxu0 0.0
        %1162 = vmatprep.subr.mxu0 0.0
        %1163 = vmatpush2.xpose.msra.mxu0 0.0
        %1164 = vmatprep.subr.mxu0 0.0
        %1165 = vmatpush2.xpose.msra.mxu0 0.0
        %1166 = vmatprep.subr.mxu0 0.0
        %1167 = vmatpush2.xpose.msra.mxu0 0.0
        %1168 = vmatprep.subr.mxu0 0.0
        %1169 = vmatpush2.xpose.msra.mxu0 0.0
        %1170 = vmatprep.subr.mxu0 0.0
        %1171 = vmatpush2.xpose.msra.mxu0 0.0
        %1172 = vmatprep.subr.mxu0 0.0
        %1173 = vmatpush2.xpose.msra.mxu0 0.0
        %1174 = vmatprep.subr.mxu0 0.0
        %1175 = vmatpush2.xpose.msra.mxu0 0.0
        %1176 = vmatprep.mubr.f32.mxu0 0.0
        %1177 = vmatmul.mubr.f32.gmra.mxu0 %v1107
        %v1178 = vpop.f32.mrf.mxu0
        %v1179 = vadd.f32 0.0, %v1178
        %v1180 = vpop.f32.mrf.mxu0
        %1181 = vdwg.mxu0
        %v1183 = vsel %vm589, %v807, 0
        %v1186 = vsel %vm589, %v955, 0
        %1188 = vmatprep.subr.mxu0 0.0
        %1189 = vmatpush1.xpose.msra.mxu0 0.0
        %1190 = vmatprep.subr.mxu0 0.0
        %1191 = vmatpush1.xpose.msra.mxu0 0.0
        %1192 = vmatprep.subr.mxu0 0.0
        %1193 = vmatpush1.xpose.msra.mxu0 0.0
        %1194 = vmatprep.subr.mxu0 0.0
        %1195 = vmatpush1.xpose.msra.mxu0 0.0
        %1196 = vmatprep.subr.mxu0 0.0
        %1197 = vmatpush1.xpose.msra.mxu0 0.0
        %1198 = vmatprep.subr.mxu0 0.0
        %1199 = vmatpush1.xpose.msra.mxu0 0.0
        %1200 = vmatprep.subr.mxu0 0.0
        %1201 = vmatpush1.xpose.msra.mxu0 0.0
        %1202 = vmatprep.subr.mxu0 0.0
        %1203 = vmatpush1.xpose.msra.mxu0 0.0
        %1204 = vmatprep.subr.mxu0 0.0
        %1205 = vmatpush1.xpose.msra.mxu0 0.0
        %1206 = vmatprep.subr.mxu0 0.0
        %1207 = vmatpush1.xpose.msra.mxu0 0.0
        %1208 = vmatprep.subr.mxu0 0.0
        %1209 = vmatpush1.xpose.msra.mxu0 0.0
        %1210 = vmatprep.subr.mxu0 0.0
        %1211 = vmatpush1.xpose.msra.mxu0 0.0
        %1212 = vmatprep.subr.mxu0 0.0
        %1213 = vmatpush1.xpose.msra.mxu0 0.0
        %1214 = vmatprep.subr.mxu0 0.0
        %1215 = vmatpush1.xpose.msra.mxu0 0.0
        %1216 = vmatprep.subr.mxu0 0.0
        %1217 = vmatpush1.xpose.msra.mxu0 0.0
        %1218 = vmatprep.subr.mxu0 0.0
        %1219 = vmatpush1.xpose.msra.mxu0 %v1186
        %1220 = vmatprep.subr.mxu0 0.0
        %1221 = vmatpush2.xpose.msra.mxu0 0.0
        %1222 = vmatprep.subr.mxu0 0.0
        %1223 = vmatpush2.xpose.msra.mxu0 0.0
        %1224 = vmatprep.subr.mxu0 0.0
        %1225 = vmatpush2.xpose.msra.mxu0 0.0
        %1226 = vmatprep.subr.mxu0 0.0
        %1227 = vmatpush2.xpose.msra.mxu0 0.0
        %1228 = vmatprep.subr.mxu0 0.0
        %1229 = vmatpush2.xpose.msra.mxu0 0.0
        %1230 = vmatprep.subr.mxu0 0.0
        %1231 = vmatpush2.xpose.msra.mxu0 0.0
        %1232 = vmatprep.subr.mxu0 0.0
        %1233 = vmatpush2.xpose.msra.mxu0 0.0
        %1234 = vmatprep.subr.mxu0 0.0
        %1235 = vmatpush2.xpose.msra.mxu0 0.0
        %1236 = vmatprep.subr.mxu0 0.0
        %1237 = vmatpush2.xpose.msra.mxu0 0.0
        %1238 = vmatprep.subr.mxu0 0.0
        %1239 = vmatpush2.xpose.msra.mxu0 0.0
        %1240 = vmatprep.subr.mxu0 0.0
        %1241 = vmatpush2.xpose.msra.mxu0 0.0
        %1242 = vmatprep.subr.mxu0 0.0
        %1243 = vmatpush2.xpose.msra.mxu0 0.0
        %1244 = vmatprep.subr.mxu0 0.0
        %1245 = vmatpush2.xpose.msra.mxu0 0.0
        %1246 = vmatprep.subr.mxu0 0.0
        %1247 = vmatpush2.xpose.msra.mxu0 0.0
        %1248 = vmatprep.subr.mxu0 0.0
        %1249 = vmatpush2.xpose.msra.mxu0 0.0
        %1250 = vmatprep.subr.mxu0 0.0
        %1251 = vmatpush2.xpose.msra.mxu0 0.0
        %1252 = vmatprep.mubr.f32.mxu0 0.0
        %1253 = vmatmul.mubr.f32.gmra.mxu0 %v1183
        %v1254 = vpop.f32.mrf.mxu0
        %v1255 = vadd.f32 0.0, %v1254
        %v1256 = vpop.f32.mrf.mxu0
        %1257 = vdwg.mxu0
        %v1259 = vsel %vm589, %v808, 0
        %v1262 = vsel %vm589, %v956, 0
        %1264 = vmatprep.subr.mxu0 0.0
        %1265 = vmatpush1.xpose.msra.mxu0 0.0
        %1266 = vmatprep.subr.mxu0 0.0
        %1267 = vmatpush1.xpose.msra.mxu0 0.0
        %1268 = vmatprep.subr.mxu0 0.0
        %1269 = vmatpush1.xpose.msra.mxu0 0.0
        %1270 = vmatprep.subr.mxu0 0.0
        %1271 = vmatpush1.xpose.msra.mxu0 0.0
        %1272 = vmatprep.subr.mxu0 0.0
        %1273 = vmatpush1.xpose.msra.mxu0 0.0
        %1274 = vmatprep.subr.mxu0 0.0
        %1275 = vmatpush1.xpose.msra.mxu0 0.0
        %1276 = vmatprep.subr.mxu0 0.0
        %1277 = vmatpush1.xpose.msra.mxu0 0.0
        %1278 = vmatprep.subr.mxu0 0.0
        %1279 = vmatpush1.xpose.msra.mxu0 0.0
        %1280 = vmatprep.subr.mxu0 0.0
        %1281 = vmatpush1.xpose.msra.mxu0 0.0
        %1282 = vmatprep.subr.mxu0 0.0
        %1283 = vmatpush1.xpose.msra.mxu0 0.0
        %1284 = vmatprep.subr.mxu0 0.0
        %1285 = vmatpush1.xpose.msra.mxu0 0.0
        %1286 = vmatprep.subr.mxu0 0.0
        %1287 = vmatpush1.xpose.msra.mxu0 0.0
        %1288 = vmatprep.subr.mxu0 0.0
        %1289 = vmatpush1.xpose.msra.mxu0 0.0
        %1290 = vmatprep.subr.mxu0 0.0
        %1291 = vmatpush1.xpose.msra.mxu0 0.0
        %1292 = vmatprep.subr.mxu0 0.0
        %1293 = vmatpush1.xpose.msra.mxu0 0.0
        %1294 = vmatprep.subr.mxu0 0.0
        %1295 = vmatpush1.xpose.msra.mxu0 %v1262
        %1296 = vmatprep.subr.mxu0 0.0
        %1297 = vmatpush2.xpose.msra.mxu0 0.0
        %1298 = vmatprep.subr.mxu0 0.0
        %1299 = vmatpush2.xpose.msra.mxu0 0.0
        %1300 = vmatprep.subr.mxu0 0.0
        %1301 = vmatpush2.xpose.msra.mxu0 0.0
        %1302 = vmatprep.subr.mxu0 0.0
        %1303 = vmatpush2.xpose.msra.mxu0 0.0
        %1304 = vmatprep.subr.mxu0 0.0
        %1305 = vmatpush2.xpose.msra.mxu0 0.0
        %1306 = vmatprep.subr.mxu0 0.0
        %1307 = vmatpush2.xpose.msra.mxu0 0.0
        %1308 = vmatprep.subr.mxu0 0.0
        %1309 = vmatpush2.xpose.msra.mxu0 0.0
        %1310 = vmatprep.subr.mxu0 0.0
        %1311 = vmatpush2.xpose.msra.mxu0 0.0
        %1312 = vmatprep.subr.mxu0 0.0
        %1313 = vmatpush2.xpose.msra.mxu0 0.0
        %1314 = vmatprep.subr.mxu0 0.0
        %1315 = vmatpush2.xpose.msra.mxu0 0.0
        %1316 = vmatprep.subr.mxu0 0.0
        %1317 = vmatpush2.xpose.msra.mxu0 0.0
        %1318 = vmatprep.subr.mxu0 0.0
        %1319 = vmatpush2.xpose.msra.mxu0 0.0
        %1320 = vmatprep.subr.mxu0 0.0
        %1321 = vmatpush2.xpose.msra.mxu0 0.0
        %1322 = vmatprep.subr.mxu0 0.0
        %1323 = vmatpush2.xpose.msra.mxu0 0.0
        %1324 = vmatprep.subr.mxu0 0.0
        %1325 = vmatpush2.xpose.msra.mxu0 0.0
        %1326 = vmatprep.subr.mxu0 0.0
        %1327 = vmatpush2.xpose.msra.mxu0 0.0
        %1328 = vmatprep.mubr.f32.mxu0 0.0
        %1329 = vmatmul.mubr.f32.gmra.mxu0 %v1259
        %v1330 = vpop.f32.mrf.mxu0
        %v1331 = vadd.f32 0.0, %v1330
        %v1332 = vpop.f32.mrf.mxu0
        %1333 = vdwg.mxu0
        %v1335 = vsel %vm589, %v809, 0
        %v1338 = vsel %vm589, %v957, 0
        %1340 = vmatprep.subr.mxu0 0.0
        %1341 = vmatpush1.xpose.msra.mxu0 0.0
        %1342 = vmatprep.subr.mxu0 0.0
        %1343 = vmatpush1.xpose.msra.mxu0 0.0
        %1344 = vmatprep.subr.mxu0 0.0
        %1345 = vmatpush1.xpose.msra.mxu0 0.0
        %1346 = vmatprep.subr.mxu0 0.0
        %1347 = vmatpush1.xpose.msra.mxu0 0.0
        %1348 = vmatprep.subr.mxu0 0.0
        %1349 = vmatpush1.xpose.msra.mxu0 0.0
        %1350 = vmatprep.subr.mxu0 0.0
        %1351 = vmatpush1.xpose.msra.mxu0 0.0
        %1352 = vmatprep.subr.mxu0 0.0
        %1353 = vmatpush1.xpose.msra.mxu0 0.0
        %1354 = vmatprep.subr.mxu0 0.0
        %1355 = vmatpush1.xpose.msra.mxu0 0.0
        %1356 = vmatprep.subr.mxu0 0.0
        %1357 = vmatpush1.xpose.msra.mxu0 0.0
        %1358 = vmatprep.subr.mxu0 0.0
        %1359 = vmatpush1.xpose.msra.mxu0 0.0
        %1360 = vmatprep.subr.mxu0 0.0
        %1361 = vmatpush1.xpose.msra.mxu0 0.0
        %1362 = vmatprep.subr.mxu0 0.0
        %1363 = vmatpush1.xpose.msra.mxu0 0.0
        %1364 = vmatprep.subr.mxu0 0.0
        %1365 = vmatpush1.xpose.msra.mxu0 0.0
        %1366 = vmatprep.subr.mxu0 0.0
        %1367 = vmatpush1.xpose.msra.mxu0 0.0
        %1368 = vmatprep.subr.mxu0 0.0
        %1369 = vmatpush1.xpose.msra.mxu0 0.0
        %1370 = vmatprep.subr.mxu0 0.0
        %1371 = vmatpush1.xpose.msra.mxu0 %v1338
        %1372 = vmatprep.subr.mxu0 0.0
        %1373 = vmatpush2.xpose.msra.mxu0 0.0
        %1374 = vmatprep.subr.mxu0 0.0
        %1375 = vmatpush2.xpose.msra.mxu0 0.0
        %1376 = vmatprep.subr.mxu0 0.0
        %1377 = vmatpush2.xpose.msra.mxu0 0.0
        %1378 = vmatprep.subr.mxu0 0.0
        %1379 = vmatpush2.xpose.msra.mxu0 0.0
        %1380 = vmatprep.subr.mxu0 0.0
        %1381 = vmatpush2.xpose.msra.mxu0 0.0
        %1382 = vmatprep.subr.mxu0 0.0
        %1383 = vmatpush2.xpose.msra.mxu0 0.0
        %1384 = vmatprep.subr.mxu0 0.0
        %1385 = vmatpush2.xpose.msra.mxu0 0.0
        %1386 = vmatprep.subr.mxu0 0.0
        %1387 = vmatpush2.xpose.msra.mxu0 0.0
        %1388 = vmatprep.subr.mxu0 0.0
        %1389 = vmatpush2.xpose.msra.mxu0 0.0
        %1390 = vmatprep.subr.mxu0 0.0
        %1391 = vmatpush2.xpose.msra.mxu0 0.0
        %1392 = vmatprep.subr.mxu0 0.0
        %1393 = vmatpush2.xpose.msra.mxu0 0.0
        %1394 = vmatprep.subr.mxu0 0.0
        %1395 = vmatpush2.xpose.msra.mxu0 0.0
        %1396 = vmatprep.subr.mxu0 0.0
        %1397 = vmatpush2.xpose.msra.mxu0 0.0
        %1398 = vmatprep.subr.mxu0 0.0
        %1399 = vmatpush2.xpose.msra.mxu0 0.0
        %1400 = vmatprep.subr.mxu0 0.0
        %1401 = vmatpush2.xpose.msra.mxu0 0.0
        %1402 = vmatprep.subr.mxu0 0.0
        %1403 = vmatpush2.xpose.msra.mxu0 0.0
        %1404 = vmatprep.mubr.f32.mxu0 0.0
        %1405 = vmatmul.mubr.f32.gmra.mxu0 %v1335
        %v1406 = vpop.f32.mrf.mxu0
        %v1407 = vadd.f32 0.0, %v1406
        %v1408 = vpop.f32.mrf.mxu0
        %1409 = vdwg.mxu0
        %v1410 = vsel %vm589, %v1179, -inf
        %1411 = vmax.xlane.f32.xlu0 %v1410
        %v1412 = vpop.xlane.xlu0 %1411
        %v1413 = vsel %vm589, %v1255, -inf
        %1414 = vmax.xlane.f32.xlu0 %v1413
        %v1415 = vpop.xlane.xlu0 %1414
        %v1416 = vsel %vm589, %v1331, -inf
        %1417 = vmax.xlane.f32.xlu0 %v1416
        %v1418 = vpop.xlane.xlu0 %1417
        %v1419 = vsel %vm589, %v1407, -inf
        %1420 = vmax.xlane.f32.xlu0 %v1419
        %v1421 = vpop.xlane.xlu0 %1420
        %v1422 = vsub.f32 %v1179, %v1412
        %v1423 = vsub.f32 %v1255, %v1415
        %v1424 = vsub.f32 %v1331, %v1418
        %v1425 = vsub.f32 %v1407, %v1421
        %v1426 = vmul.f32 %v1422, 1.442695
        %v1427 = vpow.pop %v1426
        %v1428 = vmul.f32 %v1423, 1.442695
        %v1429 = vpow.pop %v1428
        %v1430 = vmul.f32 %v1424, 1.442695
        %v1431 = vpow.pop %v1430
        %v1432 = vmul.f32 %v1425, 1.442695
        %v1433 = vpow.pop %v1432
        %v1434 = vsel %vm589, %v1427, 0.0
        %1435 = vadd.xlane.f32.xlu0 %v1434
        %v1436 = vpop.xlane.xlu0 %1435
        %v1437 = vsel %vm589, %v1429, 0.0
        %1438 = vadd.xlane.f32.xlu0 %v1437
        %v1439 = vpop.xlane.xlu0 %1438
        %v1440 = vsel %vm589, %v1431, 0.0
        %1441 = vadd.xlane.f32.xlu0 %v1440
        %v1442 = vpop.xlane.xlu0 %1441
        %v1443 = vsel %vm589, %v1433, 0.0
        %1444 = vadd.xlane.f32.xlu0 %v1443
        %v1445 = vpop.xlane.xlu0 %1444
        %v1446 = vrcp.pop %v1436
        %v1447 = vmul.f32 %v1427, %v1446
        %v1448 = vrcp.pop %v1439
        %v1449 = vmul.f32 %v1429, %v1448
        %v1450 = vrcp.pop %v1442
        %v1451 = vmul.f32 %v1431, %v1450
        %v1452 = vrcp.pop %v1445
        %v1453 = vmul.f32 %v1433, %v1452
        %1454 = vst.msk [vmem:[%s412] sm:$0xff] %vm589, %v1447
        %1455 = vst.msk [vmem:[%s412 + $0x8] sm:$0xff] %vm589, %v1449
        %1456 = vst.msk [vmem:[%s412 + $0x10] sm:$0xff] %vm589, %v1451
        %1457 = vst.msk [vmem:[%s412 + $0x18] sm:$0xff] %vm589, %v1453
        %v1459 = vsel %vm589, %v1447, 0
        %1461 = vmatprep.subr.mxu0 0.0
        %1462 = vmatpush1.msra.mxu0 0.0
        %1463 = vmatprep.subr.mxu0 0.0
        %1464 = vmatpush1.msra.mxu0 0.0
        %1465 = vmatprep.subr.mxu0 0.0
        %1466 = vmatpush1.msra.mxu0 0.0
        %1467 = vmatprep.subr.mxu0 0.0
        %1468 = vmatpush1.msra.mxu0 0.0
        %1469 = vmatprep.subr.mxu0 0.0
        %1470 = vmatpush1.msra.mxu0 0.0
        %1471 = vmatprep.subr.mxu0 0.0
        %1472 = vmatpush1.msra.mxu0 0.0
        %1473 = vmatprep.subr.mxu0 0.0
        %1474 = vmatpush1.msra.mxu0 0.0
        %1475 = vmatprep.subr.mxu0 0.0
        %1476 = vmatpush1.msra.mxu0 0.0
        %1477 = vmatprep.subr.mxu0 0.0
        %1478 = vmatpush1.msra.mxu0 0.0
        %1479 = vmatprep.subr.mxu0 0.0
        %1480 = vmatpush1.msra.mxu0 0.0
        %1481 = vmatprep.subr.mxu0 0.0
        %1482 = vmatpush1.msra.mxu0 0.0
        %1483 = vmatprep.subr.mxu0 0.0
        %1484 = vmatpush1.msra.mxu0 0.0
        %1485 = vmatprep.subr.mxu0 0.0
        %1486 = vmatpush1.msra.mxu0 0.0
        %1487 = vmatprep.subr.mxu0 0.0
        %1488 = vmatpush1.msra.mxu0 0.0
        %1489 = vmatprep.subr.mxu0 0.0
        %1490 = vmatpush1.msra.mxu0 0.0
        %1491 = vmatprep.subr.mxu0 0.0
        %1492 = vmatpush1.msra.mxu0 %v1102
        %1493 = vmatprep.subr.mxu0 0.0
        %1494 = vmatpush2.msra.mxu0 0.0
        %1495 = vmatprep.subr.mxu0 0.0
        %1496 = vmatpush2.msra.mxu0 0.0
        %1497 = vmatprep.subr.mxu0 0.0
        %1498 = vmatpush2.msra.mxu0 0.0
        %1499 = vmatprep.subr.mxu0 0.0
        %1500 = vmatpush2.msra.mxu0 0.0
        %1501 = vmatprep.subr.mxu0 0.0
        %1502 = vmatpush2.msra.mxu0 0.0
        %1503 = vmatprep.subr.mxu0 0.0
        %1504 = vmatpush2.msra.mxu0 0.0
        %1505 = vmatprep.subr.mxu0 0.0
        %1506 = vmatpush2.msra.mxu0 0.0
        %1507 = vmatprep.subr.mxu0 0.0
        %1508 = vmatpush2.msra.mxu0 0.0
        %1509 = vmatprep.subr.mxu0 0.0
        %1510 = vmatpush2.msra.mxu0 0.0
        %1511 = vmatprep.subr.mxu0 0.0
        %1512 = vmatpush2.msra.mxu0 0.0
        %1513 = vmatprep.subr.mxu0 0.0
        %1514 = vmatpush2.msra.mxu0 0.0
        %1515 = vmatprep.subr.mxu0 0.0
        %1516 = vmatpush2.msra.mxu0 0.0
        %1517 = vmatprep.subr.mxu0 0.0
        %1518 = vmatpush2.msra.mxu0 0.0
        %1519 = vmatprep.subr.mxu0 0.0
        %1520 = vmatpush2.msra.mxu0 0.0
        %1521 = vmatprep.subr.mxu0 0.0
        %1522 = vmatpush2.msra.mxu0 0.0
        %1523 = vmatprep.subr.mxu0 0.0
        %1524 = vmatpush2.msra.mxu0 0.0
        %1525 = vmatprep.mubr.f32.mxu0 0.0
        %1526 = vmatmul.mubr.f32.gmra.mxu0 %v1459
        %v1527 = vpop.f32.mrf.mxu0
        %v1528 = vadd.f32 0.0, %v1527
        %v1529 = vpop.f32.mrf.mxu0
        %1530 = vdwg.mxu0
        %v1532 = vsel %vm589, %v1449, 0
        %1534 = vmatprep.subr.mxu0 0.0
        %1535 = vmatpush1.msra.mxu0 0.0
        %1536 = vmatprep.subr.mxu0 0.0
        %1537 = vmatpush1.msra.mxu0 0.0
        %1538 = vmatprep.subr.mxu0 0.0
        %1539 = vmatpush1.msra.mxu0 0.0
        %1540 = vmatprep.subr.mxu0 0.0
        %1541 = vmatpush1.msra.mxu0 0.0
        %1542 = vmatprep.subr.mxu0 0.0
        %1543 = vmatpush1.msra.mxu0 0.0
        %1544 = vmatprep.subr.mxu0 0.0
        %1545 = vmatpush1.msra.mxu0 0.0
        %1546 = vmatprep.subr.mxu0 0.0
        %1547 = vmatpush1.msra.mxu0 0.0
        %1548 = vmatprep.subr.mxu0 0.0
        %1549 = vmatpush1.msra.mxu0 0.0
        %1550 = vmatprep.subr.mxu0 0.0
        %1551 = vmatpush1.msra.mxu0 0.0
        %1552 = vmatprep.subr.mxu0 0.0
        %1553 = vmatpush1.msra.mxu0 0.0
        %1554 = vmatprep.subr.mxu0 0.0
        %1555 = vmatpush1.msra.mxu0 0.0
        %1556 = vmatprep.subr.mxu0 0.0
        %1557 = vmatpush1.msra.mxu0 0.0
        %1558 = vmatprep.subr.mxu0 0.0
        %1559 = vmatpush1.msra.mxu0 0.0
        %1560 = vmatprep.subr.mxu0 0.0
        %1561 = vmatpush1.msra.mxu0 0.0
        %1562 = vmatprep.subr.mxu0 0.0
        %1563 = vmatpush1.msra.mxu0 0.0
        %1564 = vmatprep.subr.mxu0 0.0
        %1565 = vmatpush1.msra.mxu0 %v1103
        %1566 = vmatprep.subr.mxu0 0.0
        %1567 = vmatpush2.msra.mxu0 0.0
        %1568 = vmatprep.subr.mxu0 0.0
        %1569 = vmatpush2.msra.mxu0 0.0
        %1570 = vmatprep.subr.mxu0 0.0
        %1571 = vmatpush2.msra.mxu0 0.0
        %1572 = vmatprep.subr.mxu0 0.0
        %1573 = vmatpush2.msra.mxu0 0.0
        %1574 = vmatprep.subr.mxu0 0.0
        %1575 = vmatpush2.msra.mxu0 0.0
        %1576 = vmatprep.subr.mxu0 0.0
        %1577 = vmatpush2.msra.mxu0 0.0
        %1578 = vmatprep.subr.mxu0 0.0
        %1579 = vmatpush2.msra.mxu0 0.0
        %1580 = vmatprep.subr.mxu0 0.0
        %1581 = vmatpush2.msra.mxu0 0.0
        %1582 = vmatprep.subr.mxu0 0.0
        %1583 = vmatpush2.msra.mxu0 0.0
        %1584 = vmatprep.subr.mxu0 0.0
        %1585 = vmatpush2.msra.mxu0 0.0
        %1586 = vmatprep.subr.mxu0 0.0
        %1587 = vmatpush2.msra.mxu0 0.0
        %1588 = vmatprep.subr.mxu0 0.0
        %1589 = vmatpush2.msra.mxu0 0.0
        %1590 = vmatprep.subr.mxu0 0.0
        %1591 = vmatpush2.msra.mxu0 0.0
        %1592 = vmatprep.subr.mxu0 0.0
        %1593 = vmatpush2.msra.mxu0 0.0
        %1594 = vmatprep.subr.mxu0 0.0
        %1595 = vmatpush2.msra.mxu0 0.0
        %1596 = vmatprep.subr.mxu0 0.0
        %1597 = vmatpush2.msra.mxu0 0.0
        %1598 = vmatprep.mubr.f32.mxu0 0.0
        %1599 = vmatmul.mubr.f32.gmra.mxu0 %v1532
        %v1600 = vpop.f32.mrf.mxu0
        %v1601 = vadd.f32 0.0, %v1600
        %v1602 = vpop.f32.mrf.mxu0
        %1603 = vdwg.mxu0
        %v1605 = vsel %vm589, %v1451, 0
        %1607 = vmatprep.subr.mxu0 0.0
        %1608 = vmatpush1.msra.mxu0 0.0
        %1609 = vmatprep.subr.mxu0 0.0
        %1610 = vmatpush1.msra.mxu0 0.0
        %1611 = vmatprep.subr.mxu0 0.0
        %1612 = vmatpush1.msra.mxu0 0.0
        %1613 = vmatprep.subr.mxu0 0.0
        %1614 = vmatpush1.msra.mxu0 0.0
        %1615 = vmatprep.subr.mxu0 0.0
        %1616 = vmatpush1.msra.mxu0 0.0
        %1617 = vmatprep.subr.mxu0 0.0
        %1618 = vmatpush1.msra.mxu0 0.0
        %1619 = vmatprep.subr.mxu0 0.0
        %1620 = vmatpush1.msra.mxu0 0.0
        %1621 = vmatprep.subr.mxu0 0.0
        %1622 = vmatpush1.msra.mxu0 0.0
        %1623 = vmatprep.subr.mxu0 0.0
        %1624 = vmatpush1.msra.mxu0 0.0
        %1625 = vmatprep.subr.mxu0 0.0
        %1626 = vmatpush1.msra.mxu0 0.0
        %1627 = vmatprep.subr.mxu0 0.0
        %1628 = vmatpush1.msra.mxu0 0.0
        %1629 = vmatprep.subr.mxu0 0.0
        %1630 = vmatpush1.msra.mxu0 0.0
        %1631 = vmatprep.subr.mxu0 0.0
        %1632 = vmatpush1.msra.mxu0 0.0
        %1633 = vmatprep.subr.mxu0 0.0
        %1634 = vmatpush1.msra.mxu0 0.0
        %1635 = vmatprep.subr.mxu0 0.0
        %1636 = vmatpush1.msra.mxu0 0.0
        %1637 = vmatprep.subr.mxu0 0.0
        %1638 = vmatpush1.msra.mxu0 %v1104
        %1639 = vmatprep.subr.mxu0 0.0
        %1640 = vmatpush2.msra.mxu0 0.0
        %1641 = vmatprep.subr.mxu0 0.0
        %1642 = vmatpush2.msra.mxu0 0.0
        %1643 = vmatprep.subr.mxu0 0.0
        %1644 = vmatpush2.msra.mxu0 0.0
        %1645 = vmatprep.subr.mxu0 0.0
        %1646 = vmatpush2.msra.mxu0 0.0
        %1647 = vmatprep.subr.mxu0 0.0
        %1648 = vmatpush2.msra.mxu0 0.0
        %1649 = vmatprep.subr.mxu0 0.0
        %1650 = vmatpush2.msra.mxu0 0.0
        %1651 = vmatprep.subr.mxu0 0.0
        %1652 = vmatpush2.msra.mxu0 0.0
        %1653 = vmatprep.subr.mxu0 0.0
        %1654 = vmatpush2.msra.mxu0 0.0
        %1655 = vmatprep.subr.mxu0 0.0
        %1656 = vmatpush2.msra.mxu0 0.0
        %1657 = vmatprep.subr.mxu0 0.0
        %1658 = vmatpush2.msra.mxu0 0.0
        %1659 = vmatprep.subr.mxu0 0.0
        %1660 = vmatpush2.msra.mxu0 0.0
        %1661 = vmatprep.subr.mxu0 0.0
        %1662 = vmatpush2.msra.mxu0 0.0
        %1663 = vmatprep.subr.mxu0 0.0
        %1664 = vmatpush2.msra.mxu0 0.0
        %1665 = vmatprep.subr.mxu0 0.0
        %1666 = vmatpush2.msra.mxu0 0.0
        %1667 = vmatprep.subr.mxu0 0.0
        %1668 = vmatpush2.msra.mxu0 0.0
        %1669 = vmatprep.subr.mxu0 0.0
        %1670 = vmatpush2.msra.mxu0 0.0
        %1671 = vmatprep.mubr.f32.mxu0 0.0
        %1672 = vmatmul.mubr.f32.gmra.mxu0 %v1605
        %v1673 = vpop.f32.mrf.mxu0
        %v1674 = vadd.f32 0.0, %v1673
        %v1675 = vpop.f32.mrf.mxu0
        %1676 = vdwg.mxu0
        %v1678 = vsel %vm589, %v1453, 0
        %1680 = vmatprep.subr.mxu0 0.0
        %1681 = vmatpush1.msra.mxu0 0.0
        %1682 = vmatprep.subr.mxu0 0.0
        %1683 = vmatpush1.msra.mxu0 0.0
        %1684 = vmatprep.subr.mxu0 0.0
        %1685 = vmatpush1.msra.mxu0 0.0
        %1686 = vmatprep.subr.mxu0 0.0
        %1687 = vmatpush1.msra.mxu0 0.0
        %1688 = vmatprep.subr.mxu0 0.0
        %1689 = vmatpush1.msra.mxu0 0.0
        %1690 = vmatprep.subr.mxu0 0.0
        %1691 = vmatpush1.msra.mxu0 0.0
        %1692 = vmatprep.subr.mxu0 0.0
        %1693 = vmatpush1.msra.mxu0 0.0
        %1694 = vmatprep.subr.mxu0 0.0
        %1695 = vmatpush1.msra.mxu0 0.0
        %1696 = vmatprep.subr.mxu0 0.0
        %1697 = vmatpush1.msra.mxu0 0.0
        %1698 = vmatprep.subr.mxu0 0.0
        %1699 = vmatpush1.msra.mxu0 0.0
        %1700 = vmatprep.subr.mxu0 0.0
        %1701 = vmatpush1.msra.mxu0 0.0
        %1702 = vmatprep.subr.mxu0 0.0
        %1703 = vmatpush1.msra.mxu0 0.0
        %1704 = vmatprep.subr.mxu0 0.0
        %1705 = vmatpush1.msra.mxu0 0.0
        %1706 = vmatprep.subr.mxu0 0.0
        %1707 = vmatpush1.msra.mxu0 0.0
        %1708 = vmatprep.subr.mxu0 0.0
        %1709 = vmatpush1.msra.mxu0 0.0
        %1710 = vmatprep.subr.mxu0 0.0
        %1711 = vmatpush1.msra.mxu0 %v1105
        %1712 = vmatprep.subr.mxu0 0.0
        %1713 = vmatpush2.msra.mxu0 0.0
        %1714 = vmatprep.subr.mxu0 0.0
        %1715 = vmatpush2.msra.mxu0 0.0
        %1716 = vmatprep.subr.mxu0 0.0
        %1717 = vmatpush2.msra.mxu0 0.0
        %1718 = vmatprep.subr.mxu0 0.0
        %1719 = vmatpush2.msra.mxu0 0.0
        %1720 = vmatprep.subr.mxu0 0.0
        %1721 = vmatpush2.msra.mxu0 0.0
        %1722 = vmatprep.subr.mxu0 0.0
        %1723 = vmatpush2.msra.mxu0 0.0
        %1724 = vmatprep.subr.mxu0 0.0
        %1725 = vmatpush2.msra.mxu0 0.0
        %1726 = vmatprep.subr.mxu0 0.0
        %1727 = vmatpush2.msra.mxu0 0.0
        %1728 = vmatprep.subr.mxu0 0.0
        %1729 = vmatpush2.msra.mxu0 0.0
        %1730 = vmatprep.subr.mxu0 0.0
        %1731 = vmatpush2.msra.mxu0 0.0
        %1732 = vmatprep.subr.mxu0 0.0
        %1733 = vmatpush2.msra.mxu0 0.0
        %1734 = vmatprep.subr.mxu0 0.0
        %1735 = vmatpush2.msra.mxu0 0.0
        %1736 = vmatprep.subr.mxu0 0.0
        %1737 = vmatpush2.msra.mxu0 0.0
        %1738 = vmatprep.subr.mxu0 0.0
        %1739 = vmatpush2.msra.mxu0 0.0
        %1740 = vmatprep.subr.mxu0 0.0
        %1741 = vmatpush2.msra.mxu0 0.0
        %1742 = vmatprep.subr.mxu0 0.0
        %1743 = vmatpush2.msra.mxu0 0.0
        %1744 = vmatprep.mubr.f32.mxu0 0.0
        %1745 = vmatmul.mubr.f32.gmra.mxu0 %v1678
        %v1746 = vpop.f32.mrf.mxu0
        %v1747 = vadd.f32 0.0, %v1746
        %v1748 = vpop.f32.mrf.mxu0
        %1749 = vdwg.mxu0
        %v1750 = vcombine.low %v1528, %v1674
        %v1751 = vcombine.high %v1528, %v1674
        %v1753 = vunpack.c.l.s4 1983009808
        %v1754 = vunpack.c.0.s8 %v1753
        %v1755 = vlaneseq
        %v1756 = vshrl.u32 %v1755, 7
        %v1757 = vsub.s32 %v1754, %v1756
        %v1758 = vrot.slane %v1750, %v1757
        %v1760 = vunpack.c.l.s4 1983009808
        %v1761 = vunpack.c.0.s8 %v1760
        %v1762 = vlaneseq
        %v1763 = vshrl.u32 %v1762, 7
        %v1764 = vsub.s32 %v1761, %v1763
        %v1765 = vrot.slane %v1751, %v1764
        %v1766 = vcombine.low %v1601, %v1747
        %v1767 = vcombine.high %v1601, %v1747
        %v1769 = vunpack.c.l.s4 1983009808
        %v1770 = vunpack.c.0.s8 %v1769
        %v1771 = vlaneseq
        %v1772 = vshrl.u32 %v1771, 7
        %v1773 = vsub.s32 %v1770, %v1772
        %v1774 = vrot.slane %v1766, %v1773
        %v1776 = vunpack.c.l.s4 1983009808
        %v1777 = vunpack.c.0.s8 %v1776
        %v1778 = vlaneseq
        %v1779 = vshrl.u32 %v1778, 7
        %v1780 = vsub.s32 %v1777, %v1779
        %v1781 = vrot.slane %v1767, %v1780
        %v1782 = vcombine.low %v1758, %v1774
        %v1783 = vcombine.high %v1758, %v1774
        %v1785 = vunpack.c.l.s4 1934713408
        %v1786 = vunpack.c.0.s8 %v1785
        %v1787 = vlaneseq
        %v1788 = vshrl.u32 %v1787, 7
        %v1789 = vsub.s32 %v1786, %v1788
        %v1790 = vrot.slane %v1782, %v1789
        %v1792 = vunpack.c.l.s4 1934713408
        %v1793 = vunpack.c.0.s8 %v1792
        %v1794 = vlaneseq
        %v1795 = vshrl.u32 %v1794, 7
        %v1796 = vsub.s32 %v1793, %v1795
        %v1797 = vrot.slane %v1783, %v1796
        %v1798 = vcombine.low %v1765, %v1781
        %v1799 = vcombine.high %v1765, %v1781
        %v1801 = vunpack.c.l.s4 1934713408
        %v1802 = vunpack.c.0.s8 %v1801
        %v1803 = vlaneseq
        %v1804 = vshrl.u32 %v1803, 7
        %v1805 = vsub.s32 %v1802, %v1804
        %v1806 = vrot.slane %v1798, %v1805
        %v1808 = vunpack.c.l.s4 1934713408
        %v1809 = vunpack.c.0.s8 %v1808
        %v1810 = vlaneseq
        %v1811 = vshrl.u32 %v1810, 7
        %v1812 = vsub.s32 %v1809, %v1811
        %v1813 = vrot.slane %v1799, %v1812
        %v1814 = vcombine.high %v1790, 0.0
        %v1815 = vcombine.high %v1797, 0.0
        %v1816 = vcombine.high %v1806, 0.0
        %v1817 = vcombine.high %v1813, 0.0
        %v1818 = vcombine.low %v1790, %v1797
        %v1820 = vunpack.c.l.s4 1983009808
        %v1821 = vunpack.c.0.s8 %v1820
        %v1822 = vlaneseq
        %v1823 = vshrl.u32 %v1822, 7
        %v1824 = vsub.s32 %v1821, %v1823
        %v1825 = vrot.slane %v1818, %v1824
        %v1826 = vcombine.low %v1814, %v1815
        %v1828 = vunpack.c.l.s4 1983009808
        %v1829 = vunpack.c.0.s8 %v1828
        %v1830 = vlaneseq
        %v1831 = vshrl.u32 %v1830, 7
        %v1832 = vsub.s32 %v1829, %v1831
        %v1833 = vrot.slane %v1826, %v1832
        %v1834 = vcombine.low %v1806, %v1813
        %v1836 = vunpack.c.l.s4 1983009808
        %v1837 = vunpack.c.0.s8 %v1836
        %v1838 = vlaneseq
        %v1839 = vshrl.u32 %v1838, 7
        %v1840 = vsub.s32 %v1837, %v1839
        %v1841 = vrot.slane %v1834, %v1840
        %v1842 = vcombine.low %v1816, %v1817
        %v1844 = vunpack.c.l.s4 1983009808
        %v1845 = vunpack.c.0.s8 %v1844
        %v1846 = vlaneseq
        %v1847 = vshrl.u32 %v1846, 7
        %v1848 = vsub.s32 %v1845, %v1847
        %v1849 = vrot.slane %v1842, %v1848
        %v1850 = vcombine.low %v1825, %v1833
        %v1851 = vcombine.high %v1825, %v1833
        %v1853 = vunpack.c.l.s4 1934713408
        %v1854 = vunpack.c.0.s8 %v1853
        %v1855 = vlaneseq
        %v1856 = vshrl.u32 %v1855, 7
        %v1857 = vsub.s32 %v1854, %v1856
        %v1858 = vrot.slane %v1850, %v1857
        %v1860 = vunpack.c.l.s4 1934713408
        %v1861 = vunpack.c.0.s8 %v1860
        %v1862 = vlaneseq
        %v1863 = vshrl.u32 %v1862, 7
        %v1864 = vsub.s32 %v1861, %v1863
        %v1865 = vrot.slane %v1851, %v1864
        %v1866 = vcombine.low %v1841, %v1849
        %v1867 = vcombine.high %v1841, %v1849
        %v1869 = vunpack.c.l.s4 1934713408
        %v1870 = vunpack.c.0.s8 %v1869
        %v1871 = vlaneseq
        %v1872 = vshrl.u32 %v1871, 7
        %v1873 = vsub.s32 %v1870, %v1872
        %v1874 = vrot.slane %v1866, %v1873
        %v1876 = vunpack.c.l.s4 1934713408
        %v1877 = vunpack.c.0.s8 %v1876
        %v1878 = vlaneseq
        %v1879 = vshrl.u32 %v1878, 7
        %v1880 = vsub.s32 %v1877, %v1879
        %v1881 = vrot.slane %v1867, %v1880
        %v1882 = vcombine.low %v1858, %v1874
        %v1883 = vcombine.high %v1858, %v1874
        %v1884 = vcombine.low %v1865, %v1881
        %v1885 = vcombine.high %v1865, %v1881
        %1887 = vrot.lane.b32.xlu0 %v1883, 8
        %v1888 = vpop.permute.xlu0 %1887
        %1891 = vrot.lane.b32.xlu0 %v1884, 16
        %v1892 = vpop.permute.xlu0 %1891
        %1895 = vrot.lane.b32.xlu0 %v1885, 24
        %v1896 = vpop.permute.xlu0 %1895
        %v1898 = vsel %vm589, %v1882, %v1888
        %vm1899 = vcmask 130048
        %v1900 = vsel %vm1899, %v1898, %v1892
        %vm1901 = vcmask 195584
        %v1902 = vsel %vm1901, %v1900, %v1896
        %v1903 = vmul.f32 %v1902, %v663
        %v1904 = vld [vmem:[#allocation5] sm:$0xff]
        %v1905 = vld [vmem:[#allocation5 + $0x8] sm:$0xff]
        %v1906 = vld [vmem:[#allocation5 + $0x10] sm:$0xff]
        %v1907 = vld [vmem:[#allocation5 + $0x18] sm:$0xff]
        %v1908 = vld [vmem:[#allocation7] sm:$0x1]
        %v1910 = vlaneseq
        %v1911 = vshrl.u32 %v1910, 7
        %v1912 = vsub.s32 0, %v1911
        %v1913 = vrot.slane %v1908, %v1912
        %v1916 = vsel %vm425, %v1903, 0
        %1918 = vmatprep.subr.mxu0 0.0
        %1919 = vmatpush1.msra.mxu0 0.0
        %1920 = vmatprep.subr.mxu0 0.0
        %1921 = vmatpush1.msra.mxu0 0.0
        %1922 = vmatprep.subr.mxu0 0.0
        %1923 = vmatpush1.msra.mxu0 0.0
        %1924 = vmatprep.subr.mxu0 0.0
        %1925 = vmatpush1.msra.mxu0 0.0
        %1926 = vmatprep.subr.mxu0 0.0
        %1927 = vmatpush1.msra.mxu0 0.0
        %1928 = vmatprep.subr.mxu0 0.0
        %1929 = vmatpush1.msra.mxu0 0.0
        %1930 = vmatprep.subr.mxu0 0.0
        %1931 = vmatpush1.msra.mxu0 0.0
        %1932 = vmatprep.subr.mxu0 0.0
        %1933 = vmatpush1.msra.mxu0 0.0
        %1934 = vmatprep.subr.mxu0 0.0
        %1935 = vmatpush1.msra.mxu0 0.0
        %1936 = vmatprep.subr.mxu0 0.0
        %1937 = vmatpush1.msra.mxu0 0.0
        %1938 = vmatprep.subr.mxu0 0.0
        %1939 = vmatpush1.msra.mxu0 0.0
        %1940 = vmatprep.subr.mxu0 0.0
        %1941 = vmatpush1.msra.mxu0 0.0
        %1942 = vmatprep.subr.mxu0 0.0
        %1943 = vmatpush1.msra.mxu0 %v1907
        %1944 = vmatprep.subr.mxu0 0.0
        %1945 = vmatpush1.msra.mxu0 %v1906
        %1946 = vmatprep.subr.mxu0 0.0
        %1947 = vmatpush1.msra.mxu0 %v1905
        %1948 = vmatprep.subr.mxu0 0.0
        %1949 = vmatpush1.msra.mxu0 %v1904
        %1950 = vmatprep.subr.mxu0 0.0
        %1951 = vmatpush2.msra.mxu0 0.0
        %1952 = vmatprep.subr.mxu0 0.0
        %1953 = vmatpush2.msra.mxu0 0.0
        %1954 = vmatprep.subr.mxu0 0.0
        %1955 = vmatpush2.msra.mxu0 0.0
        %1956 = vmatprep.subr.mxu0 0.0
        %1957 = vmatpush2.msra.mxu0 0.0
        %1958 = vmatprep.subr.mxu0 0.0
        %1959 = vmatpush2.msra.mxu0 0.0
        %1960 = vmatprep.subr.mxu0 0.0
        %1961 = vmatpush2.msra.mxu0 0.0
        %1962 = vmatprep.subr.mxu0 0.0
        %1963 = vmatpush2.msra.mxu0 0.0
        %1964 = vmatprep.subr.mxu0 0.0
        %1965 = vmatpush2.msra.mxu0 0.0
        %1966 = vmatprep.subr.mxu0 0.0
        %1967 = vmatpush2.msra.mxu0 0.0
        %1968 = vmatprep.subr.mxu0 0.0
        %1969 = vmatpush2.msra.mxu0 0.0
        %1970 = vmatprep.subr.mxu0 0.0
        %1971 = vmatpush2.msra.mxu0 0.0
        %1972 = vmatprep.subr.mxu0 0.0
        %1973 = vmatpush2.msra.mxu0 0.0
        %1974 = vmatprep.subr.mxu0 0.0
        %1975 = vmatpush2.msra.mxu0 0.0
        %1976 = vmatprep.subr.mxu0 0.0
        %1977 = vmatpush2.msra.mxu0 0.0
        %1978 = vmatprep.subr.mxu0 0.0
        %1979 = vmatpush2.msra.mxu0 0.0
        %1980 = vmatprep.subr.mxu0 0.0
        %1981 = vmatpush2.msra.mxu0 0.0
        %1982 = vmatprep.mubr.f32.mxu0 0.0
        %1983 = vmatmul.mubr.f32.gmra.mxu0 %v1916
        %v1984 = vpop.f32.mrf.mxu0
        %v1985 = vadd.f32 %v1913, %v1984
        %v1986 = vpop.f32.mrf.mxu0
        %1987 = vdwg.mxu0
        %1988 = vst.msk [vmem:[%s405] sm:$0xff] %vm425, %v1985
        %s1989 = sand.u32 %s234, 1
        %s1990 = scalar_lea.sflag [#allocation4], %s1989
        %s1991 = sand.u32 %s234, 1
        %s1992 = smul.addr %s1991, 8
        %s1993 = scalar_lea.vmem [#allocation8], %s1992
        %s1994 = sand.u32 %s260, 1
        %s1995 = scalar_lea.sflag [#allocation10], %s1994
        %s1996 = sand.u32 %s260, 1
        %s1997 = smul.addr %s1996, 32
        %s1998 = scalar_lea.vmem [#allocation9], %s1997
        // Predicated region
        $region69: #{tpu_custom_call.1} parent=55 // pred_check
          %p1999 = pneg %p244
        $region70: #{tpu_custom_call.1} parent=55 // pred_check_branch
          %2001 = sbr.rel (%p1999) target = $region72
        $region71: #{tpu_custom_call.1} parent=55 // pred_region
          %s2003 = ssub.s32 128, 128
          %2004 = vsyncadd %s1990, %s2003
          %s2005 = smul.addr %s32, 128
          %s2006 = scalar_lea.hbm %s9, %s2005
          %s2008 = sshll.u32 %s1993, 4
          %s2009 = int_to_ptr.vmem [resolvable:$true] %s2008
          %2011 = dma.vmem_to_hbm [thread:$0]  %s2009, 128, %s2006, %s1990
        $region72: #{tpu_custom_call.1} parent=55 // pred_fallthru
          _
        // Predicated region
        $region73: #{tpu_custom_call.1} parent=55 // pred_check
          %p2012 = pneg %p270
        $region74: #{tpu_custom_call.1} parent=55 // pred_check_branch
          %2014 = sbr.rel (%p2012) target = $region76
        $region75: #{tpu_custom_call.1} parent=55 // pred_region
          %s2016 = ssub.s32 512, 512
          %2017 = vsyncadd %s1995, %s2016
          %s2018 = smul.addr %s32, 4
          %s2019 = smul.addr %s2018, 128
          %s2020 = scalar_lea.hbm %s10, %s2019
          %s2021 = sshll.u32 %s1998, 4
          %s2022 = int_to_ptr.vmem [resolvable:$true] %s2021
          %2027 = dma.vmem_to_hbm [thread:$0]  %s2022, 512, %s2020, %s1995, 128, 128, 8
        $region76: #{tpu_custom_call.1} parent=55 // pred_fallthru
          _
      $region56: #{tpu_custom_call.1} parent=5 // pred_fallthru
        _
      %p2028 = scmp.le.s32.totalorder 2, %s27
      // Predicated region
      $region77: #{tpu_custom_call.1} parent=5 // pred_check
        %p2029 = pneg %p2028
      $region78: #{tpu_custom_call.1} parent=5 // pred_check_branch
        %2031 = sbr.rel (%p2029) target = $region80
      $region79: #{tpu_custom_call.1} parent=5 // pred_region
        %s2032 = ssub.s32 %s27, 2
        // Predicated region
        $region81: #{tpu_custom_call.1} parent=79 // pred_check
          %p2033 = pneg %p250
        $region82: #{tpu_custom_call.1} parent=79 // pred_check_branch
          %2035 = sbr.rel (%p2033) target = $region84
        $region83: #{tpu_custom_call.1} parent=79 // pred_region
          %s2036 = sand.u32 %s235, 1
          %s2037 = scalar_lea.sflag [#allocation4], %s2036
          %s2038 = sand.u32 %s235, 1
          %s2039 = smul.addr %s2038, 8
          %s2040 = scalar_lea.vmem [#allocation8], %s2039
          %2041 = dma.done %s2037, 128
        $region84: #{tpu_custom_call.1} parent=79 // pred_fallthru
          _
        // Predicated region
        $region85: #{tpu_custom_call.1} parent=79 // pred_check
          %p2042 = pneg %p276
        $region86: #{tpu_custom_call.1} parent=79 // pred_check_branch
          %2044 = sbr.rel (%p2042) target = $region88
        $region87: #{tpu_custom_call.1} parent=79 // pred_region
          %s2045 = sand.u32 %s261, 1
          %s2046 = scalar_lea.sflag [#allocation10], %s2045
          %s2047 = sand.u32 %s261, 1
          %s2048 = smul.addr %s2047, 32
          %s2049 = scalar_lea.vmem [#allocation9], %s2048
          %2050 = dma.done %s2046, 512
        $region88: #{tpu_custom_call.1} parent=79 // pred_fallthru
          _
      $region80: #{tpu_custom_call.1} parent=5 // pred_fallthru
        _
    $region6: #{tpu_custom_call.1} parent=1 // loop_footer
      %s31 = sadd.s32 1, %s27
    $region7: #{tpu_custom_call.1} parent=1 // loop_footer_branch
      %26 = sbr.rel target = $region3
    $region8: #{tpu_custom_call.1} parent=1 // loop_exit
      _
    %2051 = vsyncpa [#allocation3], 1
    %s2052 = scalar_lea.sflag [#allocation3], 1
    %2053 = vsyncpa %s2052, 1
    %2054 = vsyncpa [#allocation6], 1
    %2055 = vsyncpa [#allocation4], 1
    %s2056 = scalar_lea.sflag [#allocation4], 1
    %2057 = vsyncpa %s2056, 1
    %2058 = vsyncpa [#allocation10], 1
    %s2059 = scalar_lea.sflag [#allocation10], 1
    %2060 = vsyncpa %s2059, 1

// kernel: tpu_custom_call.1
$region0: #{tpu_custom_call.1}
  #allocation0 [shape = 'u32[]', space=smem, size = 0x4, offset = 0x4, fixed_abs, tag = 'smem constant byte address 0x4 - core index']
  #allocation1 [shape = 'u32[144,128]{1,0:T(1,128)}', space=vmem, size = 0x12000, scoped, tag = 'internal scratch']
  %s0 = inlined_call_operand.hbm [shape: f32[2,8,32], index: 0, kind: input, shape index: {}]
  %s1 = inlined_call_operand.vmem [shape: f32[32,96], index: 1, kind: input, shape index: {}]
  %s2 = inlined_call_operand.vmem [shape: f32[1,96], index: 2, kind: input, shape index: {}]
  %s3 = inlined_call_operand.hbm [shape: f32[32,32], index: 3, kind: input, shape index: {}]
  %s4 = inlined_call_operand.hbm [shape: f32[1,32], index: 4, kind: input, shape index: {}]
  %s5 = inlined_call_operand.vmem [shape: f32[32,8], index: 5, kind: input, shape index: {}]
  %s6 = inlined_call_operand.vmem [shape: f32[1,8], index: 6, kind: input, shape index: {}]
  %s7 = inlined_call_operand.vmem [shape: f32[8,32], index: 7, kind: input, shape index: {}]
  %s8 = inlined_call_operand.vmem [shape: f32[1,32], index: 8, kind: input, shape index: {}]
  %s9 = inlined_call_operand.hbm [shape: f32[2,8,32], index: 9, kind: output, shape index: {0}]
  %s10 = inlined_call_operand.hbm [shape: f32[2,4,8,8], index: 10, kind: output, shape index: {1}]
  %11 = xla_tuple %s9, %s10
  %s12 = sld [smem:[#allocation0]]
  $region89: #{tpu_custom_call.1} parent=0
    _
  %s14 = ssub.s32 1, %s12
  %s15 = scalar_select 0, %s14, %s12
  $region1: #{tpu_custom_call.1} parent=0
    #allocation2 [shape = 'u8[8192]{0}', space=vmem, size = 0x2000, scoped, tag = 'input window, operand 0']
    #allocation3 [shape = 's32[2]{0}', space=sflag, size = 0x8, scoped, tag = 'scoped memory for tpu_custom_call.1']
    #allocation4 [shape = 's32[2]{0}', space=sflag, size = 0x8, scoped, tag = 'scoped memory for tpu_custom_call.1']
    #allocation5 [shape = 'u8[16384]{0}', space=vmem, size = 0x4000, scoped, tag = 'input window, operand 3, single buffered']
    #allocation6 [shape = 's32[1]{0}', space=sflag, size = 0x4, scoped, tag = 'scoped memory for tpu_custom_call.1']
    #allocation7 [shape = 'u8[512]{0}', space=vmem, size = 0x400, scoped, tag = 'input window, operand 4, single buffered']
    #allocation8 [shape = 'u8[8192]{0}', space=vmem, size = 0x2000, scoped, tag = 'output window, operand 0']
    #allocation9 [shape = 'u8[32768]{0}', space=vmem, size = 0x8000, scoped, tag = 'output window, operand 1']
    #allocation10 [shape = 's32[2]{0}', space=sflag, size = 0x8, scoped, tag = 'scoped memory for tpu_custom_call.1']
    %16 = vsyncpa [#allocation3], 0
    %s17 = scalar_lea.sflag [#allocation3], 1
    %18 = vsyncpa %s17, 0
    %19 = vsyncpa [#allocation6], 0
    %20 = vsyncpa [#allocation4], 0
    %s21 = scalar_lea.sflag [#allocation4], 1
    %22 = vsyncpa %s21, 0
    %23 = vsyncpa [#allocation10], 0
    %s24 = scalar_lea.sflag [#allocation10], 1
    %25 = vsyncpa %s24, 0
    loop: start=0, step=1, limit=4
    $region2: #{tpu_custom_call.1} parent=1 // loop_pre_header
      _
    $region3: #{tpu_custom_call.1} parent=1 // loop_header
      %s27 = sphi 0, %s31
      %p28 = scmp.ge.s32.totalorder %s27, 4
      %s37 = sphi 0, %s39
      %s40 = sphi 0, %s37
      %s41 = sphi 0, %s40
      %s57 = sphi 0, %s41
      %s61 = sphi 0, %s61
      %s63 = sphi 0, %s61
      %s64 = sphi 0, %s63
      %s78 = sphi 0, %s64
      %s82 = sphi 0, %s82
      %s84 = sphi 0, %s82
      %s85 = sphi 0, %s84
      %s99 = sphi 0, %s85
      %s103 = sphi 0, %s103
      %s105 = sphi 0, %s103
      %s106 = sphi 0, %s105
      %s120 = sphi 0, %s106
      %s124 = sphi 0, %s124
      %s126 = sphi 0, %s124
      %s127 = sphi 0, %s126
      %s141 = sphi 0, %s127
      %s145 = sphi 0, %s145
      %s147 = sphi 0, %s145
      %s148 = sphi 0, %s147
      %s162 = sphi 0, %s148
      %s166 = sphi 0, %s166
      %s168 = sphi 0, %s166
      %s169 = sphi 0, %s168
      %s183 = sphi 0, %s169
      %s187 = sphi 0, %s187
      %s189 = sphi 0, %s187
      %s190 = sphi 0, %s189
      %s204 = sphi 0, %s190
      %s208 = sphi 0, %s208
      %s210 = sphi 0, %s208
      %s211 = sphi 0, %s210
      %s225 = sphi 0, %s211
      %s231 = sphi 0, %s233
      %s234 = sphi 0, %s231
      %s235 = sphi 0, %s234
      %s251 = sphi 0, %s235
      %s257 = sphi 0, %s259
      %s260 = sphi 0, %s257
      %s261 = sphi 0, %s260
      %s277 = sphi 0, %s261
    $region4: #{tpu_custom_call.1} parent=1 // loop_header_branch
      %30 = sbr.rel (%p28) target = $region8
    $region5: #{tpu_custom_call.1} parent=1 // loop_body
      %s32 = ssub.s32 %s27, 1
      %s33 = ssub.s32 %s27, 2
      %s34 = sadd.s32 %s27, 1
      %s35 = ssub.s32 %s27, %s34
      %p36 = scmp.eq.s32.totalorder %s35, 0
      %s38 = sadd.s32 %s37, 1
      %s39 = scalar_select %p36, %s37, %s38
      %p42 = pneg %p36
      %p43 = scmp.eq.s32.totalorder %s27, 1
      %p44 = por %p42, %p43
      %p45 = scmp.ne.s32.totalorder %s37, %s40
      %p46 = scmp.eq.s32.totalorder %s27, 0
      %p47 = por %p45, %p46
      %p48 = scmp.ne.s32.totalorder %s37, %s40
      %p49 = scmp.eq.s32.totalorder %s32, 1
      %p50 = por %p48, %p49
      %p51 = scmp.ne.s32.totalorder %s40, %s41
      %p52 = scmp.eq.s32.totalorder %s32, 0
      %p53 = por %p51, %p52
      %p54 = scmp.ne.s32.totalorder %s40, %s41
      %p55 = scmp.eq.s32.totalorder %s33, 1
      %p56 = por %p54, %p55
      %p58 = scmp.ne.s32.totalorder %s41, %s57
      %p59 = scmp.eq.s32.totalorder %s33, 0
      %p60 = por %p58, %p59
      %s62 = sadd.s32 %s61, 1
      %p65 = scmp.eq.s32.totalorder %s27, 1
      %p66 = scmp.ne.s32.totalorder %s61, %s63
      %p67 = scmp.eq.s32.totalorder %s27, 0
      %p68 = por %p66, %p67
      %p69 = scmp.ne.s32.totalorder %s61, %s63
      %p70 = scmp.eq.s32.totalorder %s32, 1
      %p71 = por %p69, %p70
      %p72 = scmp.ne.s32.totalorder %s63, %s64
      %p73 = scmp.eq.s32.totalorder %s32, 0
      %p74 = por %p72, %p73
      %p75 = scmp.ne.s32.totalorder %s63, %s64
      %p76 = scmp.eq.s32.totalorder %s33, 1
      %p77 = por %p75, %p76
      %p79 = scmp.ne.s32.totalorder %s64, %s78
      %p80 = scmp.eq.s32.totalorder %s33, 0
      %p81 = por %p79, %p80
      %s83 = sadd.s32 %s82, 1
      %p86 = scmp.eq.s32.totalorder %s27, 1
      %p87 = scmp.ne.s32.totalorder %s82, %s84
      %p88 = scmp.eq.s32.totalorder %s27, 0
      %p89 = por %p87, %p88
      %p90 = scmp.ne.s32.totalorder %s82, %s84
      %p91 = scmp.eq.s32.totalorder %s32, 1
      %p92 = por %p90, %p91
      %p93 = scmp.ne.s32.totalorder %s84, %s85
      %p94 = scmp.eq.s32.totalorder %s32, 0
      %p95 = por %p93, %p94
      %p96 = scmp.ne.s32.totalorder %s84, %s85
      %p97 = scmp.eq.s32.totalorder %s33, 1
      %p98 = por %p96, %p97
      %p100 = scmp.ne.s32.totalorder %s85, %s99
      %p101 = scmp.eq.s32.totalorder %s33, 0
      %p102 = por %p100, %p101
      %s104 = sadd.s32 %s103, 1
      %p107 = scmp.eq.s32.totalorder %s27, 1
      %p108 = scmp.ne.s32.totalorder %s103, %s105
      %p109 = scmp.eq.s32.totalorder %s27, 0
      %p110 = por %p108, %p109
      %p111 = scmp.ne.s32.totalorder %s103, %s105
      %p112 = scmp.eq.s32.totalorder %s32, 1
      %p113 = por %p111, %p112
      %p114 = scmp.ne.s32.totalorder %s105, %s106
      %p115 = scmp.eq.s32.totalorder %s32, 0
      %p116 = por %p114, %p115
      %p117 = scmp.ne.s32.totalorder %s105, %s106
      %p118 = scmp.eq.s32.totalorder %s33, 1
      %p119 = por %p117, %p118
      %p121 = scmp.ne.s32.totalorder %s106, %s120
      %p122 = scmp.eq.s32.totalorder %s33, 0
      %p123 = por %p121, %p122
      %s125 = sadd.s32 %s124, 1
      %p128 = scmp.eq.s32.totalorder %s27, 1
      %p129 = scmp.ne.s32.totalorder %s124, %s126
      %p130 = scmp.eq.s32.totalorder %s27, 0
      %p131 = por %p129, %p130
      %p132 = scmp.ne.s32.totalorder %s124, %s126
      %p133 = scmp.eq.s32.totalorder %s32, 1
      %p134 = por %p132, %p133
      %p135 = scmp.ne.s32.totalorder %s126, %s127
      %p136 = scmp.eq.s32.totalorder %s32, 0
      %p137 = por %p135, %p136
      %p138 = scmp.ne.s32.totalorder %s126, %s127
      %p139 = scmp.eq.s32.totalorder %s33, 1
      %p140 = por %p138, %p139
      %p142 = scmp.ne.s32.totalorder %s127, %s141
      %p143 = scmp.eq.s32.totalorder %s33, 0
      %p144 = por %p142, %p143
      %s146 = sadd.s32 %s145, 1
      %p149 = scmp.eq.s32.totalorder %s27, 1
      %p150 = scmp.ne.s32.totalorder %s145, %s147
      %p151 = scmp.eq.s32.totalorder %s27, 0
      %p152 = por %p150, %p151
      %p153 = scmp.ne.s32.totalorder %s145, %s147
      %p154 = scmp.eq.s32.totalorder %s32, 1
      %p155 = por %p153, %p154
      %p156 = scmp.ne.s32.totalorder %s147, %s148
      %p157 = scmp.eq.s32.totalorder %s32, 0
      %p158 = por %p156, %p157
      %p159 = scmp.ne.s32.totalorder %s147, %s148
      %p160 = scmp.eq.s32.totalorder %s33, 1
      %p161 = por %p159, %p160
      %p163 = scmp.ne.s32.totalorder %s148, %s162
      %p164 = scmp.eq.s32.totalorder %s33, 0
      %p165 = por %p163, %p164
      %s167 = sadd.s32 %s166, 1
      %p170 = scmp.eq.s32.totalorder %s27, 1
      %p171 = scmp.ne.s32.totalorder %s166, %s168
      %p172 = scmp.eq.s32.totalorder %s27, 0
      %p173 = por %p171, %p172
      %p174 = scmp.ne.s32.totalorder %s166, %s168
      %p175 = scmp.eq.s32.totalorder %s32, 1
      %p176 = por %p174, %p175
      %p177 = scmp.ne.s32.totalorder %s168, %s169
      %p178 = scmp.eq.s32.totalorder %s32, 0
      %p179 = por %p177, %p178
      %p180 = scmp.ne.s32.totalorder %s168, %s169
      %p181 = scmp.eq.s32.totalorder %s33, 1
      %p182 = por %p180, %p181
      %p184 = scmp.ne.s32.totalorder %s169, %s183
      %p185 = scmp.eq.s32.totalorder %s33, 0
      %p186 = por %p184, %p185
      %s188 = sadd.s32 %s187, 1
      %p191 = scmp.eq.s32.totalorder %s27, 1
      %p192 = scmp.ne.s32.totalorder %s187, %s189
      %p193 = scmp.eq.s32.totalorder %s27, 0
      %p194 = por %p192, %p193
      %p195 = scmp.ne.s32.totalorder %s187, %s189
      %p196 = scmp.eq.s32.totalorder %s32, 1
      %p197 = por %p195, %p196
      %p198 = scmp.ne.s32.totalorder %s189, %s190
      %p199 = scmp.eq.s32.totalorder %s32, 0
      %p200 = por %p198, %p199
      %p201 = scmp.ne.s32.totalorder %s189, %s190
      %p202 = scmp.eq.s32.totalorder %s33, 1
      %p203 = por %p201, %p202
      %p205 = scmp.ne.s32.totalorder %s190, %s204
      %p206 = scmp.eq.s32.totalorder %s33, 0
      %p207 = por %p205, %p206
      %s209 = sadd.s32 %s208, 1
      %p212 = scmp.eq.s32.totalorder %s27, 1
      %p213 = scmp.ne.s32.totalorder %s208, %s210
      %p214 = scmp.eq.s32.totalorder %s27, 0
      %p215 = por %p213, %p214
      %p216 = scmp.ne.s32.totalorder %s208, %s210
      %p217 = scmp.eq.s32.totalorder %s32, 1
      %p218 = por %p216, %p217
      %p219 = scmp.ne.s32.totalorder %s210, %s211
      %p220 = scmp.eq.s32.totalorder %s32, 0
      %p221 = por %p219, %p220
      %p222 = scmp.ne.s32.totalorder %s210, %s211
      %p223 = scmp.eq.s32.totalorder %s33, 1
      %p224 = por %p222, %p223
      %p226 = scmp.ne.s32.totalorder %s211, %s225
      %p227 = scmp.eq.s32.totalorder %s33, 0
      %p228 = por %p226, %p227
      %s229 = ssub.s32 %s27, %s34
      %p230 = scmp.eq.s32.totalorder %s229, 0
      %s232 = sadd.s32 %s231, 1
      %s233 = scalar_select %p230, %s231, %s232
      %p236 = pneg %p230
      %p237 = scmp.eq.s32.totalorder %s27, 1
      %p238 = por %p236, %p237
      %p239 = scmp.ne.s32.totalorder %s231, %s234
      %p240 = scmp.eq.s32.totalorder %s27, 0
      %p241 = por %p239, %p240
      %p242 = scmp.ne.s32.totalorder %s231, %s234
      %p243 = scmp.eq.s32.totalorder %s32, 1
      %p244 = por %p242, %p243
      %p245 = scmp.ne.s32.totalorder %s234, %s235
      %p246 = scmp.eq.s32.totalorder %s32, 0
      %p247 = por %p245, %p246
      %p248 = scmp.ne.s32.totalorder %s234, %s235
      %p249 = scmp.eq.s32.totalorder %s33, 1
      %p250 = por %p248, %p249
      %p252 = scmp.ne.s32.totalorder %s235, %s251
      %p253 = scmp.eq.s32.totalorder %s33, 0
      %p254 = por %p252, %p253
      %s255 = ssub.s32 %s27, %s34
      %p256 = scmp.eq.s32.totalorder %s255, 0
      %s258 = sadd.s32 %s257, 1
      %s259 = scalar_select %p256, %s257, %s258
      %p262 = pneg %p256
      %p263 = scmp.eq.s32.totalorder %s27, 1
      %p264 = por %p262, %p263
      %p265 = scmp.ne.s32.totalorder %s257, %s260
      %p266 = scmp.eq.s32.totalorder %s27, 0
      %p267 = por %p265, %p266
      %p268 = scmp.ne.s32.totalorder %s257, %s260
      %p269 = scmp.eq.s32.totalorder %s32, 1
      %p270 = por %p268, %p269
      %p271 = scmp.ne.s32.totalorder %s260, %s261
      %p272 = scmp.eq.s32.totalorder %s32, 0
      %p273 = por %p271, %p272
      %p274 = scmp.ne.s32.totalorder %s260, %s261
      %p275 = scmp.eq.s32.totalorder %s33, 1
      %p276 = por %p274, %p275
      %p278 = scmp.ne.s32.totalorder %s261, %s277
      %p279 = scmp.eq.s32.totalorder %s33, 0
      %p280 = por %p278, %p279
      %p281 = scmp.le.s32.totalorder 1, %s27
      %p282 = scmp.lt.s32.totalorder %s27, 3
      %p283 = pnand %p281, %p282
      %p284 = pneg %p283
      // Predicated region
      $region9: #{tpu_custom_call.1} parent=5 // pred_check
        _
      $region10: #{tpu_custom_call.1} parent=5 // pred_check_branch
        %286 = sbr.rel (%p283) target = $region12
      $region11: #{tpu_custom_call.1} parent=5 // pred_region
        %s287 = ssub.s32 %s27, 1
        // Predicated region
        $region13: #{tpu_custom_call.1} parent=11 // pred_check
          %p288 = pneg %p74
        $region14: #{tpu_custom_call.1} parent=11 // pred_check_branch
          %290 = sbr.rel (%p288) target = $region16
        $region15: #{tpu_custom_call.1} parent=11 // pred_region
          _
        $region16: #{tpu_custom_call.1} parent=11 // pred_fallthru
          _
        // Predicated region
        $region17: #{tpu_custom_call.1} parent=11 // pred_check
          %p291 = pneg %p95
        $region18: #{tpu_custom_call.1} parent=11 // pred_check_branch
          %293 = sbr.rel (%p291) target = $region20
        $region19: #{tpu_custom_call.1} parent=11 // pred_region
          _
        $region20: #{tpu_custom_call.1} parent=11 // pred_fallthru
          _
        // Predicated region
        $region21: #{tpu_custom_call.1} parent=11 // pred_check
          %p294 = pneg %p116
        $region22: #{tpu_custom_call.1} parent=11 // pred_check_branch
          %296 = sbr.rel (%p294) target = $region24
        $region23: #{tpu_custom_call.1} parent=11 // pred_region
          %s298 = ssub.s32 512, 512
          %299 = vsyncadd [#allocation6], %s298
          %s300 = sshll.u32 [#allocation5], 4
          %s301 = int_to_ptr.vmem [resolvable:$true] %s300
          %306 = dma.hbm_to_vmem [thread:$0]  %s3, 512, %s301, [#allocation6], 128, 128, 8
        $region24: #{tpu_custom_call.1} parent=11 // pred_fallthru
          _
        // Predicated region
        $region25: #{tpu_custom_call.1} parent=11 // pred_check
          %p307 = pneg %p137
        $region26: #{tpu_custom_call.1} parent=11 // pred_check_branch
          %309 = sbr.rel (%p307) target = $region28
        $region27: #{tpu_custom_call.1} parent=11 // pred_region
          %s311 = ssub.s32 16, 16
          %312 = vsyncadd [#allocation6], %s311
          %s314 = sshll.u32 [#allocation7], 4
          %s315 = int_to_ptr.vmem [resolvable:$true] %s314
          %317 = dma.hbm_to_vmem [thread:$0]  %s4, 16, %s315, [#allocation6]
        $region28: #{tpu_custom_call.1} parent=11 // pred_fallthru
          _
        // Predicated region
        $region29: #{tpu_custom_call.1} parent=11 // pred_check
          %p318 = pneg %p158
        $region30: #{tpu_custom_call.1} parent=11 // pred_check_branch
          %320 = sbr.rel (%p318) target = $region32
        $region31: #{tpu_custom_call.1} parent=11 // pred_region
          _
        $region32: #{tpu_custom_call.1} parent=11 // pred_fallthru
          _
        // Predicated region
        $region33: #{tpu_custom_call.1} parent=11 // pred_check
          %p321 = pneg %p179
        $region34: #{tpu_custom_call.1} parent=11 // pred_check_branch
          %323 = sbr.rel (%p321) target = $region36
        $region35: #{tpu_custom_call.1} parent=11 // pred_region
          _
        $region36: #{tpu_custom_call.1} parent=11 // pred_fallthru
          _
        // Predicated region
        $region37: #{tpu_custom_call.1} parent=11 // pred_check
          %p324 = pneg %p200
        $region38: #{tpu_custom_call.1} parent=11 // pred_check_branch
          %326 = sbr.rel (%p324) target = $region40
        $region39: #{tpu_custom_call.1} parent=11 // pred_region
          _
        $region40: #{tpu_custom_call.1} parent=11 // pred_fallthru
          _
        // Predicated region
        $region41: #{tpu_custom_call.1} parent=11 // pred_check
          %p327 = pneg %p221
        $region42: #{tpu_custom_call.1} parent=11 // pred_check_branch
          %329 = sbr.rel (%p327) target = $region44
        $region43: #{tpu_custom_call.1} parent=11 // pred_region
          _
        $region44: #{tpu_custom_call.1} parent=11 // pred_fallthru
          _
      $region12: #{tpu_custom_call.1} parent=5 // pred_fallthru
        _
      %p330 = scmp.lt.s32.totalorder %s27, 2
      // Predicated region
      $region45: #{tpu_custom_call.1} parent=5 // pred_check
        %p331 = pneg %p330
      $region46: #{tpu_custom_call.1} parent=5 // pred_check_branch
        %333 = sbr.rel (%p331) target = $region48
      $region47: #{tpu_custom_call.1} parent=5 // pred_region
        // Predicated region
        $region49: #{tpu_custom_call.1} parent=47 // pred_check
          %p334 = pneg %p47
        $region50: #{tpu_custom_call.1} parent=47 // pred_check_branch
          %336 = sbr.rel (%p334) target = $region52
        $region51: #{tpu_custom_call.1} parent=47 // pred_region
          %s337 = sand.u32 %s37, 1
          %s338 = scalar_lea.sflag [#allocation3], %s337
          %s339 = sand.u32 %s37, 1
          %s340 = smul.addr %s339, 8
          %s341 = scalar_lea.vmem [#allocation2], %s340
          %s343 = ssub.s32 128, 128
          %344 = vsyncadd %s338, %s343
          %s345 = smul.addr %s27, 128
          %s346 = scalar_lea.hbm %s0, %s345
          %s348 = sshll.u32 %s341, 4
          %s349 = int_to_ptr.vmem [resolvable:$true] %s348
          %351 = dma.hbm_to_vmem [thread:$0]  %s346, 128, %s349, %s338
        $region52: #{tpu_custom_call.1} parent=47 // pred_fallthru
          _
      $region48: #{tpu_custom_call.1} parent=5 // pred_fallthru
        _
      %p352 = scmp.le.s32.totalorder 1, %s27
      %p353 = scmp.lt.s32.totalorder %s27, 3
      %p354 = pnand %p352, %p353
      %p355 = pneg %p354
      // Predicated region
      $region53: #{tpu_custom_call.1} parent=5 // pred_check
        _
      $region54: #{tpu_custom_call.1} parent=5 // pred_check_branch
        %357 = sbr.rel (%p354) target = $region56
      $region55: #{tpu_custom_call.1} parent=5 // pred_region
        %s358 = ssub.s32 %s27, 1
        %s359 = sand.u32 %s40, 1
        %s360 = scalar_lea.sflag [#allocation3], %s359
        %s361 = sand.u32 %s40, 1
        %s362 = smul.addr %s361, 8
        %s363 = scalar_lea.vmem [#allocation2], %s362
        // Predicated region
        $region57: #{tpu_custom_call.1} parent=55 // pred_check
          %p364 = pneg %p53
        $region58: #{tpu_custom_call.1} parent=55 // pred_check_branch
          %366 = sbr.rel (%p364) target = $region60
        $region59: #{tpu_custom_call.1} parent=55 // pred_region
          %367 = dma.done %s360, 128
        $region60: #{tpu_custom_call.1} parent=55 // pred_fallthru
          _
        // Predicated region
        $region61: #{tpu_custom_call.1} parent=55 // pred_check
          %p368 = pneg %p116
        $region62: #{tpu_custom_call.1} parent=55 // pred_check_branch
          %370 = sbr.rel (%p368) target = $region64
        $region63: #{tpu_custom_call.1} parent=55 // pred_region
          %371 = dma.done [#allocation6], 512
        $region64: #{tpu_custom_call.1} parent=55 // pred_fallthru
          _
        // Predicated region
        $region65: #{tpu_custom_call.1} parent=55 // pred_check
          %p372 = pneg %p137
        $region66: #{tpu_custom_call.1} parent=55 // pred_check_branch
          %374 = sbr.rel (%p372) target = $region68
        $region67: #{tpu_custom_call.1} parent=55 // pred_region
          %375 = dma.done [#allocation6], 16
        $region68: #{tpu_custom_call.1} parent=55 // pred_fallthru
          _
        %s376 = sand.u32 %s40, 1
        %s377 = scalar_lea.sflag [#allocation3], %s376
        %s378 = sand.u32 %s40, 1
        %s379 = smul.addr %s378, 8
        %s380 = scalar_lea.vmem [#allocation2], %s379
        %p381 = pneg %p53
        %p382 = pneg %p50
        %p383 = pneg %p74
        %p384 = pneg %p71
        %p385 = pneg %p95
        %p386 = pneg %p92
        %p387 = pneg %p116
        %p388 = pneg %p113
        %p389 = pneg %p137
        %p390 = pneg %p134
        %p391 = pneg %p158
        %p392 = pneg %p155
        %p393 = pneg %p179
        %p394 = pneg %p176
        %p395 = pneg %p200
        %p396 = pneg %p197
        %p397 = pneg %p221
        %p398 = pneg %p218
        %p399 = pneg %p247
        %p400 = pneg %p244
        %s401 = sand.u32 %s234, 1
        %s402 = scalar_lea.sflag [#allocation4], %s401
        %s403 = sand.u32 %s234, 1
        %s404 = smul.addr %s403, 8
        %s405 = scalar_lea.vmem [#allocation8], %s404
        %p406 = pneg %p273
        %p407 = pneg %p270
        %s408 = sand.u32 %s260, 1
        %s409 = scalar_lea.sflag [#allocation10], %s408
        %s410 = sand.u32 %s260, 1
        %s411 = smul.addr %s410, 32
        %s412 = scalar_lea.vmem [#allocation9], %s411
        %v413 = vld [vmem:[%s363] sm:$0xff]
        %v414 = vld [vmem:[%s1] sm:$0xff]
        %v415 = vld [vmem:[%s1 + $0x8] sm:$0xff]
        %v416 = vld [vmem:[%s1 + $0x10] sm:$0xff]
        %v417 = vld [vmem:[%s1 + $0x18] sm:$0xff]
        %v418 = vld [vmem:[%s2] sm:$0x1]
        %v420 = vlaneseq
        %v421 = vshrl.u32 %v420, 7
        %v422 = vsub.s32 0, %v421
        %v423 = vrot.slane %v418, %v422
        %vm425 = vcmask 261120
        %v427 = vsel %vm425, %v413, 0
        %429 = vmatprep.subr.mxu0 0.0
        %430 = vmatpush1.msra.mxu0 0.0
        %431 = vmatprep.subr.mxu0 0.0
        %432 = vmatpush1.msra.mxu0 0.0
        %433 = vmatprep.subr.mxu0 0.0
        %434 = vmatpush1.msra.mxu0 0.0
        %435 = vmatprep.subr.mxu0 0.0
        %436 = vmatpush1.msra.mxu0 0.0
        %437 = vmatprep.subr.mxu0 0.0
        %438 = vmatpush1.msra.mxu0 0.0
        %439 = vmatprep.subr.mxu0 0.0
        %440 = vmatpush1.msra.mxu0 0.0
        %441 = vmatprep.subr.mxu0 0.0
        %442 = vmatpush1.msra.mxu0 0.0
        %443 = vmatprep.subr.mxu0 0.0
        %444 = vmatpush1.msra.mxu0 0.0
        %445 = vmatprep.subr.mxu0 0.0
        %446 = vmatpush1.msra.mxu0 0.0
        %447 = vmatprep.subr.mxu0 0.0
        %448 = vmatpush1.msra.mxu0 0.0
        %449 = vmatprep.subr.mxu0 0.0
        %450 = vmatpush1.msra.mxu0 0.0
        %451 = vmatprep.subr.mxu0 0.0
        %452 = vmatpush1.msra.mxu0 0.0
        %453 = vmatprep.subr.mxu0 0.0
        %454 = vmatpush1.msra.mxu0 %v417
        %455 = vmatprep.subr.mxu0 0.0
        %456 = vmatpush1.msra.mxu0 %v416
        %457 = vmatprep.subr.mxu0 0.0
        %458 = vmatpush1.msra.mxu0 %v415
        %459 = vmatprep.subr.mxu0 0.0
        %460 = vmatpush1.msra.mxu0 %v414
        %461 = vmatprep.subr.mxu0 0.0
        %462 = vmatpush2.msra.mxu0 0.0
        %463 = vmatprep.subr.mxu0 0.0
        %464 = vmatpush2.msra.mxu0 0.0
        %465 = vmatprep.subr.mxu0 0.0
        %466 = vmatpush2.msra.mxu0 0.0
        %467 = vmatprep.subr.mxu0 0.0
        %468 = vmatpush2.msra.mxu0 0.0
        %469 = vmatprep.subr.mxu0 0.0
        %470 = vmatpush2.msra.mxu0 0.0
        %471 = vmatprep.subr.mxu0 0.0
        %472 = vmatpush2.msra.mxu0 0.0
        %473 = vmatprep.subr.mxu0 0.0
        %474 = vmatpush2.msra.mxu0 0.0
        %475 = vmatprep.subr.mxu0 0.0
        %476 = vmatpush2.msra.mxu0 0.0
        %477 = vmatprep.subr.mxu0 0.0
        %478 = vmatpush2.msra.mxu0 0.0
        %479 = vmatprep.subr.mxu0 0.0
        %480 = vmatpush2.msra.mxu0 0.0
        %481 = vmatprep.subr.mxu0 0.0
        %482 = vmatpush2.msra.mxu0 0.0
        %483 = vmatprep.subr.mxu0 0.0
        %484 = vmatpush2.msra.mxu0 0.0
        %485 = vmatprep.subr.mxu0 0.0
        %486 = vmatpush2.msra.mxu0 0.0
        %487 = vmatprep.subr.mxu0 0.0
        %488 = vmatpush2.msra.mxu0 0.0
        %489 = vmatprep.subr.mxu0 0.0
        %490 = vmatpush2.msra.mxu0 0.0
        %491 = vmatprep.subr.mxu0 0.0
        %492 = vmatpush2.msra.mxu0 0.0
        %493 = vmatprep.mubr.f32.mxu0 0.0
        %494 = vmatmul.mubr.f32.gmra.mxu0 %v427
        %v495 = vpop.f32.mrf.mxu0
        %v496 = vadd.f32 %v423, %v495
        %v497 = vpop.f32.mrf.mxu0
        %498 = vdwg.mxu0
        %v499 = vld [vmem:[%s5] sm:$0xff]
        %v500 = vld [vmem:[%s5 + $0x8] sm:$0xff]
        %v501 = vld [vmem:[%s5 + $0x10] sm:$0xff]
        %v502 = vld [vmem:[%s5 + $0x18] sm:$0xff]
        %v503 = vld [vmem:[%s6] sm:$0x1]
        %v505 = vlaneseq
        %v506 = vshrl.u32 %v505, 7
        %v507 = vsub.s32 0, %v506
        %v508 = vrot.slane %v503, %v507
        %510 = vmatprep.subr.mxu0 0.0
        %511 = vmatpush1.msra.mxu0 0.0
        %512 = vmatprep.subr.mxu0 0.0
        %513 = vmatpush1.msra.mxu0 0.0
        %514 = vmatprep.subr.mxu0 0.0
        %515 = vmatpush1.msra.mxu0 0.0
        %516 = vmatprep.subr.mxu0 0.0
        %517 = vmatpush1.msra.mxu0 0.0
        %518 = vmatprep.subr.mxu0 0.0
        %519 = vmatpush1.msra.mxu0 0.0
        %520 = vmatprep.subr.mxu0 0.0
        %521 = vmatpush1.msra.mxu0 0.0
        %522 = vmatprep.subr.mxu0 0.0
        %523 = vmatpush1.msra.mxu0 0.0
        %524 = vmatprep.subr.mxu0 0.0
        %525 = vmatpush1.msra.mxu0 0.0
        %526 = vmatprep.subr.mxu0 0.0
        %527 = vmatpush1.msra.mxu0 0.0
        %528 = vmatprep.subr.mxu0 0.0
        %529 = vmatpush1.msra.mxu0 0.0
        %530 = vmatprep.subr.mxu0 0.0
        %531 = vmatpush1.msra.mxu0 0.0
        %532 = vmatprep.subr.mxu0 0.0
        %533 = vmatpush1.msra.mxu0 0.0
        %534 = vmatprep.subr.mxu0 0.0
        %535 = vmatpush1.msra.mxu0 %v502
        %536 = vmatprep.subr.mxu0 0.0
        %537 = vmatpush1.msra.mxu0 %v501
        %538 = vmatprep.subr.mxu0 0.0
        %539 = vmatpush1.msra.mxu0 %v500
        %540 = vmatprep.subr.mxu0 0.0
        %541 = vmatpush1.msra.mxu0 %v499
        %542 = vmatprep.subr.mxu0 0.0
        %543 = vmatpush2.msra.mxu0 0.0
        %544 = vmatprep.subr.mxu0 0.0
        %545 = vmatpush2.msra.mxu0 0.0
        %546 = vmatprep.subr.mxu0 0.0
        %547 = vmatpush2.msra.mxu0 0.0
        %548 = vmatprep.subr.mxu0 0.0
        %549 = vmatpush2.msra.mxu0 0.0
        %550 = vmatprep.subr.mxu0 0.0
        %551 = vmatpush2.msra.mxu0 0.0
        %552 = vmatprep.subr.mxu0 0.0
        %553 = vmatpush2.msra.mxu0 0.0
        %554 = vmatprep.subr.mxu0 0.0
        %555 = vmatpush2.msra.mxu0 0.0
        %556 = vmatprep.subr.mxu0 0.0
        %557 = vmatpush2.msra.mxu0 0.0
        %558 = vmatprep.subr.mxu0 0.0
        %559 = vmatpush2.msra.mxu0 0.0
        %560 = vmatprep.subr.mxu0 0.0
        %561 = vmatpush2.msra.mxu0 0.0
        %562 = vmatprep.subr.mxu0 0.0
        %563 = vmatpush2.msra.mxu0 0.0
        %564 = vmatprep.subr.mxu0 0.0
        %565 = vmatpush2.msra.mxu0 0.0
        %566 = vmatprep.subr.mxu0 0.0
        %567 = vmatpush2.msra.mxu0 0.0
        %568 = vmatprep.subr.mxu0 0.0
        %569 = vmatpush2.msra.mxu0 0.0
        %570 = vmatprep.subr.mxu0 0.0
        %571 = vmatpush2.msra.mxu0 0.0
        %572 = vmatprep.subr.mxu0 0.0
        %573 = vmatpush2.msra.mxu0 0.0
        %574 = vmatprep.mubr.f32.mxu0 0.0
        %575 = vmatmul.mubr.f32.gmra.mxu0 %v427
        %v576 = vpop.f32.mrf.mxu0
        %v577 = vadd.f32 %v508, %v576
        %v578 = vpop.f32.mrf.mxu0
        %579 = vdwg.mxu0
        %v580 = vmax.f32 %v577, 0.0
        %v581 = vld [vmem:[%s7] sm:$0xff]
        %v582 = vld [vmem:[%s8] sm:$0x1]
        %v584 = vlaneseq
        %v585 = vshrl.u32 %v584, 7
        %v586 = vsub.s32 0, %v585
        %v587 = vrot.slane %v582, %v586
        %vm589 = vcmask 64512
        %v591 = vsel %vm589, %v580, 0
        %593 = vmatprep.subr.mxu0 0.0
        %594 = vmatpush1.msra.mxu0 0.0
        %595 = vmatprep.subr.mxu0 0.0
        %596 = vmatpush1.msra.mxu0 0.0
        %597 = vmatprep.subr.mxu0 0.0
        %598 = vmatpush1.msra.mxu0 0.0
        %599 = vmatprep.subr.mxu0 0.0
        %600 = vmatpush1.msra.mxu0 0.0
        %601 = vmatprep.subr.mxu0 0.0
        %602 = vmatpush1.msra.mxu0 0.0
        %603 = vmatprep.subr.mxu0 0.0
        %604 = vmatpush1.msra.mxu0 0.0
        %605 = vmatprep.subr.mxu0 0.0
        %606 = vmatpush1.msra.mxu0 0.0
        %607 = vmatprep.subr.mxu0 0.0
        %608 = vmatpush1.msra.mxu0 0.0
        %609 = vmatprep.subr.mxu0 0.0
        %610 = vmatpush1.msra.mxu0 0.0
        %611 = vmatprep.subr.mxu0 0.0
        %612 = vmatpush1.msra.mxu0 0.0
        %613 = vmatprep.subr.mxu0 0.0
        %614 = vmatpush1.msra.mxu0 0.0
        %615 = vmatprep.subr.mxu0 0.0
        %616 = vmatpush1.msra.mxu0 0.0
        %617 = vmatprep.subr.mxu0 0.0
        %618 = vmatpush1.msra.mxu0 0.0
        %619 = vmatprep.subr.mxu0 0.0
        %620 = vmatpush1.msra.mxu0 0.0
        %621 = vmatprep.subr.mxu0 0.0
        %622 = vmatpush1.msra.mxu0 0.0
        %623 = vmatprep.subr.mxu0 0.0
        %624 = vmatpush1.msra.mxu0 %v581
        %625 = vmatprep.subr.mxu0 0.0
        %626 = vmatpush2.msra.mxu0 0.0
        %627 = vmatprep.subr.mxu0 0.0
        %628 = vmatpush2.msra.mxu0 0.0
        %629 = vmatprep.subr.mxu0 0.0
        %630 = vmatpush2.msra.mxu0 0.0
        %631 = vmatprep.subr.mxu0 0.0
        %632 = vmatpush2.msra.mxu0 0.0
        %633 = vmatprep.subr.mxu0 0.0
        %634 = vmatpush2.msra.mxu0 0.0
        %635 = vmatprep.subr.mxu0 0.0
        %636 = vmatpush2.msra.mxu0 0.0
        %637 = vmatprep.subr.mxu0 0.0
        %638 = vmatpush2.msra.mxu0 0.0
        %639 = vmatprep.subr.mxu0 0.0
        %640 = vmatpush2.msra.mxu0 0.0
        %641 = vmatprep.subr.mxu0 0.0
        %642 = vmatpush2.msra.mxu0 0.0
        %643 = vmatprep.subr.mxu0 0.0
        %644 = vmatpush2.msra.mxu0 0.0
        %645 = vmatprep.subr.mxu0 0.0
        %646 = vmatpush2.msra.mxu0 0.0
        %647 = vmatprep.subr.mxu0 0.0
        %648 = vmatpush2.msra.mxu0 0.0
        %649 = vmatprep.subr.mxu0 0.0
        %650 = vmatpush2.msra.mxu0 0.0
        %651 = vmatprep.subr.mxu0 0.0
        %652 = vmatpush2.msra.mxu0 0.0
        %653 = vmatprep.subr.mxu0 0.0
        %654 = vmatpush2.msra.mxu0 0.0
        %655 = vmatprep.subr.mxu0 0.0
        %656 = vmatpush2.msra.mxu0 0.0
        %657 = vmatprep.mubr.f32.mxu0 0.0
        %658 = vmatmul.mubr.f32.gmra.mxu0 %v591
        %v659 = vpop.f32.mrf.mxu0
        %v660 = vadd.f32 %v587, %v659
        %v661 = vpop.f32.mrf.mxu0
        %662 = vdwg.mxu0
        %v663 = vadd.f32 %v660, 1.0
        %665 = vrot.lane.b32.xlu0 %v496, 120
        %v666 = vpop.permute.xlu0 %665
        %668 = vrot.lane.b32.xlu0 %v496, 112
        %v669 = vpop.permute.xlu0 %668
        %671 = vrot.lane.b32.xlu0 %v496, 104
        %v672 = vpop.permute.xlu0 %671
        %v674 = vcombine.low %v496, %v669
        %v675 = vcombine.high %v496, %v669
        %v677 = vunpack.c.l.s4 1983009808
        %v678 = vunpack.c.0.s8 %v677
        %v679 = vlaneseq
        %v680 = vshrl.u32 %v679, 7
        %v681 = vsub.s32 %v678, %v680
        %v682 = vrot.slane %v674, %v681
        %v684 = vunpack.c.l.s4 1983009808
        %v685 = vunpack.c.0.s8 %v684
        %v686 = vlaneseq
        %v687 = vshrl.u32 %v686, 7
        %v688 = vsub.s32 %v685, %v687
        %v689 = vrot.slane %v675, %v688
        %v690 = vcombine.low %v666, %v672
        %v691 = vcombine.high %v666, %v672
        %v693 = vunpack.c.l.s4 1983009808
        %v694 = vunpack.c.0.s8 %v693
        %v695 = vlaneseq
        %v696 = vshrl.u32 %v695, 7
        %v697 = vsub.s32 %v694, %v696
        %v698 = vrot.slane %v690, %v697
        %v700 = vunpack.c.l.s4 1983009808
        %v701 = vunpack.c.0.s8 %v700
        %v702 = vlaneseq
        %v703 = vshrl.u32 %v702, 7
        %v704 = vsub.s32 %v701, %v703
        %v705 = vrot.slane %v691, %v704
        %v706 = vcombine.low %v682, %v698
        %v707 = vcombine.high %v682, %v698
        %v709 = vunpack.c.l.s4 1934713408
        %v710 = vunpack.c.0.s8 %v709
        %v711 = vlaneseq
        %v712 = vshrl.u32 %v711, 7
        %v713 = vsub.s32 %v710, %v712
        %v714 = vrot.slane %v706, %v713
        %v716 = vunpack.c.l.s4 1934713408
        %v717 = vunpack.c.0.s8 %v716
        %v718 = vlaneseq
        %v719 = vshrl.u32 %v718, 7
        %v720 = vsub.s32 %v717, %v719
        %v721 = vrot.slane %v707, %v720
        %v722 = vcombine.low %v689, %v705
        %v723 = vcombine.high %v689, %v705
        %v725 = vunpack.c.l.s4 1934713408
        %v726 = vunpack.c.0.s8 %v725
        %v727 = vlaneseq
        %v728 = vshrl.u32 %v727, 7
        %v729 = vsub.s32 %v726, %v728
        %v730 = vrot.slane %v722, %v729
        %v732 = vunpack.c.l.s4 1934713408
        %v733 = vunpack.c.0.s8 %v732
        %v734 = vlaneseq
        %v735 = vshrl.u32 %v734, 7
        %v736 = vsub.s32 %v733, %v735
        %v737 = vrot.slane %v723, %v736
        %v738 = vcombine.high %v714, 0.0
        %v739 = vcombine.high %v721, 0.0
        %v740 = vcombine.high %v730, 0.0
        %v741 = vcombine.high %v737, 0.0
        %v742 = vcombine.low %v714, %v721
        %v744 = vunpack.c.l.s4 1983009808
        %v745 = vunpack.c.0.s8 %v744
        %v746 = vlaneseq
        %v747 = vshrl.u32 %v746, 7
        %v748 = vsub.s32 %v745, %v747
        %v749 = vrot.slane %v742, %v748
        %v750 = vcombine.low %v738, %v739
        %v752 = vunpack.c.l.s4 1983009808
        %v753 = vunpack.c.0.s8 %v752
        %v754 = vlaneseq
        %v755 = vshrl.u32 %v754, 7
        %v756 = vsub.s32 %v753, %v755
        %v757 = vrot.slane %v750, %v756
        %v758 = vcombine.low %v730, %v737
        %v760 = vunpack.c.l.s4 1983009808
        %v761 = vunpack.c.0.s8 %v760
        %v762 = vlaneseq
        %v763 = vshrl.u32 %v762, 7
        %v764 = vsub.s32 %v761, %v763
        %v765 = vrot.slane %v758, %v764
        %v766 = vcombine.low %v740, %v741
        %v768 = vunpack.c.l.s4 1983009808
        %v769 = vunpack.c.0.s8 %v768
        %v770 = vlaneseq
        %v771 = vshrl.u32 %v770, 7
        %v772 = vsub.s32 %v769, %v771
        %v773 = vrot.slane %v766, %v772
        %v774 = vcombine.low %v749, %v757
        %v775 = vcombine.high %v749, %v757
        %v777 = vunpack.c.l.s4 1934713408
        %v778 = vunpack.c.0.s8 %v777
        %v779 = vlaneseq
        %v780 = vshrl.u32 %v779, 7
        %v781 = vsub.s32 %v778, %v780
        %v782 = vrot.slane %v774, %v781
        %v784 = vunpack.c.l.s4 1934713408
        %v785 = vunpack.c.0.s8 %v784
        %v786 = vlaneseq
        %v787 = vshrl.u32 %v786, 7
        %v788 = vsub.s32 %v785, %v787
        %v789 = vrot.slane %v775, %v788
        %v790 = vcombine.low %v765, %v773
        %v791 = vcombine.high %v765, %v773
        %v793 = vunpack.c.l.s4 1934713408
        %v794 = vunpack.c.0.s8 %v793
        %v795 = vlaneseq
        %v796 = vshrl.u32 %v795, 7
        %v797 = vsub.s32 %v794, %v796
        %v798 = vrot.slane %v790, %v797
        %v800 = vunpack.c.l.s4 1934713408
        %v801 = vunpack.c.0.s8 %v800
        %v802 = vlaneseq
        %v803 = vshrl.u32 %v802, 7
        %v804 = vsub.s32 %v801, %v803
        %v805 = vrot.slane %v791, %v804
        %v806 = vcombine.low %v782, %v798
        %v807 = vcombine.high %v782, %v798
        %v808 = vcombine.low %v789, %v805
        %v809 = vcombine.high %v789, %v805
        %810 = vrot.lane.b32.xlu0 %v496, 96
        %v811 = vpop.permute.xlu0 %810
        %812 = vrot.lane.b32.xlu0 %v666, 96
        %v813 = vpop.permute.xlu0 %812
        %814 = vrot.lane.b32.xlu0 %v669, 96
        %v815 = vpop.permute.xlu0 %814
        %816 = vrot.lane.b32.xlu0 %v672, 96
        %v817 = vpop.permute.xlu0 %816
        %v822 = vcombine.low %v811, %v815
        %v823 = vcombine.high %v811, %v815
        %v825 = vunpack.c.l.s4 1983009808
        %v826 = vunpack.c.0.s8 %v825
        %v827 = vlaneseq
        %v828 = vshrl.u32 %v827, 7
        %v829 = vsub.s32 %v826, %v828
        %v830 = vrot.slane %v822, %v829
        %v832 = vunpack.c.l.s4 1983009808
        %v833 = vunpack.c.0.s8 %v832
        %v834 = vlaneseq
        %v835 = vshrl.u32 %v834, 7
        %v836 = vsub.s32 %v833, %v835
        %v837 = vrot.slane %v823, %v836
        %v838 = vcombine.low %v813, %v817
        %v839 = vcombine.high %v813, %v817
        %v841 = vunpack.c.l.s4 1983009808
        %v842 = vunpack.c.0.s8 %v841
        %v843 = vlaneseq
        %v844 = vshrl.u32 %v843, 7
        %v845 = vsub.s32 %v842, %v844
        %v846 = vrot.slane %v838, %v845
        %v848 = vunpack.c.l.s4 1983009808
        %v849 = vunpack.c.0.s8 %v848
        %v850 = vlaneseq
        %v851 = vshrl.u32 %v850, 7
        %v852 = vsub.s32 %v849, %v851
        %v853 = vrot.slane %v839, %v852
        %v854 = vcombine.low %v830, %v846
        %v855 = vcombine.high %v830, %v846
        %v857 = vunpack.c.l.s4 1934713408
        %v858 = vunpack.c.0.s8 %v857
        %v859 = vlaneseq
        %v860 = vshrl.u32 %v859, 7
        %v861 = vsub.s32 %v858, %v860
        %v862 = vrot.slane %v854, %v861
        %v864 = vunpack.c.l.s4 1934713408
        %v865 = vunpack.c.0.s8 %v864
        %v866 = vlaneseq
        %v867 = vshrl.u32 %v866, 7
        %v868 = vsub.s32 %v865, %v867
        %v869 = vrot.slane %v855, %v868
        %v870 = vcombine.low %v837, %v853
        %v871 = vcombine.high %v837, %v853
        %v873 = vunpack.c.l.s4 1934713408
        %v874 = vunpack.c.0.s8 %v873
        %v875 = vlaneseq
        %v876 = vshrl.u32 %v875, 7
        %v877 = vsub.s32 %v874, %v876
        %v878 = vrot.slane %v870, %v877
        %v880 = vunpack.c.l.s4 1934713408
        %v881 = vunpack.c.0.s8 %v880
        %v882 = vlaneseq
        %v883 = vshrl.u32 %v882, 7
        %v884 = vsub.s32 %v881, %v883
        %v885 = vrot.slane %v871, %v884
        %v886 = vcombine.high %v862, 0.0
        %v887 = vcombine.high %v869, 0.0
        %v888 = vcombine.high %v878, 0.0
        %v889 = vcombine.high %v885, 0.0
        %v890 = vcombine.low %v862, %v869
        %v892 = vunpack.c.l.s4 1983009808
        %v893 = vunpack.c.0.s8 %v892
        %v894 = vlaneseq
        %v895 = vshrl.u32 %v894, 7
        %v896 = vsub.s32 %v893, %v895
        %v897 = vrot.slane %v890, %v896
        %v898 = vcombine.low %v886, %v887
        %v900 = vunpack.c.l.s4 1983009808
        %v901 = vunpack.c.0.s8 %v900
        %v902 = vlaneseq
        %v903 = vshrl.u32 %v902, 7
        %v904 = vsub.s32 %v901, %v903
        %v905 = vrot.slane %v898, %v904
        %v906 = vcombine.low %v878, %v885
        %v908 = vunpack.c.l.s4 1983009808
        %v909 = vunpack.c.0.s8 %v908
        %v910 = vlaneseq
        %v911 = vshrl.u32 %v910, 7
        %v912 = vsub.s32 %v909, %v911
        %v913 = vrot.slane %v906, %v912
        %v914 = vcombine.low %v888, %v889
        %v916 = vunpack.c.l.s4 1983009808
        %v917 = vunpack.c.0.s8 %v916
        %v918 = vlaneseq
        %v919 = vshrl.u32 %v918, 7
        %v920 = vsub.s32 %v917, %v919
        %v921 = vrot.slane %v914, %v920
        %v922 = vcombine.low %v897, %v905
        %v923 = vcombine.high %v897, %v905
        %v925 = vunpack.c.l.s4 1934713408
        %v926 = vunpack.c.0.s8 %v925
        %v927 = vlaneseq
        %v928 = vshrl.u32 %v927, 7
        %v929 = vsub.s32 %v926, %v928
        %v930 = vrot.slane %v922, %v929
        %v932 = vunpack.c.l.s4 1934713408
        %v933 = vunpack.c.0.s8 %v932
        %v934 = vlaneseq
        %v935 = vshrl.u32 %v934, 7
        %v936 = vsub.s32 %v933, %v935
        %v937 = vrot.slane %v923, %v936
        %v938 = vcombine.low %v913, %v921
        %v939 = vcombine.high %v913, %v921
        %v941 = vunpack.c.l.s4 1934713408
        %v942 = vunpack.c.0.s8 %v941
        %v943 = vlaneseq
        %v944 = vshrl.u32 %v943, 7
        %v945 = vsub.s32 %v942, %v944
        %v946 = vrot.slane %v938, %v945
        %v948 = vunpack.c.l.s4 1934713408
        %v949 = vunpack.c.0.s8 %v948
        %v950 = vlaneseq
        %v951 = vshrl.u32 %v950, 7
        %v952 = vsub.s32 %v949, %v951
        %v953 = vrot.slane %v939, %v952
        %v954 = vcombine.low %v930, %v946
        %v955 = vcombine.high %v930, %v946
        %v956 = vcombine.low %v937, %v953
        %v957 = vcombine.high %v937, %v953
        %958 = vrot.lane.b32.xlu0 %v496, 64
        %v959 = vpop.permute.xlu0 %958
        %960 = vrot.lane.b32.xlu0 %v666, 64
        %v961 = vpop.permute.xlu0 %960
        %962 = vrot.lane.b32.xlu0 %v669, 64
        %v963 = vpop.permute.xlu0 %962
        %964 = vrot.lane.b32.xlu0 %v672, 64
        %v965 = vpop.permute.xlu0 %964
        %v970 = vcombine.low %v959, %v963
        %v971 = vcombine.high %v959, %v963
        %v973 = vunpack.c.l.s4 1983009808
        %v974 = vunpack.c.0.s8 %v973
        %v975 = vlaneseq
        %v976 = vshrl.u32 %v975, 7
        %v977 = vsub.s32 %v974, %v976
        %v978 = vrot.slane %v970, %v977
        %v980 = vunpack.c.l.s4 1983009808
        %v981 = vunpack.c.0.s8 %v980
        %v982 = vlaneseq
        %v983 = vshrl.u32 %v982, 7
        %v984 = vsub.s32 %v981, %v983
        %v985 = vrot.slane %v971, %v984
        %v986 = vcombine.low %v961, %v965
        %v987 = vcombine.high %v961, %v965
        %v989 = vunpack.c.l.s4 1983009808
        %v990 = vunpack.c.0.s8 %v989
        %v991 = vlaneseq
        %v992 = vshrl.u32 %v991, 7
        %v993 = vsub.s32 %v990, %v992
        %v994 = vrot.slane %v986, %v993
        %v996 = vunpack.c.l.s4 1983009808
        %v997 = vunpack.c.0.s8 %v996
        %v998 = vlaneseq
        %v999 = vshrl.u32 %v998, 7
        %v1000 = vsub.s32 %v997, %v999
        %v1001 = vrot.slane %v987, %v1000
        %v1002 = vcombine.low %v978, %v994
        %v1003 = vcombine.high %v978, %v994
        %v1005 = vunpack.c.l.s4 1934713408
        %v1006 = vunpack.c.0.s8 %v1005
        %v1007 = vlaneseq
        %v1008 = vshrl.u32 %v1007, 7
        %v1009 = vsub.s32 %v1006, %v1008
        %v1010 = vrot.slane %v1002, %v1009
        %v1012 = vunpack.c.l.s4 1934713408
        %v1013 = vunpack.c.0.s8 %v1012
        %v1014 = vlaneseq
        %v1015 = vshrl.u32 %v1014, 7
        %v1016 = vsub.s32 %v1013, %v1015
        %v1017 = vrot.slane %v1003, %v1016
        %v1018 = vcombine.low %v985, %v1001
        %v1019 = vcombine.high %v985, %v1001
        %v1021 = vunpack.c.l.s4 1934713408
        %v1022 = vunpack.c.0.s8 %v1021
        %v1023 = vlaneseq
        %v1024 = vshrl.u32 %v1023, 7
        %v1025 = vsub.s32 %v1022, %v1024
        %v1026 = vrot.slane %v1018, %v1025
        %v1028 = vunpack.c.l.s4 1934713408
        %v1029 = vunpack.c.0.s8 %v1028
        %v1030 = vlaneseq
        %v1031 = vshrl.u32 %v1030, 7
        %v1032 = vsub.s32 %v1029, %v1031
        %v1033 = vrot.slane %v1019, %v1032
        %v1034 = vcombine.high %v1010, 0.0
        %v1035 = vcombine.high %v1017, 0.0
        %v1036 = vcombine.high %v1026, 0.0
        %v1037 = vcombine.high %v1033, 0.0
        %v1038 = vcombine.low %v1010, %v1017
        %v1040 = vunpack.c.l.s4 1983009808
        %v1041 = vunpack.c.0.s8 %v1040
        %v1042 = vlaneseq
        %v1043 = vshrl.u32 %v1042, 7
        %v1044 = vsub.s32 %v1041, %v1043
        %v1045 = vrot.slane %v1038, %v1044
        %v1046 = vcombine.low %v1034, %v1035
        %v1048 = vunpack.c.l.s4 1983009808
        %v1049 = vunpack.c.0.s8 %v1048
        %v1050 = vlaneseq
        %v1051 = vshrl.u32 %v1050, 7
        %v1052 = vsub.s32 %v1049, %v1051
        %v1053 = vrot.slane %v1046, %v1052
        %v1054 = vcombine.low %v1026, %v1033
        %v1056 = vunpack.c.l.s4 1983009808
        %v1057 = vunpack.c.0.s8 %v1056
        %v1058 = vlaneseq
        %v1059 = vshrl.u32 %v1058, 7
        %v1060 = vsub.s32 %v1057, %v1059
        %v1061 = vrot.slane %v1054, %v1060
        %v1062 = vcombine.low %v1036, %v1037
        %v1064 = vunpack.c.l.s4 1983009808
        %v1065 = vunpack.c.0.s8 %v1064
        %v1066 = vlaneseq
        %v1067 = vshrl.u32 %v1066, 7
        %v1068 = vsub.s32 %v1065, %v1067
        %v1069 = vrot.slane %v1062, %v1068
        %v1070 = vcombine.low %v1045, %v1053
        %v1071 = vcombine.high %v1045, %v1053
        %v1073 = vunpack.c.l.s4 1934713408
        %v1074 = vunpack.c.0.s8 %v1073
        %v1075 = vlaneseq
        %v1076 = vshrl.u32 %v1075, 7
        %v1077 = vsub.s32 %v1074, %v1076
        %v1078 = vrot.slane %v1070, %v1077
        %v1080 = vunpack.c.l.s4 1934713408
        %v1081 = vunpack.c.0.s8 %v1080
        %v1082 = vlaneseq
        %v1083 = vshrl.u32 %v1082, 7
        %v1084 = vsub.s32 %v1081, %v1083
        %v1085 = vrot.slane %v1071, %v1084
        %v1086 = vcombine.low %v1061, %v1069
        %v1087 = vcombine.high %v1061, %v1069
        %v1089 = vunpack.c.l.s4 1934713408
        %v1090 = vunpack.c.0.s8 %v1089
        %v1091 = vlaneseq
        %v1092 = vshrl.u32 %v1091, 7
        %v1093 = vsub.s32 %v1090, %v1092
        %v1094 = vrot.slane %v1086, %v1093
        %v1096 = vunpack.c.l.s4 1934713408
        %v1097 = vunpack.c.0.s8 %v1096
        %v1098 = vlaneseq
        %v1099 = vshrl.u32 %v1098, 7
        %v1100 = vsub.s32 %v1097, %v1099
        %v1101 = vrot.slane %v1087, %v1100
        %v1102 = vcombine.low %v1078, %v1094
        %v1103 = vcombine.high %v1078, %v1094
        %v1104 = vcombine.low %v1085, %v1101
        %v1105 = vcombine.high %v1085, %v1101
        %v1107 = vsel %vm589, %v806, 0
        %v1110 = vsel %vm589, %v954, 0
        %1112 = vmatprep.subr.mxu0 0.0
        %1113 = vmatpush1.xpose.msra.mxu0 0.0
        %1114 = vmatprep.subr.mxu0 0.0
        %1115 = vmatpush1.xpose.msra.mxu0 0.0
        %1116 = vmatprep.subr.mxu0 0.0
        %1117 = vmatpush1.xpose.msra.mxu0 0.0
        %1118 = vmatprep.subr.mxu0 0.0
        %1119 = vmatpush1.xpose.msra.mxu0 0.0
        %1120 = vmatprep.subr.mxu0 0.0
        %1121 = vmatpush1.xpose.msra.mxu0 0.0
        %1122 = vmatprep.subr.mxu0 0.0
        %1123 = vmatpush1.xpose.msra.mxu0 0.0
        %1124 = vmatprep.subr.mxu0 0.0
        %1125 = vmatpush1.xpose.msra.mxu0 0.0
        %1126 = vmatprep.subr.mxu0 0.0
        %1127 = vmatpush1.xpose.msra.mxu0 0.0
        %1128 = vmatprep.subr.mxu0 0.0
        %1129 = vmatpush1.xpose.msra.mxu0 0.0
        %1130 = vmatprep.subr.mxu0 0.0
        %1131 = vmatpush1.xpose.msra.mxu0 0.0
        %1132 = vmatprep.subr.mxu0 0.0
        %1133 = vmatpush1.xpose.msra.mxu0 0.0
        %1134 = vmatprep.subr.mxu0 0.0
        %1135 = vmatpush1.xpose.msra.mxu0 0.0
        %1136 = vmatprep.subr.mxu0 0.0
        %1137 = vmatpush1.xpose.msra.mxu0 0.0
        %1138 = vmatprep.subr.mxu0 0.0
        %1139 = vmatpush1.xpose.msra.mxu0 0.0
        %1140 = vmatprep.subr.mxu0 0.0
        %1141 = vmatpush1.xpose.msra.mxu0 0.0
        %1142 = vmatprep.subr.mxu0 0.0
        %1143 = vmatpush1.xpose.msra.mxu0 %v1110
        %1144 = vmatprep.subr.mxu0 0.0
        %1145 = vmatpush2.xpose.msra.mxu0 0.0
        %1146 = vmatprep.subr.mxu0 0.0
        %1147 = vmatpush2.xpose.msra.mxu0 0.0
        %1148 = vmatprep.subr.mxu0 0.0
        %1149 = vmatpush2.xpose.msra.mxu0 0.0
        %1150 = vmatprep.subr.mxu0 0.0
        %1151 = vmatpush2.xpose.msra.mxu0 0.0
        %1152 = vmatprep.subr.mxu0 0.0
        %1153 = vmatpush2.xpose.msra.mxu0 0.0
        %1154 = vmatprep.subr.mxu0 0.0
        %1155 = vmatpush2.xpose.msra.mxu0 0.0
        %1156 = vmatprep.subr.mxu0 0.0
        %1157 = vmatpush2.xpose.msra.mxu0 0.0
        %1158 = vmatprep.subr.mxu0 0.0
        %1159 = vmatpush2.xpose.msra.mxu0 0.0
        %1160 = vmatprep.subr.mxu0 0.0
        %1161 = vmatpush2.xpose.msra.mxu0 0.0
        %1162 = vmatprep.subr.mxu0 0.0
        %1163 = vmatpush2.xpose.msra.mxu0 0.0
        %1164 = vmatprep.subr.mxu0 0.0
        %1165 = vmatpush2.xpose.msra.mxu0 0.0
        %1166 = vmatprep.subr.mxu0 0.0
        %1167 = vmatpush2.xpose.msra.mxu0 0.0
        %1168 = vmatprep.subr.mxu0 0.0
        %1169 = vmatpush2.xpose.msra.mxu0 0.0
        %1170 = vmatprep.subr.mxu0 0.0
        %1171 = vmatpush2.xpose.msra.mxu0 0.0
        %1172 = vmatprep.subr.mxu0 0.0
        %1173 = vmatpush2.xpose.msra.mxu0 0.0
        %1174 = vmatprep.subr.mxu0 0.0
        %1175 = vmatpush2.xpose.msra.mxu0 0.0
        %1176 = vmatprep.mubr.f32.mxu0 0.0
        %1177 = vmatmul.mubr.f32.gmra.mxu0 %v1107
        %v1178 = vpop.f32.mrf.mxu0
        %v1179 = vadd.f32 0.0, %v1178
        %v1180 = vpop.f32.mrf.mxu0
        %1181 = vdwg.mxu0
        %v1183 = vsel %vm589, %v807, 0
        %v1186 = vsel %vm589, %v955, 0
        %1188 = vmatprep.subr.mxu0 0.0
        %1189 = vmatpush1.xpose.msra.mxu0 0.0
        %1190 = vmatprep.subr.mxu0 0.0
        %1191 = vmatpush1.xpose.msra.mxu0 0.0
        %1192 = vmatprep.subr.mxu0 0.0
        %1193 = vmatpush1.xpose.msra.mxu0 0.0
        %1194 = vmatprep.subr.mxu0 0.0
        %1195 = vmatpush1.xpose.msra.mxu0 0.0
        %1196 = vmatprep.subr.mxu0 0.0
        %1197 = vmatpush1.xpose.msra.mxu0 0.0
        %1198 = vmatprep.subr.mxu0 0.0
        %1199 = vmatpush1.xpose.msra.mxu0 0.0
        %1200 = vmatprep.subr.mxu0 0.0
        %1201 = vmatpush1.xpose.msra.mxu0 0.0
        %1202 = vmatprep.subr.mxu0 0.0
        %1203 = vmatpush1.xpose.msra.mxu0 0.0
        %1204 = vmatprep.subr.mxu0 0.0
        %1205 = vmatpush1.xpose.msra.mxu0 0.0
        %1206 = vmatprep.subr.mxu0 0.0
        %1207 = vmatpush1.xpose.msra.mxu0 0.0
        %1208 = vmatprep.subr.mxu0 0.0
        %1209 = vmatpush1.xpose.msra.mxu0 0.0
        %1210 = vmatprep.subr.mxu0 0.0
        %1211 = vmatpush1.xpose.msra.mxu0 0.0
        %1212 = vmatprep.subr.mxu0 0.0
        %1213 = vmatpush1.xpose.msra.mxu0 0.0
        %1214 = vmatprep.subr.mxu0 0.0
        %1215 = vmatpush1.xpose.msra.mxu0 0.0
        %1216 = vmatprep.subr.mxu0 0.0
        %1217 = vmatpush1.xpose.msra.mxu0 0.0
        %1218 = vmatprep.subr.mxu0 0.0
        %1219 = vmatpush1.xpose.msra.mxu0 %v1186
        %1220 = vmatprep.subr.mxu0 0.0
        %1221 = vmatpush2.xpose.msra.mxu0 0.0
        %1222 = vmatprep.subr.mxu0 0.0
        %1223 = vmatpush2.xpose.msra.mxu0 0.0
        %1224 = vmatprep.subr.mxu0 0.0
        %1225 = vmatpush2.xpose.msra.mxu0 0.0
        %1226 = vmatprep.subr.mxu0 0.0
        %1227 = vmatpush2.xpose.msra.mxu0 0.0
        %1228 = vmatprep.subr.mxu0 0.0
        %1229 = vmatpush2.xpose.msra.mxu0 0.0
        %1230 = vmatprep.subr.mxu0 0.0
        %1231 = vmatpush2.xpose.msra.mxu0 0.0
        %1232 = vmatprep.subr.mxu0 0.0
        %1233 = vmatpush2.xpose.msra.mxu0 0.0
        %1234 = vmatprep.subr.mxu0 0.0
        %1235 = vmatpush2.xpose.msra.mxu0 0.0
        %1236 = vmatprep.subr.mxu0 0.0
        %1237 = vmatpush2.xpose.msra.mxu0 0.0
        %1238 = vmatprep.subr.mxu0 0.0
        %1239 = vmatpush2.xpose.msra.mxu0 0.0
        %1240 = vmatprep.subr.mxu0 0.0
        %1241 = vmatpush2.xpose.msra.mxu0 0.0
        %1242 = vmatprep.subr.mxu0 0.0
        %1243 = vmatpush2.xpose.msra.mxu0 0.0
        %1244 = vmatprep.subr.mxu0 0.0
        %1245 = vmatpush2.xpose.msra.mxu0 0.0
        %1246 = vmatprep.subr.mxu0 0.0
        %1247 = vmatpush2.xpose.msra.mxu0 0.0
        %1248 = vmatprep.subr.mxu0 0.0
        %1249 = vmatpush2.xpose.msra.mxu0 0.0
        %1250 = vmatprep.subr.mxu0 0.0
        %1251 = vmatpush2.xpose.msra.mxu0 0.0
        %1252 = vmatprep.mubr.f32.mxu0 0.0
        %1253 = vmatmul.mubr.f32.gmra.mxu0 %v1183
        %v1254 = vpop.f32.mrf.mxu0
        %v1255 = vadd.f32 0.0, %v1254
        %v1256 = vpop.f32.mrf.mxu0
        %1257 = vdwg.mxu0
        %v1259 = vsel %vm589, %v808, 0
        %v1262 = vsel %vm589, %v956, 0
        %1264 = vmatprep.subr.mxu0 0.0
        %1265 = vmatpush1.xpose.msra.mxu0 0.0
        %1266 = vmatprep.subr.mxu0 0.0
        %1267 = vmatpush1.xpose.msra.mxu0 0.0
        %1268 = vmatprep.subr.mxu0 0.0
        %1269 = vmatpush1.xpose.msra.mxu0 0.0
        %1270 = vmatprep.subr.mxu0 0.0
        %1271 = vmatpush1.xpose.msra.mxu0 0.0
        %1272 = vmatprep.subr.mxu0 0.0
        %1273 = vmatpush1.xpose.msra.mxu0 0.0
        %1274 = vmatprep.subr.mxu0 0.0
        %1275 = vmatpush1.xpose.msra.mxu0 0.0
        %1276 = vmatprep.subr.mxu0 0.0
        %1277 = vmatpush1.xpose.msra.mxu0 0.0
        %1278 = vmatprep.subr.mxu0 0.0
        %1279 = vmatpush1.xpose.msra.mxu0 0.0
        %1280 = vmatprep.subr.mxu0 0.0
        %1281 = vmatpush1.xpose.msra.mxu0 0.0
        %1282 = vmatprep.subr.mxu0 0.0
        %1283 = vmatpush1.xpose.msra.mxu0 0.0
        %1284 = vmatprep.subr.mxu0 0.0
        %1285 = vmatpush1.xpose.msra.mxu0 0.0
        %1286 = vmatprep.subr.mxu0 0.0
        %1287 = vmatpush1.xpose.msra.mxu0 0.0
        %1288 = vmatprep.subr.mxu0 0.0
        %1289 = vmatpush1.xpose.msra.mxu0 0.0
        %1290 = vmatprep.subr.mxu0 0.0
        %1291 = vmatpush1.xpose.msra.mxu0 0.0
        %1292 = vmatprep.subr.mxu0 0.0
        %1293 = vmatpush1.xpose.msra.mxu0 0.0
        %1294 = vmatprep.subr.mxu0 0.0
        %1295 = vmatpush1.xpose.msra.mxu0 %v1262
        %1296 = vmatprep.subr.mxu0 0.0
        %1297 = vmatpush2.xpose.msra.mxu0 0.0
        %1298 = vmatprep.subr.mxu0 0.0
        %1299 = vmatpush2.xpose.msra.mxu0 0.0
        %1300 = vmatprep.subr.mxu0 0.0
        %1301 = vmatpush2.xpose.msra.mxu0 0.0
        %1302 = vmatprep.subr.mxu0 0.0
        %1303 = vmatpush2.xpose.msra.mxu0 0.0
        %1304 = vmatprep.subr.mxu0 0.0
        %1305 = vmatpush2.xpose.msra.mxu0 0.0
        %1306 = vmatprep.subr.mxu0 0.0
        %1307 = vmatpush2.xpose.msra.mxu0 0.0
        %1308 = vmatprep.subr.mxu0 0.0
        %1309 = vmatpush2.xpose.msra.mxu0 0.0
        %1310 = vmatprep.subr.mxu0 0.0
        %1311 = vmatpush2.xpose.msra.mxu0 0.0
        %1312 = vmatprep.subr.mxu0 0.0
        %1313 = vmatpush2.xpose.msra.mxu0 0.0
        %1314 = vmatprep.subr.mxu0 0.0
        %1315 = vmatpush2.xpose.msra.mxu0 0.0
        %1316 = vmatprep.subr.mxu0 0.0
        %1317 = vmatpush2.xpose.msra.mxu0 0.0
        %1318 = vmatprep.subr.mxu0 0.0
        %1319 = vmatpush2.xpose.msra.mxu0 0.0
        %1320 = vmatprep.subr.mxu0 0.0
        %1321 = vmatpush2.xpose.msra.mxu0 0.0
        %1322 = vmatprep.subr.mxu0 0.0
        %1323 = vmatpush2.xpose.msra.mxu0 0.0
        %1324 = vmatprep.subr.mxu0 0.0
        %1325 = vmatpush2.xpose.msra.mxu0 0.0
        %1326 = vmatprep.subr.mxu0 0.0
        %1327 = vmatpush2.xpose.msra.mxu0 0.0
        %1328 = vmatprep.mubr.f32.mxu0 0.0
        %1329 = vmatmul.mubr.f32.gmra.mxu0 %v1259
        %v1330 = vpop.f32.mrf.mxu0
        %v1331 = vadd.f32 0.0, %v1330
        %v1332 = vpop.f32.mrf.mxu0
        %1333 = vdwg.mxu0
        %v1335 = vsel %vm589, %v809, 0
        %v1338 = vsel %vm589, %v957, 0
        %1340 = vmatprep.subr.mxu0 0.0
        %1341 = vmatpush1.xpose.msra.mxu0 0.0
        %1342 = vmatprep.subr.mxu0 0.0
        %1343 = vmatpush1.xpose.msra.mxu0 0.0
        %1344 = vmatprep.subr.mxu0 0.0
        %1345 = vmatpush1.xpose.msra.mxu0 0.0
        %1346 = vmatprep.subr.mxu0 0.0
        %1347 = vmatpush1.xpose.msra.mxu0 0.0
        %1348 = vmatprep.subr.mxu0 0.0
        %1349 = vmatpush1.xpose.msra.mxu0 0.0
        %1350 = vmatprep.subr.mxu0 0.0
        %1351 = vmatpush1.xpose.msra.mxu0 0.0
        %1352 = vmatprep.subr.mxu0 0.0
        %1353 = vmatpush1.xpose.msra.mxu0 0.0
        %1354 = vmatprep.subr.mxu0 0.0
        %1355 = vmatpush1.xpose.msra.mxu0 0.0
        %1356 = vmatprep.subr.mxu0 0.0
        %1357 = vmatpush1.xpose.msra.mxu0 0.0
        %1358 = vmatprep.subr.mxu0 0.0
        %1359 = vmatpush1.xpose.msra.mxu0 0.0
        %1360 = vmatprep.subr.mxu0 0.0
        %1361 = vmatpush1.xpose.msra.mxu0 0.0
        %1362 = vmatprep.subr.mxu0 0.0
        %1363 = vmatpush1.xpose.msra.mxu0 0.0
        %1364 = vmatprep.subr.mxu0 0.0
        %1365 = vmatpush1.xpose.msra.mxu0 0.0
        %1366 = vmatprep.subr.mxu0 0.0
        %1367 = vmatpush1.xpose.msra.mxu0 0.0
        %1368 = vmatprep.subr.mxu0 0.0
        %1369 = vmatpush1.xpose.msra.mxu0 0.0
        %1370 = vmatprep.subr.mxu0 0.0
        %1371 = vmatpush1.xpose.msra.mxu0 %v1338
        %1372 = vmatprep.subr.mxu0 0.0
        %1373 = vmatpush2.xpose.msra.mxu0 0.0
        %1374 = vmatprep.subr.mxu0 0.0
        %1375 = vmatpush2.xpose.msra.mxu0 0.0
        %1376 = vmatprep.subr.mxu0 0.0
        %1377 = vmatpush2.xpose.msra.mxu0 0.0
        %1378 = vmatprep.subr.mxu0 0.0
        %1379 = vmatpush2.xpose.msra.mxu0 0.0
        %1380 = vmatprep.subr.mxu0 0.0
        %1381 = vmatpush2.xpose.msra.mxu0 0.0
        %1382 = vmatprep.subr.mxu0 0.0
        %1383 = vmatpush2.xpose.msra.mxu0 0.0
        %1384 = vmatprep.subr.mxu0 0.0
        %1385 = vmatpush2.xpose.msra.mxu0 0.0
        %1386 = vmatprep.subr.mxu0 0.0
        %1387 = vmatpush2.xpose.msra.mxu0 0.0
        %1388 = vmatprep.subr.mxu0 0.0
        %1389 = vmatpush2.xpose.msra.mxu0 0.0
        %1390 = vmatprep.subr.mxu0 0.0
        %1391 = vmatpush2.xpose.msra.mxu0 0.0
        %1392 = vmatprep.subr.mxu0 0.0
        %1393 = vmatpush2.xpose.msra.mxu0 0.0
        %1394 = vmatprep.subr.mxu0 0.0
        %1395 = vmatpush2.xpose.msra.mxu0 0.0
        %1396 = vmatprep.subr.mxu0 0.0
        %1397 = vmatpush2.xpose.msra.mxu0 0.0
        %1398 = vmatprep.subr.mxu0 0.0
        %1399 = vmatpush2.xpose.msra.mxu0 0.0
        %1400 = vmatprep.subr.mxu0 0.0
        %1401 = vmatpush2.xpose.msra.mxu0 0.0
        %1402 = vmatprep.subr.mxu0 0.0
        %1403 = vmatpush2.xpose.msra.mxu0 0.0
        %1404 = vmatprep.mubr.f32.mxu0 0.0
        %1405 = vmatmul.mubr.f32.gmra.mxu0 %v1335
        %v1406 = vpop.f32.mrf.mxu0
        %v1407 = vadd.f32 0.0, %v1406
        %v1408 = vpop.f32.mrf.mxu0
        %1409 = vdwg.mxu0
        %v1410 = vsel %vm589, %v1179, -inf
        %1411 = vmax.xlane.f32.xlu0 %v1410
        %v1412 = vpop.xlane.xlu0 %1411
        %v1413 = vsel %vm589, %v1255, -inf
        %1414 = vmax.xlane.f32.xlu0 %v1413
        %v1415 = vpop.xlane.xlu0 %1414
        %v1416 = vsel %vm589, %v1331, -inf
        %1417 = vmax.xlane.f32.xlu0 %v1416
        %v1418 = vpop.xlane.xlu0 %1417
        %v1419 = vsel %vm589, %v1407, -inf
        %1420 = vmax.xlane.f32.xlu0 %v1419
        %v1421 = vpop.xlane.xlu0 %1420
        %v1422 = vsub.f32 %v1179, %v1412
        %v1423 = vsub.f32 %v1255, %v1415
        %v1424 = vsub.f32 %v1331, %v1418
        %v1425 = vsub.f32 %v1407, %v1421
        %v1426 = vmul.f32 %v1422, 1.442695
        %v1427 = vpow.pop %v1426
        %v1428 = vmul.f32 %v1423, 1.442695
        %v1429 = vpow.pop %v1428
        %v1430 = vmul.f32 %v1424, 1.442695
        %v1431 = vpow.pop %v1430
        %v1432 = vmul.f32 %v1425, 1.442695
        %v1433 = vpow.pop %v1432
        %v1434 = vsel %vm589, %v1427, 0.0
        %1435 = vadd.xlane.f32.xlu0 %v1434
        %v1436 = vpop.xlane.xlu0 %1435
        %v1437 = vsel %vm589, %v1429, 0.0
        %1438 = vadd.xlane.f32.xlu0 %v1437
        %v1439 = vpop.xlane.xlu0 %1438
        %v1440 = vsel %vm589, %v1431, 0.0
        %1441 = vadd.xlane.f32.xlu0 %v1440
        %v1442 = vpop.xlane.xlu0 %1441
        %v1443 = vsel %vm589, %v1433, 0.0
        %1444 = vadd.xlane.f32.xlu0 %v1443
        %v1445 = vpop.xlane.xlu0 %1444
        %v1446 = vrcp.pop %v1436
        %v1447 = vmul.f32 %v1427, %v1446
        %v1448 = vrcp.pop %v1439
        %v1449 = vmul.f32 %v1429, %v1448
        %v1450 = vrcp.pop %v1442
        %v1451 = vmul.f32 %v1431, %v1450
        %v1452 = vrcp.pop %v1445
        %v1453 = vmul.f32 %v1433, %v1452
        %1454 = vst.msk [vmem:[%s412] sm:$0xff] %vm589, %v1447
        %1455 = vst.msk [vmem:[%s412 + $0x8] sm:$0xff] %vm589, %v1449
        %1456 = vst.msk [vmem:[%s412 + $0x10] sm:$0xff] %vm589, %v1451
        %1457 = vst.msk [vmem:[%s412 + $0x18] sm:$0xff] %vm589, %v1453
        %v1459 = vsel %vm589, %v1447, 0
        %1461 = vmatprep.subr.mxu0 0.0
        %1462 = vmatpush1.msra.mxu0 0.0
        %1463 = vmatprep.subr.mxu0 0.0
        %1464 = vmatpush1.msra.mxu0 0.0
        %1465 = vmatprep.subr.mxu0 0.0
        %1466 = vmatpush1.msra.mxu0 0.0
        %1467 = vmatprep.subr.mxu0 0.0
        %1468 = vmatpush1.msra.mxu0 0.0
        %1469 = vmatprep.subr.mxu0 0.0
        %1470 = vmatpush1.msra.mxu0 0.0
        %1471 = vmatprep.subr.mxu0 0.0
        %1472 = vmatpush1.msra.mxu0 0.0
        %1473 = vmatprep.subr.mxu0 0.0
        %1474 = vmatpush1.msra.mxu0 0.0
        %1475 = vmatprep.subr.mxu0 0.0
        %1476 = vmatpush1.msra.mxu0 0.0
        %1477 = vmatprep.subr.mxu0 0.0
        %1478 = vmatpush1.msra.mxu0 0.0
        %1479 = vmatprep.subr.mxu0 0.0
        %1480 = vmatpush1.msra.mxu0 0.0
        %1481 = vmatprep.subr.mxu0 0.0
        %1482 = vmatpush1.msra.mxu0 0.0
        %1483 = vmatprep.subr.mxu0 0.0
        %1484 = vmatpush1.msra.mxu0 0.0
        %1485 = vmatprep.subr.mxu0 0.0
        %1486 = vmatpush1.msra.mxu0 0.0
        %1487 = vmatprep.subr.mxu0 0.0
        %1488 = vmatpush1.msra.mxu0 0.0
        %1489 = vmatprep.subr.mxu0 0.0
        %1490 = vmatpush1.msra.mxu0 0.0
        %1491 = vmatprep.subr.mxu0 0.0
        %1492 = vmatpush1.msra.mxu0 %v1102
        %1493 = vmatprep.subr.mxu0 0.0
        %1494 = vmatpush2.msra.mxu0 0.0
        %1495 = vmatprep.subr.mxu0 0.0
        %1496 = vmatpush2.msra.mxu0 0.0
        %1497 = vmatprep.subr.mxu0 0.0
        %1498 = vmatpush2.msra.mxu0 0.0
        %1499 = vmatprep.subr.mxu0 0.0
        %1500 = vmatpush2.msra.mxu0 0.0
        %1501 = vmatprep.subr.mxu0 0.0
        %1502 = vmatpush2.msra.mxu0 0.0
        %1503 = vmatprep.subr.mxu0 0.0
        %1504 = vmatpush2.msra.mxu0 0.0
        %1505 = vmatprep.subr.mxu0 0.0
        %1506 = vmatpush2.msra.mxu0 0.0
        %1507 = vmatprep.subr.mxu0 0.0
        %1508 = vmatpush2.msra.mxu0 0.0
        %1509 = vmatprep.subr.mxu0 0.0
        %1510 = vmatpush2.msra.mxu0 0.0
        %1511 = vmatprep.subr.mxu0 0.0
        %1512 = vmatpush2.msra.mxu0 0.0
        %1513 = vmatprep.subr.mxu0 0.0
        %1514 = vmatpush2.msra.mxu0 0.0
        %1515 = vmatprep.subr.mxu0 0.0
        %1516 = vmatpush2.msra.mxu0 0.0
        %1517 = vmatprep.subr.mxu0 0.0
        %1518 = vmatpush2.msra.mxu0 0.0
        %1519 = vmatprep.subr.mxu0 0.0
        %1520 = vmatpush2.msra.mxu0 0.0
        %1521 = vmatprep.subr.mxu0 0.0
        %1522 = vmatpush2.msra.mxu0 0.0
        %1523 = vmatprep.subr.mxu0 0.0
        %1524 = vmatpush2.msra.mxu0 0.0
        %1525 = vmatprep.mubr.f32.mxu0 0.0
        %1526 = vmatmul.mubr.f32.gmra.mxu0 %v1459
        %v1527 = vpop.f32.mrf.mxu0
        %v1528 = vadd.f32 0.0, %v1527
        %v1529 = vpop.f32.mrf.mxu0
        %1530 = vdwg.mxu0
        %v1532 = vsel %vm589, %v1449, 0
        %1534 = vmatprep.subr.mxu0 0.0
        %1535 = vmatpush1.msra.mxu0 0.0
        %1536 = vmatprep.subr.mxu0 0.0
        %1537 = vmatpush1.msra.mxu0 0.0
        %1538 = vmatprep.subr.mxu0 0.0
        %1539 = vmatpush1.msra.mxu0 0.0
        %1540 = vmatprep.subr.mxu0 0.0
        %1541 = vmatpush1.msra.mxu0 0.0
        %1542 = vmatprep.subr.mxu0 0.0
        %1543 = vmatpush1.msra.mxu0 0.0
        %1544 = vmatprep.subr.mxu0 0.0
        %1545 = vmatpush1.msra.mxu0 0.0
        %1546 = vmatprep.subr.mxu0 0.0
        %1547 = vmatpush1.msra.mxu0 0.0
        %1548 = vmatprep.subr.mxu0 0.0
        %1549 = vmatpush1.msra.mxu0 0.0
        %1550 = vmatprep.subr.mxu0 0.0
        %1551 = vmatpush1.msra.mxu0 0.0
        %1552 = vmatprep.subr.mxu0 0.0
        %1553 = vmatpush1.msra.mxu0 0.0
        %1554 = vmatprep.subr.mxu0 0.0
        %1555 = vmatpush1.msra.mxu0 0.0
        %1556 = vmatprep.subr.mxu0 0.0
        %1557 = vmatpush1.msra.mxu0 0.0
        %1558 = vmatprep.subr.mxu0 0.0
        %1559 = vmatpush1.msra.mxu0 0.0
        %1560 = vmatprep.subr.mxu0 0.0
        %1561 = vmatpush1.msra.mxu0 0.0
        %1562 = vmatprep.subr.mxu0 0.0
        %1563 = vmatpush1.msra.mxu0 0.0
        %1564 = vmatprep.subr.mxu0 0.0
        %1565 = vmatpush1.msra.mxu0 %v1103
        %1566 = vmatprep.subr.mxu0 0.0
        %1567 = vmatpush2.msra.mxu0 0.0
        %1568 = vmatprep.subr.mxu0 0.0
        %1569 = vmatpush2.msra.mxu0 0.0
        %1570 = vmatprep.subr.mxu0 0.0
        %1571 = vmatpush2.msra.mxu0 0.0
        %1572 = vmatprep.subr.mxu0 0.0
        %1573 = vmatpush2.msra.mxu0 0.0
        %1574 = vmatprep.subr.mxu0 0.0
        %1575 = vmatpush2.msra.mxu0 0.0
        %1576 = vmatprep.subr.mxu0 0.0
        %1577 = vmatpush2.msra.mxu0 0.0
        %1578 = vmatprep.subr.mxu0 0.0
        %1579 = vmatpush2.msra.mxu0 0.0
        %1580 = vmatprep.subr.mxu0 0.0
        %1581 = vmatpush2.msra.mxu0 0.0
        %1582 = vmatprep.subr.mxu0 0.0
        %1583 = vmatpush2.msra.mxu0 0.0
        %1584 = vmatprep.subr.mxu0 0.0
        %1585 = vmatpush2.msra.mxu0 0.0
        %1586 = vmatprep.subr.mxu0 0.0
        %1587 = vmatpush2.msra.mxu0 0.0
        %1588 = vmatprep.subr.mxu0 0.0
        %1589 = vmatpush2.msra.mxu0 0.0
        %1590 = vmatprep.subr.mxu0 0.0
        %1591 = vmatpush2.msra.mxu0 0.0
        %1592 = vmatprep.subr.mxu0 0.0
        %1593 = vmatpush2.msra.mxu0 0.0
        %1594 = vmatprep.subr.mxu0 0.0
        %1595 = vmatpush2.msra.mxu0 0.0
        %1596 = vmatprep.subr.mxu0 0.0
        %1597 = vmatpush2.msra.mxu0 0.0
        %1598 = vmatprep.mubr.f32.mxu0 0.0
        %1599 = vmatmul.mubr.f32.gmra.mxu0 %v1532
        %v1600 = vpop.f32.mrf.mxu0
        %v1601 = vadd.f32 0.0, %v1600
        %v1602 = vpop.f32.mrf.mxu0
        %1603 = vdwg.mxu0
        %v1605 = vsel %vm589, %v1451, 0
        %1607 = vmatprep.subr.mxu0 0.0
        %1608 = vmatpush1.msra.mxu0 0.0
        %1609 = vmatprep.subr.mxu0 0.0
        %1610 = vmatpush1.msra.mxu0 0.0
        %1611 = vmatprep.subr.mxu0 0.0
        %1612 = vmatpush1.msra.mxu0 0.0
        %1613 = vmatprep.subr.mxu0 0.0
        %1614 = vmatpush1.msra.mxu0 0.0
        %1615 = vmatprep.subr.mxu0 0.0
        %1616 = vmatpush1.msra.mxu0 0.0
        %1617 = vmatprep.subr.mxu0 0.0
        %1618 = vmatpush1.msra.mxu0 0.0
        %1619 = vmatprep.subr.mxu0 0.0
        %1620 = vmatpush1.msra.mxu0 0.0
        %1621 = vmatprep.subr.mxu0 0.0
        %1622 = vmatpush1.msra.mxu0 0.0
        %1623 = vmatprep.subr.mxu0 0.0
        %1624 = vmatpush1.msra.mxu0 0.0
        %1625 = vmatprep.subr.mxu0 0.0
        %1626 = vmatpush1.msra.mxu0 0.0
        %1627 = vmatprep.subr.mxu0 0.0
        %1628 = vmatpush1.msra.mxu0 0.0
        %1629 = vmatprep.subr.mxu0 0.0
        %1630 = vmatpush1.msra.mxu0 0.0
        %1631 = vmatprep.subr.mxu0 0.0
        %1632 = vmatpush1.msra.mxu0 0.0
        %1633 = vmatprep.subr.mxu0 0.0
        %1634 = vmatpush1.msra.mxu0 0.0
        %1635 = vmatprep.subr.mxu0 0.0
        %1636 = vmatpush1.msra.mxu0 0.0
        %1637 = vmatprep.subr.mxu0 0.0
        %1638 = vmatpush1.msra.mxu0 %v1104
        %1639 = vmatprep.subr.mxu0 0.0
        %1640 = vmatpush2.msra.mxu0 0.0
        %1641 = vmatprep.subr.mxu0 0.0
        %1642 = vmatpush2.msra.mxu0 0.0
        %1643 = vmatprep.subr.mxu0 0.0
        %1644 = vmatpush2.msra.mxu0 0.0
        %1645 = vmatprep.subr.mxu0 0.0
        %1646 = vmatpush2.msra.mxu0 0.0
        %1647 = vmatprep.subr.mxu0 0.0
        %1648 = vmatpush2.msra.mxu0 0.0
        %1649 = vmatprep.subr.mxu0 0.0
        %1650 = vmatpush2.msra.mxu0 0.0
        %1651 = vmatprep.subr.mxu0 0.0
        %1652 = vmatpush2.msra.mxu0 0.0
        %1653 = vmatprep.subr.mxu0 0.0
        %1654 = vmatpush2.msra.mxu0 0.0
        %1655 = vmatprep.subr.mxu0 0.0
        %1656 = vmatpush2.msra.mxu0 0.0
        %1657 = vmatprep.subr.mxu0 0.0
        %1658 = vmatpush2.msra.mxu0 0.0
        %1659 = vmatprep.subr.mxu0 0.0
        %1660 = vmatpush2.msra.mxu0 0.0
        %1661 = vmatprep.subr.mxu0 0.0
        %1662 = vmatpush2.msra.mxu0 0.0
        %1663 = vmatprep.subr.mxu0 0.0
        %1664 = vmatpush2.msra.mxu0 0.0
        %1665 = vmatprep.subr.mxu0 0.0
        %1666 = vmatpush2.msra.mxu0 0.0
        %1667 = vmatprep.subr.mxu0 0.0
        %1668 = vmatpush2.msra.mxu0 0.0
        %1669 = vmatprep.subr.mxu0 0.0
        %1670 = vmatpush2.msra.mxu0 0.0
        %1671 = vmatprep.mubr.f32.mxu0 0.0
        %1672 = vmatmul.mubr.f32.gmra.mxu0 %v1605
        %v1673 = vpop.f32.mrf.mxu0
        %v1674 = vadd.f32 0.0, %v1673
        %v1675 = vpop.f32.mrf.mxu0
        %1676 = vdwg.mxu0
        %v1678 = vsel %vm589, %v1453, 0
        %1680 = vmatprep.subr.mxu0 0.0
        %1681 = vmatpush1.msra.mxu0 0.0
        %1682 = vmatprep.subr.mxu0 0.0
        %1683 = vmatpush1.msra.mxu0 0.0
        %1684 = vmatprep.subr.mxu0 0.0
        %1685 = vmatpush1.msra.mxu0 0.0
        %1686 = vmatprep.subr.mxu0 0.0
        %1687 = vmatpush1.msra.mxu0 0.0
        %1688 = vmatprep.subr.mxu0 0.0
        %1689 = vmatpush1.msra.mxu0 0.0
        %1690 = vmatprep.subr.mxu0 0.0
        %1691 = vmatpush1.msra.mxu0 0.0
        %1692 = vmatprep.subr.mxu0 0.0
        %1693 = vmatpush1.msra.mxu0 0.0
        %1694 = vmatprep.subr.mxu0 0.0
        %1695 = vmatpush1.msra.mxu0 0.0
        %1696 = vmatprep.subr.mxu0 0.0
        %1697 = vmatpush1.msra.mxu0 0.0
        %1698 = vmatprep.subr.mxu0 0.0
        %1699 = vmatpush1.msra.mxu0 0.0
        %1700 = vmatprep.subr.mxu0 0.0
        %1701 = vmatpush1.msra.mxu0 0.0
        %1702 = vmatprep.subr.mxu0 0.0
        %1703 = vmatpush1.msra.mxu0 0.0
        %1704 = vmatprep.subr.mxu0 0.0
        %1705 = vmatpush1.msra.mxu0 0.0
        %1706 = vmatprep.subr.mxu0 0.0
        %1707 = vmatpush1.msra.mxu0 0.0
        %1708 = vmatprep.subr.mxu0 0.0
        %1709 = vmatpush1.msra.mxu0 0.0
        %1710 = vmatprep.subr.mxu0 0.0
        %1711 = vmatpush1.msra.mxu0 %v1105
        %1712 = vmatprep.subr.mxu0 0.0
        %1713 = vmatpush2.msra.mxu0 0.0
        %1714 = vmatprep.subr.mxu0 0.0
        %1715 = vmatpush2.msra.mxu0 0.0
        %1716 = vmatprep.subr.mxu0 0.0
        %1717 = vmatpush2.msra.mxu0 0.0
        %1718 = vmatprep.subr.mxu0 0.0
        %1719 = vmatpush2.msra.mxu0 0.0
        %1720 = vmatprep.subr.mxu0 0.0
        %1721 = vmatpush2.msra.mxu0 0.0
        %1722 = vmatprep.subr.mxu0 0.0
        %1723 = vmatpush2.msra.mxu0 0.0
        %1724 = vmatprep.subr.mxu0 0.0
        %1725 = vmatpush2.msra.mxu0 0.0
        %1726 = vmatprep.subr.mxu0 0.0
        %1727 = vmatpush2.msra.mxu0 0.0
        %1728 = vmatprep.subr.mxu0 0.0
        %1729 = vmatpush2.msra.mxu0 0.0
        %1730 = vmatprep.subr.mxu0 0.0
        %1731 = vmatpush2.msra.mxu0 0.0
        %1732 = vmatprep.subr.mxu0 0.0
        %1733 = vmatpush2.msra.mxu0 0.0
        %1734 = vmatprep.subr.mxu0 0.0
        %1735 = vmatpush2.msra.mxu0 0.0
        %1736 = vmatprep.subr.mxu0 0.0
        %1737 = vmatpush2.msra.mxu0 0.0
        %1738 = vmatprep.subr.mxu0 0.0
        %1739 = vmatpush2.msra.mxu0 0.0
        %1740 = vmatprep.subr.mxu0 0.0
        %1741 = vmatpush2.msra.mxu0 0.0
        %1742 = vmatprep.subr.mxu0 0.0
        %1743 = vmatpush2.msra.mxu0 0.0
        %1744 = vmatprep.mubr.f32.mxu0 0.0
        %1745 = vmatmul.mubr.f32.gmra.mxu0 %v1678
        %v1746 = vpop.f32.mrf.mxu0
        %v1747 = vadd.f32 0.0, %v1746
        %v1748 = vpop.f32.mrf.mxu0
        %1749 = vdwg.mxu0
        %v1750 = vcombine.low %v1528, %v1674
        %v1751 = vcombine.high %v1528, %v1674
        %v1753 = vunpack.c.l.s4 1983009808
        %v1754 = vunpack.c.0.s8 %v1753
        %v1755 = vlaneseq
        %v1756 = vshrl.u32 %v1755, 7
        %v1757 = vsub.s32 %v1754, %v1756
        %v1758 = vrot.slane %v1750, %v1757
        %v1760 = vunpack.c.l.s4 1983009808
        %v1761 = vunpack.c.0.s8 %v1760
        %v1762 = vlaneseq
        %v1763 = vshrl.u32 %v1762, 7
        %v1764 = vsub.s32 %v1761, %v1763
        %v1765 = vrot.slane %v1751, %v1764
        %v1766 = vcombine.low %v1601, %v1747
        %v1767 = vcombine.high %v1601, %v1747
        %v1769 = vunpack.c.l.s4 1983009808
        %v1770 = vunpack.c.0.s8 %v1769
        %v1771 = vlaneseq
        %v1772 = vshrl.u32 %v1771, 7
        %v1773 = vsub.s32 %v1770, %v1772
        %v1774 = vrot.slane %v1766, %v1773
        %v1776 = vunpack.c.l.s4 1983009808
        %v1777 = vunpack.c.0.s8 %v1776
        %v1778 = vlaneseq
        %v1779 = vshrl.u32 %v1778, 7
        %v1780 = vsub.s32 %v1777, %v1779
        %v1781 = vrot.slane %v1767, %v1780
        %v1782 = vcombine.low %v1758, %v1774
        %v1783 = vcombine.high %v1758, %v1774
        %v1785 = vunpack.c.l.s4 1934713408
        %v1786 = vunpack.c.0.s8 %v1785
        %v1787 = vlaneseq
        %v1788 = vshrl.u32 %v1787, 7
        %v1789 = vsub.s32 %v1786, %v1788
        %v1790 = vrot.slane %v1782, %v1789
        %v1792 = vunpack.c.l.s4 1934713408
        %v1793 = vunpack.c.0.s8 %v1792
        %v1794 = vlaneseq
        %v1795 = vshrl.u32 %v1794, 7
        %v1796 = vsub.s32 %v1793, %v1795
        %v1797 = vrot.slane %v1783, %v1796
        %v1798 = vcombine.low %v1765, %v1781
        %v1799 = vcombine.high %v1765, %v1781
        %v1801 = vunpack.c.l.s4 1934713408
        %v1802 = vunpack.c.0.s8 %v1801
        %v1803 = vlaneseq
        %v1804 = vshrl.u32 %v1803, 7
        %v1805 = vsub.s32 %v1802, %v1804
        %v1806 = vrot.slane %v1798, %v1805
        %v1808 = vunpack.c.l.s4 1934713408
        %v1809 = vunpack.c.0.s8 %v1808
        %v1810 = vlaneseq
        %v1811 = vshrl.u32 %v1810, 7
        %v1812 = vsub.s32 %v1809, %v1811
        %v1813 = vrot.slane %v1799, %v1812
        %v1814 = vcombine.high %v1790, 0.0
        %v1815 = vcombine.high %v1797, 0.0
        %v1816 = vcombine.high %v1806, 0.0
        %v1817 = vcombine.high %v1813, 0.0
        %v1818 = vcombine.low %v1790, %v1797
        %v1820 = vunpack.c.l.s4 1983009808
        %v1821 = vunpack.c.0.s8 %v1820
        %v1822 = vlaneseq
        %v1823 = vshrl.u32 %v1822, 7
        %v1824 = vsub.s32 %v1821, %v1823
        %v1825 = vrot.slane %v1818, %v1824
        %v1826 = vcombine.low %v1814, %v1815
        %v1828 = vunpack.c.l.s4 1983009808
        %v1829 = vunpack.c.0.s8 %v1828
        %v1830 = vlaneseq
        %v1831 = vshrl.u32 %v1830, 7
        %v1832 = vsub.s32 %v1829, %v1831
        %v1833 = vrot.slane %v1826, %v1832
        %v1834 = vcombine.low %v1806, %v1813
        %v1836 = vunpack.c.l.s4 1983009808
        %v1837 = vunpack.c.0.s8 %v1836
        %v1838 = vlaneseq
        %v1839 = vshrl.u32 %v1838, 7
        %v1840 = vsub.s32 %v1837, %v1839
        %v1841 = vrot.slane %v1834, %v1840
        %v1842 = vcombine.low %v1816, %v1817
        %v1844 = vunpack.c.l.s4 1983009808
        %v1845 = vunpack.c.0.s8 %v1844
        %v1846 = vlaneseq
        %v1847 = vshrl.u32 %v1846, 7
        %v1848 = vsub.s32 %v1845, %v1847
        %v1849 = vrot.slane %v1842, %v1848
        %v1850 = vcombine.low %v1825, %v1833
        %v1851 = vcombine.high %v1825, %v1833
        %v1853 = vunpack.c.l.s4 1934713408
        %v1854 = vunpack.c.0.s8 %v1853
        %v1855 = vlaneseq
        %v1856 = vshrl.u32 %v1855, 7
        %v1857 = vsub.s32 %v1854, %v1856
        %v1858 = vrot.slane %v1850, %v1857
        %v1860 = vunpack.c.l.s4 1934713408
        %v1861 = vunpack.c.0.s8 %v1860
        %v1862 = vlaneseq
        %v1863 = vshrl.u32 %v1862, 7
        %v1864 = vsub.s32 %v1861, %v1863
        %v1865 = vrot.slane %v1851, %v1864
        %v1866 = vcombine.low %v1841, %v1849
        %v1867 = vcombine.high %v1841, %v1849
        %v1869 = vunpack.c.l.s4 1934713408
        %v1870 = vunpack.c.0.s8 %v1869
        %v1871 = vlaneseq
        %v1872 = vshrl.u32 %v1871, 7
        %v1873 = vsub.s32 %v1870, %v1872
        %v1874 = vrot.slane %v1866, %v1873
        %v1876 = vunpack.c.l.s4 1934713408
        %v1877 = vunpack.c.0.s8 %v1876
        %v1878 = vlaneseq
        %v1879 = vshrl.u32 %v1878, 7
        %v1880 = vsub.s32 %v1877, %v1879
        %v1881 = vrot.slane %v1867, %v1880
        %v1882 = vcombine.low %v1858, %v1874
        %v1883 = vcombine.high %v1858, %v1874
        %v1884 = vcombine.low %v1865, %v1881
        %v1885 = vcombine.high %v1865, %v1881
        %1887 = vrot.lane.b32.xlu0 %v1883, 8
        %v1888 = vpop.permute.xlu0 %1887
        %1891 = vrot.lane.b32.xlu0 %v1884, 16
        %v1892 = vpop.permute.xlu0 %1891
        %1895 = vrot.lane.b32.xlu0 %v1885, 24
        %v1896 = vpop.permute.xlu0 %1895
        %v1898 = vsel %vm589, %v1882, %v1888
        %vm1899 = vcmask 130048
        %v1900 = vsel %vm1899, %v1898, %v1892
        %vm1901 = vcmask 195584
        %v1902 = vsel %vm1901, %v1900, %v1896
        %v1903 = vmul.f32 %v1902, %v663
        %v1904 = vld [vmem:[#allocation5] sm:$0xff]
        %v1905 = vld [vmem:[#allocation5 + $0x8] sm:$0xff]
        %v1906 = vld [vmem:[#allocation5 + $0x10] sm:$0xff]
        %v1907 = vld [vmem:[#allocation5 + $0x18] sm:$0xff]
        %v1908 = vld [vmem:[#allocation7] sm:$0x1]
        %v1910 = vlaneseq
        %v1911 = vshrl.u32 %v1910, 7
        %v1912 = vsub.s32 0, %v1911
        %v1913 = vrot.slane %v1908, %v1912
        %v1916 = vsel %vm425, %v1903, 0
        %1918 = vmatprep.subr.mxu0 0.0
        %1919 = vmatpush1.msra.mxu0 0.0
        %1920 = vmatprep.subr.mxu0 0.0
        %1921 = vmatpush1.msra.mxu0 0.0
        %1922 = vmatprep.subr.mxu0 0.0
        %1923 = vmatpush1.msra.mxu0 0.0
        %1924 = vmatprep.subr.mxu0 0.0
        %1925 = vmatpush1.msra.mxu0 0.0
        %1926 = vmatprep.subr.mxu0 0.0
        %1927 = vmatpush1.msra.mxu0 0.0
        %1928 = vmatprep.subr.mxu0 0.0
        %1929 = vmatpush1.msra.mxu0 0.0
        %1930 = vmatprep.subr.mxu0 0.0
        %1931 = vmatpush1.msra.mxu0 0.0
        %1932 = vmatprep.subr.mxu0 0.0
        %1933 = vmatpush1.msra.mxu0 0.0
        %1934 = vmatprep.subr.mxu0 0.0
        %1935 = vmatpush1.msra.mxu0 0.0
        %1936 = vmatprep.subr.mxu0 0.0
        %1937 = vmatpush1.msra.mxu0 0.0
        %1938 = vmatprep.subr.mxu0 0.0
        %1939 = vmatpush1.msra.mxu0 0.0
        %1940 = vmatprep.subr.mxu0 0.0
        %1941 = vmatpush1.msra.mxu0 0.0
        %1942 = vmatprep.subr.mxu0 0.0
        %1943 = vmatpush1.msra.mxu0 %v1907
        %1944 = vmatprep.subr.mxu0 0.0
        %1945 = vmatpush1.msra.mxu0 %v1906
        %1946 = vmatprep.subr.mxu0 0.0
        %1947 = vmatpush1.msra.mxu0 %v1905
        %1948 = vmatprep.subr.mxu0 0.0
        %1949 = vmatpush1.msra.mxu0 %v1904
        %1950 = vmatprep.subr.mxu0 0.0
        %1951 = vmatpush2.msra.mxu0 0.0
        %1952 = vmatprep.subr.mxu0 0.0
        %1953 = vmatpush2.msra.mxu0 0.0
        %1954 = vmatprep.subr.mxu0 0.0
        %1955 = vmatpush2.msra.mxu0 0.0
        %1956 = vmatprep.subr.mxu0 0.0
        %1957 = vmatpush2.msra.mxu0 0.0
        %1958 = vmatprep.subr.mxu0 0.0
        %1959 = vmatpush2.msra.mxu0 0.0
        %1960 = vmatprep.subr.mxu0 0.0
        %1961 = vmatpush2.msra.mxu0 0.0
        %1962 = vmatprep.subr.mxu0 0.0
        %1963 = vmatpush2.msra.mxu0 0.0
        %1964 = vmatprep.subr.mxu0 0.0
        %1965 = vmatpush2.msra.mxu0 0.0
        %1966 = vmatprep.subr.mxu0 0.0
        %1967 = vmatpush2.msra.mxu0 0.0
        %1968 = vmatprep.subr.mxu0 0.0
        %1969 = vmatpush2.msra.mxu0 0.0
        %1970 = vmatprep.subr.mxu0 0.0
        %1971 = vmatpush2.msra.mxu0 0.0
        %1972 = vmatprep.subr.mxu0 0.0
        %1973 = vmatpush2.msra.mxu0 0.0
        %1974 = vmatprep.subr.mxu0 0.0
        %1975 = vmatpush2.msra.mxu0 0.0
        %1976 = vmatprep.subr.mxu0 0.0
        %1977 = vmatpush2.msra.mxu0 0.0
        %1978 = vmatprep.subr.mxu0 0.0
        %1979 = vmatpush2.msra.mxu0 0.0
        %1980 = vmatprep.subr.mxu0 0.0
        %1981 = vmatpush2.msra.mxu0 0.0
        %1982 = vmatprep.mubr.f32.mxu0 0.0
        %1983 = vmatmul.mubr.f32.gmra.mxu0 %v1916
        %v1984 = vpop.f32.mrf.mxu0
        %v1985 = vadd.f32 %v1913, %v1984
        %v1986 = vpop.f32.mrf.mxu0
        %1987 = vdwg.mxu0
        %1988 = vst.msk [vmem:[%s405] sm:$0xff] %vm425, %v1985
        %s1989 = sand.u32 %s234, 1
        %s1990 = scalar_lea.sflag [#allocation4], %s1989
        %s1991 = sand.u32 %s234, 1
        %s1992 = smul.addr %s1991, 8
        %s1993 = scalar_lea.vmem [#allocation8], %s1992
        %s1994 = sand.u32 %s260, 1
        %s1995 = scalar_lea.sflag [#allocation10], %s1994
        %s1996 = sand.u32 %s260, 1
        %s1997 = smul.addr %s1996, 32
        %s1998 = scalar_lea.vmem [#allocation9], %s1997
        // Predicated region
        $region69: #{tpu_custom_call.1} parent=55 // pred_check
          %p1999 = pneg %p244
        $region70: #{tpu_custom_call.1} parent=55 // pred_check_branch
          %2001 = sbr.rel (%p1999) target = $region72
        $region71: #{tpu_custom_call.1} parent=55 // pred_region
          %s2003 = ssub.s32 128, 128
          %2004 = vsyncadd %s1990, %s2003
          %s2005 = smul.addr %s32, 128
          %s2006 = scalar_lea.hbm %s9, %s2005
          %s2008 = sshll.u32 %s1993, 4
          %s2009 = int_to_ptr.vmem [resolvable:$true] %s2008
          %2011 = dma.vmem_to_hbm [thread:$0]  %s2009, 128, %s2006, %s1990
        $region72: #{tpu_custom_call.1} parent=55 // pred_fallthru
          _
        // Predicated region
        $region73: #{tpu_custom_call.1} parent=55 // pred_check
          %p2012 = pneg %p270
        $region74: #{tpu_custom_call.1} parent=55 // pred_check_branch
          %2014 = sbr.rel (%p2012) target = $region76
        $region75: #{tpu_custom_call.1} parent=55 // pred_region
          %s2016 = ssub.s32 512, 512
          %2017 = vsyncadd %s1995, %s2016
          %s2018 = smul.addr %s32, 4
          %s2019 = smul.addr %s2018, 128
          %s2020 = scalar_lea.hbm %s10, %s2019
          %s2021 = sshll.u32 %s1998, 4
          %s2022 = int_to_ptr.vmem [resolvable:$true] %s2021
          %2027 = dma.vmem_to_hbm [thread:$0]  %s2022, 512, %s2020, %s1995, 128, 128, 8
        $region76: #{tpu_custom_call.1} parent=55 // pred_fallthru
          _
      $region56: #{tpu_custom_call.1} parent=5 // pred_fallthru
        _
      %p2028 = scmp.le.s32.totalorder 2, %s27
      // Predicated region
      $region77: #{tpu_custom_call.1} parent=5 // pred_check
        %p2029 = pneg %p2028
      $region78: #{tpu_custom_call.1} parent=5 // pred_check_branch
        %2031 = sbr.rel (%p2029) target = $region80
      $region79: #{tpu_custom_call.1} parent=5 // pred_region
        %s2032 = ssub.s32 %s27, 2
        // Predicated region
        $region81: #{tpu_custom_call.1} parent=79 // pred_check
          %p2033 = pneg %p250
        $region82: #{tpu_custom_call.1} parent=79 // pred_check_branch
          %2035 = sbr.rel (%p2033) target = $region84
        $region83: #{tpu_custom_call.1} parent=79 // pred_region
          %s2036 = sand.u32 %s235, 1
          %s2037 = scalar_lea.sflag [#allocation4], %s2036
          %s2038 = sand.u32 %s235, 1
          %s2039 = smul.addr %s2038, 8
          %s2040 = scalar_lea.vmem [#allocation8], %s2039
          %2041 = dma.done %s2037, 128
        $region84: #{tpu_custom_call.1} parent=79 // pred_fallthru
          _
        // Predicated region
        $region85: #{tpu_custom_call.1} parent=79 // pred_check
          %p2042 = pneg %p276
        $region86: #{tpu_custom_call.1} parent=79 // pred_check_branch
          %2044 = sbr.rel (%p2042) target = $region88
        $region87: #{tpu_custom_call.1} parent=79 // pred_region
          %s2045 = sand.u32 %s261, 1
          %s2046 = scalar_lea.sflag [#allocation10], %s2045
          %s2047 = sand.u32 %s261, 1
          %s2048 = smul.addr %s2047, 32
          %s2049 = scalar_lea.vmem [#allocation9], %s2048
          %2050 = dma.done %s2046, 512
        $region88: #{tpu_custom_call.1} parent=79 // pred_fallthru
          _
      $region80: #{tpu_custom_call.1} parent=5 // pred_fallthru
        _
    $region6: #{tpu_custom_call.1} parent=1 // loop_footer
      %s31 = sadd.s32 1, %s27
    $region7: #{tpu_custom_call.1} parent=1 // loop_footer_branch
      %26 = sbr.rel target = $region3
    $region8: #{tpu_custom_call.1} parent=1 // loop_exit
      _
    %2051 = vsyncpa [#allocation3], 1
    %s2052 = scalar_lea.sflag [#allocation3], 1
    %2053 = vsyncpa %s2052, 1
    %2054 = vsyncpa [#allocation6], 1
    %2055 = vsyncpa [#allocation4], 1
    %s2056 = scalar_lea.sflag [#allocation4], 1
    %2057 = vsyncpa %s2056, 1
    %2058 = vsyncpa [#allocation10], 1
    %s2059 = scalar_lea.sflag [#allocation10], 1
    %2060 = vsyncpa %s2059, 1

</llo_original>
